<compile_context>
chip_gen: v6e
topology: v6e:2x2x1
jax: 0.10.0
libtpu: 0.0.40
codegen_flags: <defaults>
</compile_context>

<pallas_src>
import math
from functools import partial

import jax
import jax.numpy as jnp
from jax import lax
from jax.experimental import pallas as pl
from jax.experimental.pallas import tpu as pltpu


def _round_up(x, m):
    return ((x + m - 1) // m) * m


def _self_attn_kernel(n_head, n_mem, n_valid,
                      mk_ref, wqkv_ref, wc_ref, bc_ref, lnw_ref, lnb_ref,
                      o_ref):
    """One batch-block per grid step.

    mk_ref   : (Bblk, Npad, D)  rows = [memory ; x ; zero-pad], Npad % 8 == 0
    wqkv_ref : (D, 3D)          [Wq^T | Wk^T | Wv^T]  (pre-transposed, fused)
    wc_ref   : (D, D)           Wc^T                  (pre-transposed)
    bc_ref   : (1, D)           w_concat bias
    lnw_ref / lnb_ref : (1, D)  LayerNorm affine params
    o_ref    : (Bblk, N, D)
    """
    bblk, npad, dmodel = mk_ref.shape
    heads = n_head
    dhead = dmodel // heads
    nq = n_mem                                   # number of query rows (memories)
    inv_sqrt_d = 1.0 / math.sqrt(dhead)

    # Grid-invariant params: load/build once, hoisted out of the batch loop.
    wc_t = wc_ref[...]                           # (D, D)
    bc = bc_ref[...]                             # (1, D)
    ln_w = lnw_ref[...]
    ln_b = lnb_ref[...]

    # Fused QKV projection for every row of every batch element in the block:
    # a single MXU push of (Bblk*Npad, D) x (D, 3D).  No .T inside the kernel.
    rows = mk_ref[...].reshape(bblk * npad, dmodel)
    qkv = jnp.dot(rows, wqkv_ref[...], preferred_element_type=jnp.float32)
    q_all = qkv[:, :dmodel]                      # (Bblk*Npad, D)
    k_all = qkv[:, dmodel:2 * dmodel]
    v_all = qkv[:, 2 * dmodel:]

    # Additive bias masking the zero-padded key rows (columns >= n_valid).
    if npad > n_valid:
        col = lax.broadcasted_iota(jnp.int32, (1, 1, npad), 2)
        key_bias = jnp.where(col < n_valid, 0.0, -1e30).astype(jnp.float32)
    else:
        key_bias = None

    for b in range(bblk):                        # static unroll; bblk is small
        r0 = b * npad                            # 8-aligned sublane offset
        # Head-major layout once per tensor (no per-head slicing / concat).
        qh = q_all[r0:r0 + nq].reshape(nq, heads, dhead).transpose(1, 0, 2)       # (H, N,  d)
        kh = k_all[r0:r0 + npad].reshape(npad, heads, dhead).transpose(1, 0, 2)   # (H, Np, d)
        vh = v_all[r0:r0 + npad].reshape(npad, heads, dhead).transpose(1, 0, 2)   # (H, Np, d)

        # Scaled dot-product attention, all heads at once; contraction on the
        # last axes of both operands -> no explicit K transpose.
        s = jnp.einsum('hnd,hmd->hnm', qh, kh,
                       preferred_element_type=jnp.float32) * inv_sqrt_d           # (H, N, Np)
        if key_bias is not None:
            s = s + key_bias
        s = s - jnp.max(s, axis=-1, keepdims=True)
        p = jnp.exp(s)
        p = p * pl.reciprocal(jnp.sum(p, axis=-1, keepdims=True), approx=False)
        ov = jnp.einsum('hnm,hmd->hnd', p, vh,
                        preferred_element_type=jnp.float32)                       # (H, N, d)
        attn = ov.transpose(1, 0, 2).reshape(nq, dmodel)                          # (N, D)

        # Output projection (bias) + LayerNorm (eps=1e-5, biased var, affine).
        out = jnp.dot(attn, wc_t, preferred_element_type=jnp.float32) + bc
        mean = jnp.mean(out, axis=-1, keepdims=True)
        var = jnp.mean(jnp.square(out - mean), axis=-1, keepdims=True)
        y = (out - mean) * lax.rsqrt(var + 1e-5)
        y = y * ln_w + ln_b

        o_ref[b] = y.astype(o_ref.dtype)


def _pick_batch_block(batch):
    """Batch elements fused into one grid step."""
    if batch <= 2:
        return batch                 # per-step overhead dominates: single step
    # Keep >= 2 grid steps so v7x's second TensorCore gets work, while still
    # fusing several batch elements per step to amortize per-step overhead.
    for blk in range(batch // 2, 0, -1):
        if batch % blk == 0:
            return blk
    return 1


def self_attention_layer_simplified(memory, inp, params, n_head, batch_block=None):
    """memory: (B, N, D) float32, inp: (B, D) float32 -> (B, N, D) float32."""
    B, N, D = memory.shape
    assert D % n_head == 0, "size_memory must be divisible by n_head"

    if batch_block is None:
        batch_block = _pick_batch_block(B)
    assert B % batch_block == 0
    grid = (B // batch_block,)

    n_valid = N + 1                              # memories + appended input token
    n_pad = _round_up(n_valid, 8)                # sublane-friendly K/V row count

    # One-time layout prep kept OUT of the kernel:
    #   [M ; x ; zero-pad] along the row axis, pre-transposed / fused weights.
    mk = jnp.concatenate([memory, inp[:, None, :]], axis=1)          # (B, N+1, D)
    mk = jnp.pad(mk, ((0, 0), (0, n_pad - n_valid), (0, 0)))         # (B, Npad, D)

    wqkv_t = jnp.concatenate(
        [params["wq"].T, params["wk"].T, params["wv"].T], axis=1)    # (D, 3D)
    wc_t = params["wc"].T                                            # (D, D)
    bc, ln_w, ln_b = params["bc"], params["ln_w"], params["ln_b"]    # (1, D)

    kernel = partial(_self_attn_kernel, n_head, N, n_valid)

    # NOTE: at D=32 VMEM use is trivial.  If D is ever scaled up, single-buffer
    # the grid-invariant weight specs (pipeline_mode=pl.Buffered) and set
    # vmem_limit_bytes explicitly (v7x has only 64 MiB physical VMEM).
    return pl.pallas_call(
        kernel,
        out_shape=jax.ShapeDtypeStruct((B, N, D), jnp.float32),
        grid_spec=pltpu.PrefetchScalarGridSpec(
            num_scalar_prefetch=0,
            grid=grid,
            in_specs=[
                pl.BlockSpec((batch_block, n_pad, D), lambda i: (i, 0, 0)),  # [M;x] rows
                pl.BlockSpec((D, 3 * D), lambda i: (0, 0)),                  # fused Wqkv^T
                pl.BlockSpec((D, D), lambda i: (0, 0)),                      # Wc^T
                pl.BlockSpec((1, D), lambda i: (0, 0)),                      # bc
                pl.BlockSpec((1, D), lambda i: (0, 0)),                      # ln weight
                pl.BlockSpec((1, D), lambda i: (0, 0)),                      # ln bias
            ],
            out_specs=pl.BlockSpec((batch_block, N, D), lambda i: (i, 0, 0)),
        ),
        compiler_params=pltpu.CompilerParams(
            dimension_semantics=("parallel",)),
    )(mk, wqkv_t, wc_t, bc, ln_w, ln_b)


def _reference(memory, inp, params, n_head):
    """Pure-JAX reference matching the PyTorch module."""
    B, N, D = memory.shape
    d = D // n_head
    mk = jnp.concatenate([memory, inp[:, None, :]], axis=-2)      # (B, N+1, D)
    q = memory @ params["wq"].T                                    # (B, N, D)
    k = mk @ params["wk"].T                                        # (B, N+1, D)
    v = mk @ params["wv"].T

    def split(t):
        b, n, _ = t.shape
        return t.reshape(b, n, n_head, d).transpose(0, 2, 1, 3)    # (B, H, n, d)

    qh, kh, vh = split(q), split(k), split(v)
    score = jnp.einsum("bhqd,bhkd->bhqk", qh, kh) / math.sqrt(d)
    p = jax.nn.softmax(score, axis=-1)
    out = jnp.einsum("bhqk,bhkd->bhqd", p, vh)                     # (B, H, N, d)
    out = out.transpose(0, 2, 1, 3).reshape(B, N, D)
    out = out @ params["wc"].T + params["bc"][0]
    mean = jnp.mean(out, axis=-1, keepdims=True)
    var = jnp.mean((out - mean) ** 2, axis=-1, keepdims=True)
    y = (out - mean) / jnp.sqrt(var + 1e-5)
    return y * params["ln_w"][0] + params["ln_b"][0]


if __name__ == "__main__":
    B, N, D, H = 2, 8, 32, 4      # batch, num_memories, size_memory, n_head

    key = jax.random.PRNGKey(0)
    keys = jax.random.split(key, 8)

    memory = jax.random.normal(keys[0], (B, N, D), dtype=jnp.float32)
    x = jax.random.normal(keys[1], (B, D), dtype=jnp.float32)

    # Deterministic parameter init (mimicking Linear's U(-1/sqrt(D), 1/sqrt(D)) scale).
    scale = 1.0 / math.sqrt(D)
    params = {
        "wq": jax.random.uniform(keys[2], (D, D), jnp.float32, -scale, scale),
        "wk": jax.random.uniform(keys[3], (D, D), jnp.float32, -scale, scale),
        "wv": jax.random.uniform(keys[4], (D, D), jnp.float32, -scale, scale),
        "wc": jax.random.uniform(keys[5], (D, D), jnp.float32, -scale, scale),
        "bc": jax.random.uniform(keys[6], (1, D), jnp.float32, -scale, scale),
        "ln_w": jnp.ones((1, D), jnp.float32),
        "ln_b": jnp.zeros((1, D), jnp.float32),
    }

    out = self_attention_layer_simplified(memory, x, params, H)
    out = jax.block_until_ready(out)

    ref = _reference(memory, x, params, H)
    assert out.shape == (B, N, D)
    assert jnp.allclose(out, ref, rtol=1e-4, atol=1e-4), "mismatch vs reference"

    print("KERNEL_OK")
</pallas_src>

<mosaic_0001>
module attributes {stable_mosaic.version = 11 : i64} {
  func.func @_self_attn_kernel(%arg0: i32, %arg1: memref<2x16x32xf32, #tpu.memory_space<vmem>>, %arg2: memref<32x96xf32, #tpu.memory_space<vmem>>, %arg3: memref<32x32xf32, #tpu.memory_space<vmem>>, %arg4: memref<1x32xf32, #tpu.memory_space<vmem>>, %arg5: memref<1x32xf32, #tpu.memory_space<vmem>>, %arg6: memref<1x32xf32, #tpu.memory_space<vmem>>, %arg7: memref<2x8x32xf32, #tpu.memory_space<vmem>>) attributes {dimension_semantics = [#tpu.dimension_semantics<parallel>], iteration_bounds = array<i64: 1>, scalar_prefetch = 0 : i64, scratch_operands = 0 : i64, tpu.core_type = #tpu.core_type<tc>, window_params = [{transform_indices = @transform_0, window_bounds = array<i64: 2, 16, 32>}, {pipeline_mode = #tpu.pipeline_mode<synchronous>, transform_indices = @transform_1, window_bounds = array<i64: 32, 96>}, {pipeline_mode = #tpu.pipeline_mode<synchronous>, transform_indices = @transform_2, window_bounds = array<i64: 32, 32>}, {pipeline_mode = #tpu.pipeline_mode<synchronous>, transform_indices = @transform_3, window_bounds = array<i64: 1, 32>}, {pipeline_mode = #tpu.pipeline_mode<synchronous>, transform_indices = @transform_4, window_bounds = array<i64: 1, 32>}, {pipeline_mode = #tpu.pipeline_mode<synchronous>, transform_indices = @transform_5, window_bounds = array<i64: 1, 32>}, {transform_indices = @transform_6, window_bounds = array<i64: 2, 8, 32>}]} {
    %c0 = arith.constant 0 : index
    %c0_0 = arith.constant 0 : index
    %0 = vector.load %arg3[%c0, %c0_0] : memref<32x32xf32, #tpu.memory_space<vmem>>, vector<32x32xf32>
    %c0_1 = arith.constant 0 : index
    %c0_2 = arith.constant 0 : index
    %1 = vector.load %arg4[%c0_1, %c0_2] : memref<1x32xf32, #tpu.memory_space<vmem>>, vector<1x32xf32>
    %c0_3 = arith.constant 0 : index
    %c0_4 = arith.constant 0 : index
    %2 = vector.load %arg5[%c0_3, %c0_4] : memref<1x32xf32, #tpu.memory_space<vmem>>, vector<1x32xf32>
    %c0_5 = arith.constant 0 : index
    %c0_6 = arith.constant 0 : index
    %3 = vector.load %arg6[%c0_5, %c0_6] : memref<1x32xf32, #tpu.memory_space<vmem>>, vector<1x32xf32>
    %c0_7 = arith.constant 0 : index
    %c0_8 = arith.constant 0 : index
    %c0_9 = arith.constant 0 : index
    %4 = vector.load %arg1[%c0_7, %c0_8, %c0_9] : memref<2x16x32xf32, #tpu.memory_space<vmem>>, vector<2x16x32xf32>
    %5 = vector.shape_cast %4 : vector<2x16x32xf32> to vector<32x32xf32>
    %c0_10 = arith.constant 0 : index
    %c0_11 = arith.constant 0 : index
    %6 = vector.load %arg2[%c0_10, %c0_11] : memref<32x96xf32, #tpu.memory_space<vmem>>, vector<32x96xf32>
    %cst = arith.constant dense<0.000000e+00> : vector<32x96xf32>
    %7 = tpu.matmul %5, %6, %cst {dimension_numbers = #tpu.dot_dimension_numbers<[1], [0], [0], [1], [0, 0, 1, 1], [], []>} : vector<32x32xf32>, vector<32x96xf32>, vector<32x96xf32> -> vector<32x96xf32>
    %8 = vector.extract_strided_slice %7 {offsets = [0, 0], sizes = [32, 32], strides = [1, 1]} : vector<32x96xf32> to vector<32x32xf32>
    %9 = vector.extract_strided_slice %7 {offsets = [0, 32], sizes = [32, 32], strides = [1, 1]} : vector<32x96xf32> to vector<32x32xf32>
    %10 = vector.extract_strided_slice %7 {offsets = [0, 64], sizes = [32, 32], strides = [1, 1]} : vector<32x96xf32> to vector<32x32xf32>
    %11 = tpu.iota {dimensions = array<i32: 2>} : vector<1x1x16xi32>
    %c9_i32 = arith.constant 9 : i32
    %12 = vector.broadcast %c9_i32 : i32 to vector<1x1x16xi32>
    %13 = arith.cmpi slt, %11, %12 : vector<1x1x16xi32>
    %cst_12 = arith.constant 0.000000e+00 : f32
    %cst_13 = arith.constant -1.000000e+30 : f32
    %14 = vector.broadcast %cst_12 : f32 to vector<1x1x16xf32>
    %15 = vector.broadcast %cst_13 : f32 to vector<1x1x16xf32>
    %16 = arith.select %13, %14, %15 : vector<1x1x16xi1>, vector<1x1x16xf32>
    %17 = vector.extract_strided_slice %8 {offsets = [0, 0], sizes = [8, 32], strides = [1, 1]} : vector<32x32xf32> to vector<8x32xf32>
    %18 = vector.shape_cast %17 : vector<8x32xf32> to vector<8x4x8xf32>
    %19 = tpu.transpose %18, [1, 0, 2] : vector<8x4x8xf32> -> vector<4x8x8xf32>
    %20 = vector.extract_strided_slice %9 {offsets = [0, 0], sizes = [16, 32], strides = [1, 1]} : vector<32x32xf32> to vector<16x32xf32>
    %21 = vector.shape_cast %20 : vector<16x32xf32> to vector<16x4x8xf32>
    %22 = tpu.transpose %21, [1, 0, 2] : vector<16x4x8xf32> -> vector<4x16x8xf32>
    %23 = vector.extract_strided_slice %10 {offsets = [0, 0], sizes = [16, 32], strides = [1, 1]} : vector<32x32xf32> to vector<16x32xf32>
    %24 = vector.shape_cast %23 : vector<16x32xf32> to vector<16x4x8xf32>
    %25 = tpu.transpose %24, [1, 0, 2] : vector<16x4x8xf32> -> vector<4x16x8xf32>
    "tpu.trace_start"() <{level = 10 : i32, message = "hnd,hmd->hnm"}> : () -> ()
    %cst_14 = arith.constant dense<0.000000e+00> : vector<4x8x16xf32>
    %26 = tpu.matmul %19, %22, %cst_14 {dimension_numbers = #tpu.dot_dimension_numbers<[2], [2], [1], [1], [0, 0, 0, 1, 1, 1], [0], [0]>} : vector<4x8x8xf32>, vector<4x16x8xf32>, vector<4x8x16xf32> -> vector<4x8x16xf32>
    "tpu.trace_stop"() : () -> ()
    %cst_15 = arith.constant 0.353553385 : f32
    %27 = vector.broadcast %cst_15 : f32 to vector<4x8x16xf32>
    %28 = arith.mulf %26, %27 : vector<4x8x16xf32>
    %29 = vector.broadcast %16 : vector<1x1x16xf32> to vector<4x8x16xf32>
    %30 = arith.addf %28, %29 : vector<4x8x16xf32>
    %cst_16 = arith.constant dense<0xFF800000> : vector<4x8xf32>
    %31 = vector.multi_reduction <maximumf>, %30, %cst_16 [2] : vector<4x8x16xf32> to vector<4x8xf32>
    %32 = vector.shape_cast %31 : vector<4x8xf32> to vector<4x8x1xf32>
    %33 = vector.broadcast %32 : vector<4x8x1xf32> to vector<4x8x16xf32>
    %34 = arith.subf %30, %33 : vector<4x8x16xf32>
    %35 = math.exp %34 : vector<4x8x16xf32>
    %cst_17 = arith.constant dense<0.000000e+00> : vector<4x8xf32>
    %36 = vector.multi_reduction <add>, %35, %cst_17 [2] : vector<4x8x16xf32> to vector<4x8xf32>
    %37 = vector.shape_cast %36 : vector<4x8xf32> to vector<4x8x1xf32>
    %38 = tpu.reciprocal %37 : vector<4x8x1xf32> -> vector<4x8x1xf32>
    %39 = vector.broadcast %38 : vector<4x8x1xf32> to vector<4x8x16xf32>
    %40 = arith.mulf %35, %39 : vector<4x8x16xf32>
    "tpu.trace_start"() <{level = 10 : i32, message = "hnm,hmd->hnd"}> : () -> ()
    %cst_18 = arith.constant dense<0.000000e+00> : vector<4x8x8xf32>
    %41 = tpu.matmul %40, %25, %cst_18 {dimension_numbers = #tpu.dot_dimension_numbers<[2], [1], [1], [2], [0, 0, 0, 1, 1, 2], [0], [0]>} : vector<4x8x16xf32>, vector<4x16x8xf32>, vector<4x8x8xf32> -> vector<4x8x8xf32>
    "tpu.trace_stop"() : () -> ()
    %42 = tpu.transpose %41, [1, 0, 2] : vector<4x8x8xf32> -> vector<8x4x8xf32>
    %43 = vector.shape_cast %42 : vector<8x4x8xf32> to vector<8x32xf32>
    %cst_19 = arith.constant dense<0.000000e+00> : vector<8x32xf32>
    %44 = tpu.matmul %43, %0, %cst_19 {dimension_numbers = #tpu.dot_dimension_numbers<[1], [0], [0], [1], [0, 0, 1, 1], [], []>} : vector<8x32xf32>, vector<32x32xf32>, vector<8x32xf32> -> vector<8x32xf32>
    %45 = vector.broadcast %1 : vector<1x32xf32> to vector<8x32xf32>
    %46 = arith.addf %44, %45 : vector<8x32xf32>
    %cst_20 = arith.constant dense<0.000000e+00> : vector<8xf32>
    %47 = vector.multi_reduction <add>, %46, %cst_20 [1] : vector<8x32xf32> to vector<8xf32>
    %48 = vector.shape_cast %47 : vector<8xf32> to vector<8x1xf32>
    %cst_21 = arith.constant 3.200000e+01 : f32
    %49 = vector.broadcast %cst_21 : f32 to vector<8x1xf32>
    %50 = arith.divf %48, %49 : vector<8x1xf32>
    %51 = vector.broadcast %50 : vector<8x1xf32> to vector<8x32xf32>
    %52 = arith.subf %46, %51 : vector<8x32xf32>
    %53 = arith.mulf %52, %52 : vector<8x32xf32>
    %cst_22 = arith.constant dense<0.000000e+00> : vector<8xf32>
    %54 = vector.multi_reduction <add>, %53, %cst_22 [1] : vector<8x32xf32> to vector<8xf32>
    %55 = vector.shape_cast %54 : vector<8xf32> to vector<8x1xf32>
    %cst_23 = arith.constant 3.200000e+01 : f32
    %56 = vector.broadcast %cst_23 : f32 to vector<8x1xf32>
    %57 = arith.divf %55, %56 : vector<8x1xf32>
    %58 = vector.broadcast %50 : vector<8x1xf32> to vector<8x32xf32>
    %59 = arith.subf %46, %58 : vector<8x32xf32>
    %cst_24 = arith.constant 9.99999974E-6 : f32
    %60 = vector.broadcast %cst_24 : f32 to vector<8x1xf32>
    %61 = arith.addf %57, %60 : vector<8x1xf32>
    %62 = math.rsqrt %61 : vector<8x1xf32>
    %63 = vector.broadcast %62 : vector<8x1xf32> to vector<8x32xf32>
    %64 = arith.mulf %59, %63 : vector<8x32xf32>
    %65 = vector.broadcast %2 : vector<1x32xf32> to vector<8x32xf32>
    %66 = arith.mulf %64, %65 : vector<8x32xf32>
    %67 = vector.broadcast %3 : vector<1x32xf32> to vector<8x32xf32>
    %68 = arith.addf %66, %67 : vector<8x32xf32>
    %c0_25 = arith.constant 0 : index
    %c0_26 = arith.constant 0 : index
    %c0_27 = arith.constant 0 : index
    %69 = vector.load %arg7[%c0_25, %c0_26, %c0_27] : memref<2x8x32xf32, #tpu.memory_space<vmem>>, vector<1x8x32xf32>
    %70 = vector.shape_cast %69 : vector<1x8x32xf32> to vector<8x32xf32>
    %71 = vector.shape_cast %68 : vector<8x32xf32> to vector<1x8x32xf32>
    tpu.vector_store %arg7[%c0_25, %c0_26, %c0_27], %71 {strides = array<i32>} : memref<2x8x32xf32, #tpu.memory_space<vmem>>, vector<1x8x32xf32>,
    %72 = vector.extract_strided_slice %8 {offsets = [16, 0], sizes = [8, 32], strides = [1, 1]} : vector<32x32xf32> to vector<8x32xf32>
    %73 = vector.shape_cast %72 : vector<8x32xf32> to vector<8x4x8xf32>
    %74 = tpu.transpose %73, [1, 0, 2] : vector<8x4x8xf32> -> vector<4x8x8xf32>
    %75 = vector.extract_strided_slice %9 {offsets = [16, 0], sizes = [16, 32], strides = [1, 1]} : vector<32x32xf32> to vector<16x32xf32>
    %76 = vector.shape_cast %75 : vector<16x32xf32> to vector<16x4x8xf32>
    %77 = tpu.transpose %76, [1, 0, 2] : vector<16x4x8xf32> -> vector<4x16x8xf32>
    %78 = vector.extract_strided_slice %10 {offsets = [16, 0], sizes = [16, 32], strides = [1, 1]} : vector<32x32xf32> to vector<16x32xf32>
    %79 = vector.shape_cast %78 : vector<16x32xf32> to vector<16x4x8xf32>
    %80 = tpu.transpose %79, [1, 0, 2] : vector<16x4x8xf32> -> vector<4x16x8xf32>
    "tpu.trace_start"() <{level = 10 : i32, message = "hnd,hmd->hnm"}> : () -> ()
    %cst_28 = arith.constant dense<0.000000e+00> : vector<4x8x16xf32>
    %81 = tpu.matmul %74, %77, %cst_28 {dimension_numbers = #tpu.dot_dimension_numbers<[2], [2], [1], [1], [0, 0, 0, 1, 1, 1], [0], [0]>} : vector<4x8x8xf32>, vector<4x16x8xf32>, vector<4x8x16xf32> -> vector<4x8x16xf32>
    "tpu.trace_stop"() : () -> ()
    %cst_29 = arith.constant 0.353553385 : f32
    %82 = vector.broadcast %cst_29 : f32 to vector<4x8x16xf32>
    %83 = arith.mulf %81, %82 : vector<4x8x16xf32>
    %84 = vector.broadcast %16 : vector<1x1x16xf32> to vector<4x8x16xf32>
    %85 = arith.addf %83, %84 : vector<4x8x16xf32>
    %cst_30 = arith.constant dense<0xFF800000> : vector<4x8xf32>
    %86 = vector.multi_reduction <maximumf>, %85, %cst_30 [2] : vector<4x8x16xf32> to vector<4x8xf32>
    %87 = vector.shape_cast %86 : vector<4x8xf32> to vector<4x8x1xf32>
    %88 = vector.broadcast %87 : vector<4x8x1xf32> to vector<4x8x16xf32>
    %89 = arith.subf %85, %88 : vector<4x8x16xf32>
    %90 = math.exp %89 : vector<4x8x16xf32>
    %cst_31 = arith.constant dense<0.000000e+00> : vector<4x8xf32>
    %91 = vector.multi_reduction <add>, %90, %cst_31 [2] : vector<4x8x16xf32> to vector<4x8xf32>
    %92 = vector.shape_cast %91 : vector<4x8xf32> to vector<4x8x1xf32>
    %93 = tpu.reciprocal %92 : vector<4x8x1xf32> -> vector<4x8x1xf32>
    %94 = vector.broadcast %93 : vector<4x8x1xf32> to vector<4x8x16xf32>
    %95 = arith.mulf %90, %94 : vector<4x8x16xf32>
    "tpu.trace_start"() <{level = 10 : i32, message = "hnm,hmd->hnd"}> : () -> ()
    %cst_32 = arith.constant dense<0.000000e+00> : vector<4x8x8xf32>
    %96 = tpu.matmul %95, %80, %cst_32 {dimension_numbers = #tpu.dot_dimension_numbers<[2], [1], [1], [2], [0, 0, 0, 1, 1, 2], [0], [0]>} : vector<4x8x16xf32>, vector<4x16x8xf32>, vector<4x8x8xf32> -> vector<4x8x8xf32>
    "tpu.trace_stop"() : () -> ()
    %97 = tpu.transpose %96, [1, 0, 2] : vector<4x8x8xf32> -> vector<8x4x8xf32>
    %98 = vector.shape_cast %97 : vector<8x4x8xf32> to vector<8x32xf32>
    %cst_33 = arith.constant dense<0.000000e+00> : vector<8x32xf32>
    %99 = tpu.matmul %98, %0, %cst_33 {dimension_numbers = #tpu.dot_dimension_numbers<[1], [0], [0], [1], [0, 0, 1, 1], [], []>} : vector<8x32xf32>, vector<32x32xf32>, vector<8x32xf32> -> vector<8x32xf32>
    %100 = vector.broadcast %1 : vector<1x32xf32> to vector<8x32xf32>
    %101 = arith.addf %99, %100 : vector<8x32xf32>
    %cst_34 = arith.constant dense<0.000000e+00> : vector<8xf32>
    %102 = vector.multi_reduction <add>, %101, %cst_34 [1] : vector<8x32xf32> to vector<8xf32>
    %103 = vector.shape_cast %102 : vector<8xf32> to vector<8x1xf32>
    %cst_35 = arith.constant 3.200000e+01 : f32
    %104 = vector.broadcast %cst_35 : f32 to vector<8x1xf32>
    %105 = arith.divf %103, %104 : vector<8x1xf32>
    %106 = vector.broadcast %105 : vector<8x1xf32> to vector<8x32xf32>
    %107 = arith.subf %101, %106 : vector<8x32xf32>
    %108 = arith.mulf %107, %107 : vector<8x32xf32>
    %cst_36 = arith.constant dense<0.000000e+00> : vector<8xf32>
    %109 = vector.multi_reduction <add>, %108, %cst_36 [1] : vector<8x32xf32> to vector<8xf32>
    %110 = vector.shape_cast %109 : vector<8xf32> to vector<8x1xf32>
    %cst_37 = arith.constant 3.200000e+01 : f32
    %111 = vector.broadcast %cst_37 : f32 to vector<8x1xf32>
    %112 = arith.divf %110, %111 : vector<8x1xf32>
    %113 = vector.broadcast %105 : vector<8x1xf32> to vector<8x32xf32>
    %114 = arith.subf %101, %113 : vector<8x32xf32>
    %cst_38 = arith.constant 9.99999974E-6 : f32
    %115 = vector.broadcast %cst_38 : f32 to vector<8x1xf32>
    %116 = arith.addf %112, %115 : vector<8x1xf32>
    %117 = math.rsqrt %116 : vector<8x1xf32>
    %118 = vector.broadcast %117 : vector<8x1xf32> to vector<8x32xf32>
    %119 = arith.mulf %114, %118 : vector<8x32xf32>
    %120 = vector.broadcast %2 : vector<1x32xf32> to vector<8x32xf32>
    %121 = arith.mulf %119, %120 : vector<8x32xf32>
    %122 = vector.broadcast %3 : vector<1x32xf32> to vector<8x32xf32>
    %123 = arith.addf %121, %122 : vector<8x32xf32>
    %c1 = arith.constant 1 : index
    %c0_39 = arith.constant 0 : index
    %c0_40 = arith.constant 0 : index
    %124 = vector.load %arg7[%c1, %c0_39, %c0_40] : memref<2x8x32xf32, #tpu.memory_space<vmem>>, vector<1x8x32xf32>
    %125 = vector.shape_cast %124 : vector<1x8x32xf32> to vector<8x32xf32>
    %126 = vector.shape_cast %123 : vector<8x32xf32> to vector<1x8x32xf32>
    tpu.vector_store %arg7[%c1, %c0_39, %c0_40], %126 {strides = array<i32>} : memref<2x8x32xf32, #tpu.memory_space<vmem>>, vector<1x8x32xf32>,
    return
  }
  func.func @transform_0(%arg0: i32) -> (i32, i32, i32) {
    %c0_i32 = arith.constant 0 : i32
    %c0_i32_0 = arith.constant 0 : i32
    %c0_i32_1 = arith.constant 0 : i32
    return %arg0, %c0_i32, %c0_i32_0 : i32, i32, i32
  }
  func.func @transform_1(%arg0: i32) -> (i32, i32) {
    %c0_i32 = arith.constant 0 : i32
    %c0_i32_0 = arith.constant 0 : i32
    %c0_i32_1 = arith.constant 0 : i32
    return %c0_i32, %c0_i32_0 : i32, i32
  }
  func.func @transform_2(%arg0: i32) -> (i32, i32) {
    %c0_i32 = arith.constant 0 : i32
    %c0_i32_0 = arith.constant 0 : i32
    %c0_i32_1 = arith.constant 0 : i32
    return %c0_i32, %c0_i32_0 : i32, i32
  }
  func.func @transform_3(%arg0: i32) -> (i32, i32) {
    %c0_i32 = arith.constant 0 : i32
    %c0_i32_0 = arith.constant 0 : i32
    %c0_i32_1 = arith.constant 0 : i32
    return %c0_i32, %c0_i32_0 : i32, i32
  }
  func.func @transform_4(%arg0: i32) -> (i32, i32) {
    %c0_i32 = arith.constant 0 : i32
    %c0_i32_0 = arith.constant 0 : i32
    %c0_i32_1 = arith.constant 0 : i32
    return %c0_i32, %c0_i32_0 : i32, i32
  }
  func.func @transform_5(%arg0: i32) -> (i32, i32) {
    %c0_i32 = arith.constant 0 : i32
    %c0_i32_0 = arith.constant 0 : i32
    %c0_i32_1 = arith.constant 0 : i32
    return %c0_i32, %c0_i32_0 : i32, i32
  }
  func.func @transform_6(%arg0: i32) -> (i32, i32, i32) {
    %c0_i32 = arith.constant 0 : i32
    %c0_i32_0 = arith.constant 0 : i32
    %c0_i32_1 = arith.constant 0 : i32
    return %arg0, %c0_i32, %c0_i32_0 : i32, i32, i32
  }
}

</mosaic_0001>

<llo_original>
// kernel: tpu_custom_call.1
$region0: #{tpu_custom_call.1}
  #allocation0 [shape = 'u32[]', space=smem, size = 0x4, offset = 0x4, fixed_abs, tag = 'smem constant byte address 0x4 - core index']
  #allocation1 [shape = 'u32[144,128]{1,0:T(1,128)}', space=vmem, size = 0x12000, scoped, tag = 'internal scratch']
  %s0 = inlined_call_operand.hbm [shape: f32[2,16,32], index: 0, kind: input, shape index: {}]
  %s1 = inlined_call_operand.hbm [shape: f32[32,96], index: 1, kind: input, shape index: {}]
  %s2 = inlined_call_operand.hbm [shape: f32[32,32], index: 2, kind: input, shape index: {}]
  %s3 = inlined_call_operand.vmem [shape: f32[1,32], index: 3, kind: input, shape index: {}]
  %s4 = inlined_call_operand.vmem [shape: f32[1,32], index: 4, kind: input, shape index: {}]
  %s5 = inlined_call_operand.vmem [shape: f32[1,32], index: 5, kind: input, shape index: {}]
  %s6 = inlined_call_operand.hbm [shape: f32[2,8,32], index: 6, kind: output, shape index: {}]
  %s7 = sld [smem:[#allocation0]]
  $region46: #{tpu_custom_call.1} parent=0
    _
  %s9 = ssub.s32 1, %s7
  %s10 = scalar_select 0, %s9, %s7
  $region1: #{tpu_custom_call.1} parent=0
    #allocation2 [shape = 'u8[16384]{0}', space=vmem, size = 0x4000, scoped, tag = 'input window, operand 0, single buffered']
    #allocation3 [shape = 's32[1]{0}', space=sflag, size = 0x4, scoped, tag = 'scoped memory for tpu_custom_call.1']
    #allocation4 [shape = 's32[1]{0}', space=sflag, size = 0x4, scoped, tag = 'scoped memory for tpu_custom_call.1']
    #allocation5 [shape = 'u8[16384]{0}', space=vmem, size = 0x4000, scoped, tag = 'input window, operand 1, single buffered']
    #allocation6 [shape = 's32[1]{0}', space=sflag, size = 0x4, scoped, tag = 'scoped memory for tpu_custom_call.1']
    #allocation7 [shape = 'u8[16384]{0}', space=vmem, size = 0x4000, scoped, tag = 'input window, operand 2, single buffered']
    #allocation8 [shape = 'u8[8192]{0}', space=vmem, size = 0x2000, scoped, tag = 'output window, operand 0, single buffered']
    %11 = vsyncpa [#allocation3], 0
    %12 = vsyncpa [#allocation6], 0
    %13 = vsyncpa [#allocation4], 0
    // Predicated region
    $region2: #{tpu_custom_call.1} parent=1 // pred_check
      _
    $region3: #{tpu_custom_call.1} parent=1 // pred_check_branch
      %15 = sbr.rel (0) target = $region5
    $region4: #{tpu_custom_call.1} parent=1 // pred_region
      %s17 = ssub.s32 512, 512
      %18 = vsyncadd [#allocation3], %s17
      %s19 = sshll.u32 [#allocation2], 4
      %s20 = int_to_ptr.vmem [resolvable:$true] %s19
      %25 = dma.hbm_to_vmem [thread:$0]  %s0, 512, %s20, [#allocation3], 128, 128, 8
    $region5: #{tpu_custom_call.1} parent=1 // pred_fallthru
      _
    // Predicated region
    $region6: #{tpu_custom_call.1} parent=1 // pred_check
      _
    $region7: #{tpu_custom_call.1} parent=1 // pred_check_branch
      %27 = sbr.rel (0) target = $region9
    $region8: #{tpu_custom_call.1} parent=1 // pred_region
      %s29 = ssub.s32 512, 512
      %30 = vsyncadd [#allocation6], %s29
      %s31 = sshll.u32 [#allocation5], 4
      %s32 = int_to_ptr.vmem [resolvable:$true] %s31
      %37 = dma.hbm_to_vmem [thread:$0]  %s1, 512, %s32, [#allocation6], 128, 128, 8
    $region9: #{tpu_custom_call.1} parent=1 // pred_fallthru
      _
    // Predicated region
    $region10: #{tpu_custom_call.1} parent=1 // pred_check
      _
    $region11: #{tpu_custom_call.1} parent=1 // pred_check_branch
      %39 = sbr.rel (0) target = $region13
    $region12: #{tpu_custom_call.1} parent=1 // pred_region
      %s41 = ssub.s32 512, 512
      %42 = vsyncadd [#allocation6], %s41
      %s43 = sshll.u32 [#allocation7], 4
      %s44 = int_to_ptr.vmem [resolvable:$true] %s43
      %49 = dma.hbm_to_vmem [thread:$0]  %s2, 512, %s44, [#allocation6], 128, 128, 8
    $region13: #{tpu_custom_call.1} parent=1 // pred_fallthru
      _
    // Predicated region
    $region14: #{tpu_custom_call.1} parent=1 // pred_check
      _
    $region15: #{tpu_custom_call.1} parent=1 // pred_check_branch
      %51 = sbr.rel (0) target = $region17
    $region16: #{tpu_custom_call.1} parent=1 // pred_region
      _
    $region17: #{tpu_custom_call.1} parent=1 // pred_fallthru
      _
    // Predicated region
    $region18: #{tpu_custom_call.1} parent=1 // pred_check
      _
    $region19: #{tpu_custom_call.1} parent=1 // pred_check_branch
      %53 = sbr.rel (0) target = $region21
    $region20: #{tpu_custom_call.1} parent=1 // pred_region
      _
    $region21: #{tpu_custom_call.1} parent=1 // pred_fallthru
      _
    // Predicated region
    $region22: #{tpu_custom_call.1} parent=1 // pred_check
      _
    $region23: #{tpu_custom_call.1} parent=1 // pred_check_branch
      %55 = sbr.rel (0) target = $region25
    $region24: #{tpu_custom_call.1} parent=1 // pred_region
      _
    $region25: #{tpu_custom_call.1} parent=1 // pred_fallthru
      _
    // Predicated region
    $region26: #{tpu_custom_call.1} parent=1 // pred_check
      _
    $region27: #{tpu_custom_call.1} parent=1 // pred_check_branch
      %57 = sbr.rel (0) target = $region29
    $region28: #{tpu_custom_call.1} parent=1 // pred_region
      %58 = dma.done [#allocation3], 512
    $region29: #{tpu_custom_call.1} parent=1 // pred_fallthru
      _
    // Predicated region
    $region30: #{tpu_custom_call.1} parent=1 // pred_check
      _
    $region31: #{tpu_custom_call.1} parent=1 // pred_check_branch
      %60 = sbr.rel (0) target = $region33
    $region32: #{tpu_custom_call.1} parent=1 // pred_region
      %61 = dma.done [#allocation6], 512
    $region33: #{tpu_custom_call.1} parent=1 // pred_fallthru
      _
    // Predicated region
    $region34: #{tpu_custom_call.1} parent=1 // pred_check
      _
    $region35: #{tpu_custom_call.1} parent=1 // pred_check_branch
      %63 = sbr.rel (0) target = $region37
    $region36: #{tpu_custom_call.1} parent=1 // pred_region
      %64 = dma.done [#allocation6], 512
    $region37: #{tpu_custom_call.1} parent=1 // pred_fallthru
      _
    %v65 = vld [vmem:[#allocation7] sm:$0xff]
    %v66 = vld [vmem:[#allocation7 + $0x8] sm:$0xff]
    %v67 = vld [vmem:[#allocation7 + $0x10] sm:$0xff]
    %v68 = vld [vmem:[#allocation7 + $0x18] sm:$0xff]
    %v69 = vld [vmem:[%s3] sm:$0x1]
    %v70 = vld [vmem:[%s4] sm:$0x1]
    %v71 = vld [vmem:[%s5] sm:$0x1]
    %v72 = vld [vmem:[#allocation2] sm:$0xff]
    %v73 = vld [vmem:[#allocation2 + $0x8] sm:$0xff]
    %v74 = vld [vmem:[#allocation2 + $0x10] sm:$0xff]
    %v75 = vld [vmem:[#allocation2 + $0x18] sm:$0xff]
    %v76 = vld [vmem:[#allocation5] sm:$0xff]
    %v77 = vld [vmem:[#allocation5 + $0x8] sm:$0xff]
    %v78 = vld [vmem:[#allocation5 + $0x10] sm:$0xff]
    %v79 = vld [vmem:[#allocation5 + $0x18] sm:$0xff]
    %vm80 = vcmask 261120
    %v82 = vsel %vm80, %v72, 0
    %v85 = vsel %vm80, %v73, 0
    %v88 = vsel %vm80, %v74, 0
    %v91 = vsel %vm80, %v75, 0
    %93 = vmatprep.subr.mxu0 0.0
    %94 = vmatpush1.msra.mxu0 0.0
    %95 = vmatprep.subr.mxu0 0.0
    %96 = vmatpush1.msra.mxu0 0.0
    %97 = vmatprep.subr.mxu0 0.0
    %98 = vmatpush1.msra.mxu0 0.0
    %99 = vmatprep.subr.mxu0 0.0
    %100 = vmatpush1.msra.mxu0 0.0
    %101 = vmatprep.subr.mxu0 0.0
    %102 = vmatpush1.msra.mxu0 0.0
    %103 = vmatprep.subr.mxu0 0.0
    %104 = vmatpush1.msra.mxu0 0.0
    %105 = vmatprep.subr.mxu0 0.0
    %106 = vmatpush1.msra.mxu0 0.0
    %107 = vmatprep.subr.mxu0 0.0
    %108 = vmatpush1.msra.mxu0 0.0
    %109 = vmatprep.subr.mxu0 0.0
    %110 = vmatpush1.msra.mxu0 0.0
    %111 = vmatprep.subr.mxu0 0.0
    %112 = vmatpush1.msra.mxu0 0.0
    %113 = vmatprep.subr.mxu0 0.0
    %114 = vmatpush1.msra.mxu0 0.0
    %115 = vmatprep.subr.mxu0 0.0
    %116 = vmatpush1.msra.mxu0 0.0
    %117 = vmatprep.subr.mxu0 0.0
    %118 = vmatpush1.msra.mxu0 %v79
    %119 = vmatprep.subr.mxu0 0.0
    %120 = vmatpush1.msra.mxu0 %v78
    %121 = vmatprep.subr.mxu0 0.0
    %122 = vmatpush1.msra.mxu0 %v77
    %123 = vmatprep.subr.mxu0 0.0
    %124 = vmatpush1.msra.mxu0 %v76
    %125 = vmatprep.subr.mxu0 0.0
    %126 = vmatpush2.msra.mxu0 0.0
    %127 = vmatprep.subr.mxu0 0.0
    %128 = vmatpush2.msra.mxu0 0.0
    %129 = vmatprep.subr.mxu0 0.0
    %130 = vmatpush2.msra.mxu0 0.0
    %131 = vmatprep.subr.mxu0 0.0
    %132 = vmatpush2.msra.mxu0 0.0
    %133 = vmatprep.subr.mxu0 0.0
    %134 = vmatpush2.msra.mxu0 0.0
    %135 = vmatprep.subr.mxu0 0.0
    %136 = vmatpush2.msra.mxu0 0.0
    %137 = vmatprep.subr.mxu0 0.0
    %138 = vmatpush2.msra.mxu0 0.0
    %139 = vmatprep.subr.mxu0 0.0
    %140 = vmatpush2.msra.mxu0 0.0
    %141 = vmatprep.subr.mxu0 0.0
    %142 = vmatpush2.msra.mxu0 0.0
    %143 = vmatprep.subr.mxu0 0.0
    %144 = vmatpush2.msra.mxu0 0.0
    %145 = vmatprep.subr.mxu0 0.0
    %146 = vmatpush2.msra.mxu0 0.0
    %147 = vmatprep.subr.mxu0 0.0
    %148 = vmatpush2.msra.mxu0 0.0
    %149 = vmatprep.subr.mxu0 0.0
    %150 = vmatpush2.msra.mxu0 0.0
    %151 = vmatprep.subr.mxu0 0.0
    %152 = vmatpush2.msra.mxu0 0.0
    %153 = vmatprep.subr.mxu0 0.0
    %154 = vmatpush2.msra.mxu0 0.0
    %155 = vmatprep.subr.mxu0 0.0
    %156 = vmatpush2.msra.mxu0 0.0
    %157 = vmatprep.mubr.f32.mxu0 0.0
    %158 = vmatmul.mubr.f32.gmra.mxu0 %v82
    %v159 = vpop.f32.mrf.mxu0
    %v160 = vadd.f32 0.0, %v159
    %v161 = vpop.f32.mrf.mxu0
    %162 = vmatprep.mubr.f32.mxu0 0.0
    %163 = vmatmul.mubr.f32.gmra.mxu0 %v85
    %v164 = vpop.f32.mrf.mxu0
    %v165 = vadd.f32 0.0, %v164
    %v166 = vpop.f32.mrf.mxu0
    %167 = vmatprep.mubr.f32.mxu0 0.0
    %168 = vmatmul.mubr.f32.gmra.mxu0 %v88
    %v169 = vpop.f32.mrf.mxu0
    %v170 = vadd.f32 0.0, %v169
    %v171 = vpop.f32.mrf.mxu0
    %172 = vmatprep.mubr.f32.mxu0 0.0
    %173 = vmatmul.mubr.f32.gmra.mxu0 %v91
    %v174 = vpop.f32.mrf.mxu0
    %v175 = vadd.f32 0.0, %v174
    %v176 = vpop.f32.mrf.mxu0
    %177 = vdwg.mxu0
    %v178 = vlaneseq
    %v179 = vand.u32 %v178, 127
    %vm180 = vcmp.lt.s32.totalorder %v179, 9
    %v181 = vsel %vm180, 0.0, -1e+30
    %183 = vrot.lane.b32.xlu0 %v160, 120
    %v184 = vpop.permute.xlu0 %183
    %186 = vrot.lane.b32.xlu0 %v160, 112
    %v187 = vpop.permute.xlu0 %186
    %189 = vrot.lane.b32.xlu0 %v160, 104
    %v190 = vpop.permute.xlu0 %189
    %v192 = vcombine.low %v160, %v187
    %v193 = vcombine.high %v160, %v187
    %v195 = vunpack.c.l.s4 1983009808
    %v196 = vunpack.c.0.s8 %v195
    %v197 = vlaneseq
    %v198 = vshrl.u32 %v197, 7
    %v199 = vsub.s32 %v196, %v198
    %v200 = vrot.slane %v192, %v199
    %v202 = vunpack.c.l.s4 1983009808
    %v203 = vunpack.c.0.s8 %v202
    %v204 = vlaneseq
    %v205 = vshrl.u32 %v204, 7
    %v206 = vsub.s32 %v203, %v205
    %v207 = vrot.slane %v193, %v206
    %v208 = vcombine.low %v184, %v190
    %v209 = vcombine.high %v184, %v190
    %v211 = vunpack.c.l.s4 1983009808
    %v212 = vunpack.c.0.s8 %v211
    %v213 = vlaneseq
    %v214 = vshrl.u32 %v213, 7
    %v215 = vsub.s32 %v212, %v214
    %v216 = vrot.slane %v208, %v215
    %v218 = vunpack.c.l.s4 1983009808
    %v219 = vunpack.c.0.s8 %v218
    %v220 = vlaneseq
    %v221 = vshrl.u32 %v220, 7
    %v222 = vsub.s32 %v219, %v221
    %v223 = vrot.slane %v209, %v222
    %v224 = vcombine.low %v200, %v216
    %v225 = vcombine.high %v200, %v216
    %v227 = vunpack.c.l.s4 1934713408
    %v228 = vunpack.c.0.s8 %v227
    %v229 = vlaneseq
    %v230 = vshrl.u32 %v229, 7
    %v231 = vsub.s32 %v228, %v230
    %v232 = vrot.slane %v224, %v231
    %v234 = vunpack.c.l.s4 1934713408
    %v235 = vunpack.c.0.s8 %v234
    %v236 = vlaneseq
    %v237 = vshrl.u32 %v236, 7
    %v238 = vsub.s32 %v235, %v237
    %v239 = vrot.slane %v225, %v238
    %v240 = vcombine.low %v207, %v223
    %v241 = vcombine.high %v207, %v223
    %v243 = vunpack.c.l.s4 1934713408
    %v244 = vunpack.c.0.s8 %v243
    %v245 = vlaneseq
    %v246 = vshrl.u32 %v245, 7
    %v247 = vsub.s32 %v244, %v246
    %v248 = vrot.slane %v240, %v247
    %v250 = vunpack.c.l.s4 1934713408
    %v251 = vunpack.c.0.s8 %v250
    %v252 = vlaneseq
    %v253 = vshrl.u32 %v252, 7
    %v254 = vsub.s32 %v251, %v253
    %v255 = vrot.slane %v241, %v254
    %v256 = vcombine.high %v232, 0.0
    %v257 = vcombine.high %v239, 0.0
    %v258 = vcombine.high %v248, 0.0
    %v259 = vcombine.high %v255, 0.0
    %v260 = vcombine.low %v232, %v239
    %v262 = vunpack.c.l.s4 1983009808
    %v263 = vunpack.c.0.s8 %v262
    %v264 = vlaneseq
    %v265 = vshrl.u32 %v264, 7
    %v266 = vsub.s32 %v263, %v265
    %v267 = vrot.slane %v260, %v266
    %v268 = vcombine.low %v256, %v257
    %v270 = vunpack.c.l.s4 1983009808
    %v271 = vunpack.c.0.s8 %v270
    %v272 = vlaneseq
    %v273 = vshrl.u32 %v272, 7
    %v274 = vsub.s32 %v271, %v273
    %v275 = vrot.slane %v268, %v274
    %v276 = vcombine.low %v248, %v255
    %v278 = vunpack.c.l.s4 1983009808
    %v279 = vunpack.c.0.s8 %v278
    %v280 = vlaneseq
    %v281 = vshrl.u32 %v280, 7
    %v282 = vsub.s32 %v279, %v281
    %v283 = vrot.slane %v276, %v282
    %v284 = vcombine.low %v258, %v259
    %v286 = vunpack.c.l.s4 1983009808
    %v287 = vunpack.c.0.s8 %v286
    %v288 = vlaneseq
    %v289 = vshrl.u32 %v288, 7
    %v290 = vsub.s32 %v287, %v289
    %v291 = vrot.slane %v284, %v290
    %v292 = vcombine.low %v267, %v275
    %v293 = vcombine.high %v267, %v275
    %v295 = vunpack.c.l.s4 1934713408
    %v296 = vunpack.c.0.s8 %v295
    %v297 = vlaneseq
    %v298 = vshrl.u32 %v297, 7
    %v299 = vsub.s32 %v296, %v298
    %v300 = vrot.slane %v292, %v299
    %v302 = vunpack.c.l.s4 1934713408
    %v303 = vunpack.c.0.s8 %v302
    %v304 = vlaneseq
    %v305 = vshrl.u32 %v304, 7
    %v306 = vsub.s32 %v303, %v305
    %v307 = vrot.slane %v293, %v306
    %v308 = vcombine.low %v283, %v291
    %v309 = vcombine.high %v283, %v291
    %v311 = vunpack.c.l.s4 1934713408
    %v312 = vunpack.c.0.s8 %v311
    %v313 = vlaneseq
    %v314 = vshrl.u32 %v313, 7
    %v315 = vsub.s32 %v312, %v314
    %v316 = vrot.slane %v308, %v315
    %v318 = vunpack.c.l.s4 1934713408
    %v319 = vunpack.c.0.s8 %v318
    %v320 = vlaneseq
    %v321 = vshrl.u32 %v320, 7
    %v322 = vsub.s32 %v319, %v321
    %v323 = vrot.slane %v309, %v322
    %v324 = vcombine.low %v300, %v316
    %v325 = vcombine.high %v300, %v316
    %v326 = vcombine.low %v307, %v323
    %v327 = vcombine.high %v307, %v323
    %329 = vrot.lane.b32.xlu0 %v165, 120
    %v330 = vpop.permute.xlu0 %329
    %331 = vrot.lane.b32.xlu0 %v165, 112
    %v332 = vpop.permute.xlu0 %331
    %333 = vrot.lane.b32.xlu0 %v165, 104
    %v334 = vpop.permute.xlu0 %333
    %335 = vrot.lane.b32.xlu0 %v160, 96
    %v336 = vpop.permute.xlu0 %335
    %337 = vrot.lane.b32.xlu0 %v165, 96
    %v338 = vpop.permute.xlu0 %337
    %339 = vrot.lane.b32.xlu0 %v184, 96
    %v340 = vpop.permute.xlu0 %339
    %341 = vrot.lane.b32.xlu0 %v330, 96
    %v342 = vpop.permute.xlu0 %341
    %343 = vrot.lane.b32.xlu0 %v187, 96
    %v344 = vpop.permute.xlu0 %343
    %345 = vrot.lane.b32.xlu0 %v332, 96
    %v346 = vpop.permute.xlu0 %345
    %347 = vrot.lane.b32.xlu0 %v190, 96
    %v348 = vpop.permute.xlu0 %347
    %349 = vrot.lane.b32.xlu0 %v334, 96
    %v350 = vpop.permute.xlu0 %349
    %v359 = vcombine.low %v336, %v344
    %v360 = vcombine.high %v336, %v344
    %v362 = vunpack.c.l.s4 1983009808
    %v363 = vunpack.c.0.s8 %v362
    %v364 = vlaneseq
    %v365 = vshrl.u32 %v364, 7
    %v366 = vsub.s32 %v363, %v365
    %v367 = vrot.slane %v359, %v366
    %v369 = vunpack.c.l.s4 1983009808
    %v370 = vunpack.c.0.s8 %v369
    %v371 = vlaneseq
    %v372 = vshrl.u32 %v371, 7
    %v373 = vsub.s32 %v370, %v372
    %v374 = vrot.slane %v360, %v373
    %v375 = vcombine.low %v340, %v348
    %v376 = vcombine.high %v340, %v348
    %v378 = vunpack.c.l.s4 1983009808
    %v379 = vunpack.c.0.s8 %v378
    %v380 = vlaneseq
    %v381 = vshrl.u32 %v380, 7
    %v382 = vsub.s32 %v379, %v381
    %v383 = vrot.slane %v375, %v382
    %v385 = vunpack.c.l.s4 1983009808
    %v386 = vunpack.c.0.s8 %v385
    %v387 = vlaneseq
    %v388 = vshrl.u32 %v387, 7
    %v389 = vsub.s32 %v386, %v388
    %v390 = vrot.slane %v376, %v389
    %v391 = vcombine.low %v367, %v383
    %v392 = vcombine.high %v367, %v383
    %v394 = vunpack.c.l.s4 1934713408
    %v395 = vunpack.c.0.s8 %v394
    %v396 = vlaneseq
    %v397 = vshrl.u32 %v396, 7
    %v398 = vsub.s32 %v395, %v397
    %v399 = vrot.slane %v391, %v398
    %v401 = vunpack.c.l.s4 1934713408
    %v402 = vunpack.c.0.s8 %v401
    %v403 = vlaneseq
    %v404 = vshrl.u32 %v403, 7
    %v405 = vsub.s32 %v402, %v404
    %v406 = vrot.slane %v392, %v405
    %v407 = vcombine.low %v374, %v390
    %v408 = vcombine.high %v374, %v390
    %v410 = vunpack.c.l.s4 1934713408
    %v411 = vunpack.c.0.s8 %v410
    %v412 = vlaneseq
    %v413 = vshrl.u32 %v412, 7
    %v414 = vsub.s32 %v411, %v413
    %v415 = vrot.slane %v407, %v414
    %v417 = vunpack.c.l.s4 1934713408
    %v418 = vunpack.c.0.s8 %v417
    %v419 = vlaneseq
    %v420 = vshrl.u32 %v419, 7
    %v421 = vsub.s32 %v418, %v420
    %v422 = vrot.slane %v408, %v421
    %v423 = vcombine.high %v399, 0.0
    %v424 = vcombine.high %v406, 0.0
    %v425 = vcombine.high %v415, 0.0
    %v426 = vcombine.high %v422, 0.0
    %v427 = vcombine.low %v338, %v346
    %v428 = vcombine.high %v338, %v346
    %v430 = vunpack.c.l.s4 1983009808
    %v431 = vunpack.c.0.s8 %v430
    %v432 = vlaneseq
    %v433 = vshrl.u32 %v432, 7
    %v434 = vsub.s32 %v431, %v433
    %v435 = vrot.slane %v427, %v434
    %v437 = vunpack.c.l.s4 1983009808
    %v438 = vunpack.c.0.s8 %v437
    %v439 = vlaneseq
    %v440 = vshrl.u32 %v439, 7
    %v441 = vsub.s32 %v438, %v440
    %v442 = vrot.slane %v428, %v441
    %v443 = vcombine.low %v342, %v350
    %v444 = vcombine.high %v342, %v350
    %v446 = vunpack.c.l.s4 1983009808
    %v447 = vunpack.c.0.s8 %v446
    %v448 = vlaneseq
    %v449 = vshrl.u32 %v448, 7
    %v450 = vsub.s32 %v447, %v449
    %v451 = vrot.slane %v443, %v450
    %v453 = vunpack.c.l.s4 1983009808
    %v454 = vunpack.c.0.s8 %v453
    %v455 = vlaneseq
    %v456 = vshrl.u32 %v455, 7
    %v457 = vsub.s32 %v454, %v456
    %v458 = vrot.slane %v444, %v457
    %v459 = vcombine.low %v435, %v451
    %v460 = vcombine.high %v435, %v451
    %v462 = vunpack.c.l.s4 1934713408
    %v463 = vunpack.c.0.s8 %v462
    %v464 = vlaneseq
    %v465 = vshrl.u32 %v464, 7
    %v466 = vsub.s32 %v463, %v465
    %v467 = vrot.slane %v459, %v466
    %v469 = vunpack.c.l.s4 1934713408
    %v470 = vunpack.c.0.s8 %v469
    %v471 = vlaneseq
    %v472 = vshrl.u32 %v471, 7
    %v473 = vsub.s32 %v470, %v472
    %v474 = vrot.slane %v460, %v473
    %v475 = vcombine.low %v442, %v458
    %v476 = vcombine.high %v442, %v458
    %v478 = vunpack.c.l.s4 1934713408
    %v479 = vunpack.c.0.s8 %v478
    %v480 = vlaneseq
    %v481 = vshrl.u32 %v480, 7
    %v482 = vsub.s32 %v479, %v481
    %v483 = vrot.slane %v475, %v482
    %v485 = vunpack.c.l.s4 1934713408
    %v486 = vunpack.c.0.s8 %v485
    %v487 = vlaneseq
    %v488 = vshrl.u32 %v487, 7
    %v489 = vsub.s32 %v486, %v488
    %v490 = vrot.slane %v476, %v489
    %v491 = vcombine.high %v467, 0.0
    %v492 = vcombine.high %v474, 0.0
    %v493 = vcombine.high %v483, 0.0
    %v494 = vcombine.high %v490, 0.0
    %v495 = vcombine.low %v399, %v406
    %v497 = vunpack.c.l.s4 1983009808
    %v498 = vunpack.c.0.s8 %v497
    %v499 = vlaneseq
    %v500 = vshrl.u32 %v499, 7
    %v501 = vsub.s32 %v498, %v500
    %v502 = vrot.slane %v495, %v501
    %v503 = vcombine.low %v423, %v424
    %v505 = vunpack.c.l.s4 1983009808
    %v506 = vunpack.c.0.s8 %v505
    %v507 = vlaneseq
    %v508 = vshrl.u32 %v507, 7
    %v509 = vsub.s32 %v506, %v508
    %v510 = vrot.slane %v503, %v509
    %v511 = vcombine.low %v415, %v422
    %v513 = vunpack.c.l.s4 1983009808
    %v514 = vunpack.c.0.s8 %v513
    %v515 = vlaneseq
    %v516 = vshrl.u32 %v515, 7
    %v517 = vsub.s32 %v514, %v516
    %v518 = vrot.slane %v511, %v517
    %v519 = vcombine.low %v425, %v426
    %v521 = vunpack.c.l.s4 1983009808
    %v522 = vunpack.c.0.s8 %v521
    %v523 = vlaneseq
    %v524 = vshrl.u32 %v523, 7
    %v525 = vsub.s32 %v522, %v524
    %v526 = vrot.slane %v519, %v525
    %v527 = vcombine.low %v502, %v510
    %v528 = vcombine.high %v502, %v510
    %v530 = vunpack.c.l.s4 1934713408
    %v531 = vunpack.c.0.s8 %v530
    %v532 = vlaneseq
    %v533 = vshrl.u32 %v532, 7
    %v534 = vsub.s32 %v531, %v533
    %v535 = vrot.slane %v527, %v534
    %v537 = vunpack.c.l.s4 1934713408
    %v538 = vunpack.c.0.s8 %v537
    %v539 = vlaneseq
    %v540 = vshrl.u32 %v539, 7
    %v541 = vsub.s32 %v538, %v540
    %v542 = vrot.slane %v528, %v541
    %v543 = vcombine.low %v518, %v526
    %v544 = vcombine.high %v518, %v526
    %v546 = vunpack.c.l.s4 1934713408
    %v547 = vunpack.c.0.s8 %v546
    %v548 = vlaneseq
    %v549 = vshrl.u32 %v548, 7
    %v550 = vsub.s32 %v547, %v549
    %v551 = vrot.slane %v543, %v550
    %v553 = vunpack.c.l.s4 1934713408
    %v554 = vunpack.c.0.s8 %v553
    %v555 = vlaneseq
    %v556 = vshrl.u32 %v555, 7
    %v557 = vsub.s32 %v554, %v556
    %v558 = vrot.slane %v544, %v557
    %v559 = vcombine.low %v535, %v551
    %v560 = vcombine.high %v535, %v551
    %v561 = vcombine.low %v542, %v558
    %v562 = vcombine.high %v542, %v558
    %v563 = vcombine.low %v467, %v474
    %v565 = vunpack.c.l.s4 1983009808
    %v566 = vunpack.c.0.s8 %v565
    %v567 = vlaneseq
    %v568 = vshrl.u32 %v567, 7
    %v569 = vsub.s32 %v566, %v568
    %v570 = vrot.slane %v563, %v569
    %v571 = vcombine.low %v491, %v492
    %v573 = vunpack.c.l.s4 1983009808
    %v574 = vunpack.c.0.s8 %v573
    %v575 = vlaneseq
    %v576 = vshrl.u32 %v575, 7
    %v577 = vsub.s32 %v574, %v576
    %v578 = vrot.slane %v571, %v577
    %v579 = vcombine.low %v483, %v490
    %v581 = vunpack.c.l.s4 1983009808
    %v582 = vunpack.c.0.s8 %v581
    %v583 = vlaneseq
    %v584 = vshrl.u32 %v583, 7
    %v585 = vsub.s32 %v582, %v584
    %v586 = vrot.slane %v579, %v585
    %v587 = vcombine.low %v493, %v494
    %v589 = vunpack.c.l.s4 1983009808
    %v590 = vunpack.c.0.s8 %v589
    %v591 = vlaneseq
    %v592 = vshrl.u32 %v591, 7
    %v593 = vsub.s32 %v590, %v592
    %v594 = vrot.slane %v587, %v593
    %v595 = vcombine.low %v570, %v578
    %v596 = vcombine.high %v570, %v578
    %v598 = vunpack.c.l.s4 1934713408
    %v599 = vunpack.c.0.s8 %v598
    %v600 = vlaneseq
    %v601 = vshrl.u32 %v600, 7
    %v602 = vsub.s32 %v599, %v601
    %v603 = vrot.slane %v595, %v602
    %v605 = vunpack.c.l.s4 1934713408
    %v606 = vunpack.c.0.s8 %v605
    %v607 = vlaneseq
    %v608 = vshrl.u32 %v607, 7
    %v609 = vsub.s32 %v606, %v608
    %v610 = vrot.slane %v596, %v609
    %v611 = vcombine.low %v586, %v594
    %v612 = vcombine.high %v586, %v594
    %v614 = vunpack.c.l.s4 1934713408
    %v615 = vunpack.c.0.s8 %v614
    %v616 = vlaneseq
    %v617 = vshrl.u32 %v616, 7
    %v618 = vsub.s32 %v615, %v617
    %v619 = vrot.slane %v611, %v618
    %v621 = vunpack.c.l.s4 1934713408
    %v622 = vunpack.c.0.s8 %v621
    %v623 = vlaneseq
    %v624 = vshrl.u32 %v623, 7
    %v625 = vsub.s32 %v622, %v624
    %v626 = vrot.slane %v612, %v625
    %v627 = vcombine.low %v603, %v619
    %v628 = vcombine.high %v603, %v619
    %v629 = vcombine.low %v610, %v626
    %v630 = vcombine.high %v610, %v626
    %631 = vrot.lane.b32.xlu0 %v160, 64
    %v632 = vpop.permute.xlu0 %631
    %633 = vrot.lane.b32.xlu0 %v165, 64
    %v634 = vpop.permute.xlu0 %633
    %635 = vrot.lane.b32.xlu0 %v184, 64
    %v636 = vpop.permute.xlu0 %635
    %637 = vrot.lane.b32.xlu0 %v330, 64
    %v638 = vpop.permute.xlu0 %637
    %639 = vrot.lane.b32.xlu0 %v187, 64
    %v640 = vpop.permute.xlu0 %639
    %641 = vrot.lane.b32.xlu0 %v332, 64
    %v642 = vpop.permute.xlu0 %641
    %643 = vrot.lane.b32.xlu0 %v190, 64
    %v644 = vpop.permute.xlu0 %643
    %645 = vrot.lane.b32.xlu0 %v334, 64
    %v646 = vpop.permute.xlu0 %645
    %v655 = vcombine.low %v632, %v640
    %v656 = vcombine.high %v632, %v640
    %v658 = vunpack.c.l.s4 1983009808
    %v659 = vunpack.c.0.s8 %v658
    %v660 = vlaneseq
    %v661 = vshrl.u32 %v660, 7
    %v662 = vsub.s32 %v659, %v661
    %v663 = vrot.slane %v655, %v662
    %v665 = vunpack.c.l.s4 1983009808
    %v666 = vunpack.c.0.s8 %v665
    %v667 = vlaneseq
    %v668 = vshrl.u32 %v667, 7
    %v669 = vsub.s32 %v666, %v668
    %v670 = vrot.slane %v656, %v669
    %v671 = vcombine.low %v636, %v644
    %v672 = vcombine.high %v636, %v644
    %v674 = vunpack.c.l.s4 1983009808
    %v675 = vunpack.c.0.s8 %v674
    %v676 = vlaneseq
    %v677 = vshrl.u32 %v676, 7
    %v678 = vsub.s32 %v675, %v677
    %v679 = vrot.slane %v671, %v678
    %v681 = vunpack.c.l.s4 1983009808
    %v682 = vunpack.c.0.s8 %v681
    %v683 = vlaneseq
    %v684 = vshrl.u32 %v683, 7
    %v685 = vsub.s32 %v682, %v684
    %v686 = vrot.slane %v672, %v685
    %v687 = vcombine.low %v663, %v679
    %v688 = vcombine.high %v663, %v679
    %v690 = vunpack.c.l.s4 1934713408
    %v691 = vunpack.c.0.s8 %v690
    %v692 = vlaneseq
    %v693 = vshrl.u32 %v692, 7
    %v694 = vsub.s32 %v691, %v693
    %v695 = vrot.slane %v687, %v694
    %v697 = vunpack.c.l.s4 1934713408
    %v698 = vunpack.c.0.s8 %v697
    %v699 = vlaneseq
    %v700 = vshrl.u32 %v699, 7
    %v701 = vsub.s32 %v698, %v700
    %v702 = vrot.slane %v688, %v701
    %v703 = vcombine.low %v670, %v686
    %v704 = vcombine.high %v670, %v686
    %v706 = vunpack.c.l.s4 1934713408
    %v707 = vunpack.c.0.s8 %v706
    %v708 = vlaneseq
    %v709 = vshrl.u32 %v708, 7
    %v710 = vsub.s32 %v707, %v709
    %v711 = vrot.slane %v703, %v710
    %v713 = vunpack.c.l.s4 1934713408
    %v714 = vunpack.c.0.s8 %v713
    %v715 = vlaneseq
    %v716 = vshrl.u32 %v715, 7
    %v717 = vsub.s32 %v714, %v716
    %v718 = vrot.slane %v704, %v717
    %v719 = vcombine.high %v695, 0.0
    %v720 = vcombine.high %v702, 0.0
    %v721 = vcombine.high %v711, 0.0
    %v722 = vcombine.high %v718, 0.0
    %v723 = vcombine.low %v634, %v642
    %v724 = vcombine.high %v634, %v642
    %v726 = vunpack.c.l.s4 1983009808
    %v727 = vunpack.c.0.s8 %v726
    %v728 = vlaneseq
    %v729 = vshrl.u32 %v728, 7
    %v730 = vsub.s32 %v727, %v729
    %v731 = vrot.slane %v723, %v730
    %v733 = vunpack.c.l.s4 1983009808
    %v734 = vunpack.c.0.s8 %v733
    %v735 = vlaneseq
    %v736 = vshrl.u32 %v735, 7
    %v737 = vsub.s32 %v734, %v736
    %v738 = vrot.slane %v724, %v737
    %v739 = vcombine.low %v638, %v646
    %v740 = vcombine.high %v638, %v646
    %v742 = vunpack.c.l.s4 1983009808
    %v743 = vunpack.c.0.s8 %v742
    %v744 = vlaneseq
    %v745 = vshrl.u32 %v744, 7
    %v746 = vsub.s32 %v743, %v745
    %v747 = vrot.slane %v739, %v746
    %v749 = vunpack.c.l.s4 1983009808
    %v750 = vunpack.c.0.s8 %v749
    %v751 = vlaneseq
    %v752 = vshrl.u32 %v751, 7
    %v753 = vsub.s32 %v750, %v752
    %v754 = vrot.slane %v740, %v753
    %v755 = vcombine.low %v731, %v747
    %v756 = vcombine.high %v731, %v747
    %v758 = vunpack.c.l.s4 1934713408
    %v759 = vunpack.c.0.s8 %v758
    %v760 = vlaneseq
    %v761 = vshrl.u32 %v760, 7
    %v762 = vsub.s32 %v759, %v761
    %v763 = vrot.slane %v755, %v762
    %v765 = vunpack.c.l.s4 1934713408
    %v766 = vunpack.c.0.s8 %v765
    %v767 = vlaneseq
    %v768 = vshrl.u32 %v767, 7
    %v769 = vsub.s32 %v766, %v768
    %v770 = vrot.slane %v756, %v769
    %v771 = vcombine.low %v738, %v754
    %v772 = vcombine.high %v738, %v754
    %v774 = vunpack.c.l.s4 1934713408
    %v775 = vunpack.c.0.s8 %v774
    %v776 = vlaneseq
    %v777 = vshrl.u32 %v776, 7
    %v778 = vsub.s32 %v775, %v777
    %v779 = vrot.slane %v771, %v778
    %v781 = vunpack.c.l.s4 1934713408
    %v782 = vunpack.c.0.s8 %v781
    %v783 = vlaneseq
    %v784 = vshrl.u32 %v783, 7
    %v785 = vsub.s32 %v782, %v784
    %v786 = vrot.slane %v772, %v785
    %v787 = vcombine.high %v763, 0.0
    %v788 = vcombine.high %v770, 0.0
    %v789 = vcombine.high %v779, 0.0
    %v790 = vcombine.high %v786, 0.0
    %v791 = vcombine.low %v695, %v702
    %v793 = vunpack.c.l.s4 1983009808
    %v794 = vunpack.c.0.s8 %v793
    %v795 = vlaneseq
    %v796 = vshrl.u32 %v795, 7
    %v797 = vsub.s32 %v794, %v796
    %v798 = vrot.slane %v791, %v797
    %v799 = vcombine.low %v719, %v720
    %v801 = vunpack.c.l.s4 1983009808
    %v802 = vunpack.c.0.s8 %v801
    %v803 = vlaneseq
    %v804 = vshrl.u32 %v803, 7
    %v805 = vsub.s32 %v802, %v804
    %v806 = vrot.slane %v799, %v805
    %v807 = vcombine.low %v711, %v718
    %v809 = vunpack.c.l.s4 1983009808
    %v810 = vunpack.c.0.s8 %v809
    %v811 = vlaneseq
    %v812 = vshrl.u32 %v811, 7
    %v813 = vsub.s32 %v810, %v812
    %v814 = vrot.slane %v807, %v813
    %v815 = vcombine.low %v721, %v722
    %v817 = vunpack.c.l.s4 1983009808
    %v818 = vunpack.c.0.s8 %v817
    %v819 = vlaneseq
    %v820 = vshrl.u32 %v819, 7
    %v821 = vsub.s32 %v818, %v820
    %v822 = vrot.slane %v815, %v821
    %v823 = vcombine.low %v798, %v806
    %v824 = vcombine.high %v798, %v806
    %v826 = vunpack.c.l.s4 1934713408
    %v827 = vunpack.c.0.s8 %v826
    %v828 = vlaneseq
    %v829 = vshrl.u32 %v828, 7
    %v830 = vsub.s32 %v827, %v829
    %v831 = vrot.slane %v823, %v830
    %v833 = vunpack.c.l.s4 1934713408
    %v834 = vunpack.c.0.s8 %v833
    %v835 = vlaneseq
    %v836 = vshrl.u32 %v835, 7
    %v837 = vsub.s32 %v834, %v836
    %v838 = vrot.slane %v824, %v837
    %v839 = vcombine.low %v814, %v822
    %v840 = vcombine.high %v814, %v822
    %v842 = vunpack.c.l.s4 1934713408
    %v843 = vunpack.c.0.s8 %v842
    %v844 = vlaneseq
    %v845 = vshrl.u32 %v844, 7
    %v846 = vsub.s32 %v843, %v845
    %v847 = vrot.slane %v839, %v846
    %v849 = vunpack.c.l.s4 1934713408
    %v850 = vunpack.c.0.s8 %v849
    %v851 = vlaneseq
    %v852 = vshrl.u32 %v851, 7
    %v853 = vsub.s32 %v850, %v852
    %v854 = vrot.slane %v840, %v853
    %v855 = vcombine.low %v831, %v847
    %v856 = vcombine.high %v831, %v847
    %v857 = vcombine.low %v838, %v854
    %v858 = vcombine.high %v838, %v854
    %v859 = vcombine.low %v763, %v770
    %v861 = vunpack.c.l.s4 1983009808
    %v862 = vunpack.c.0.s8 %v861
    %v863 = vlaneseq
    %v864 = vshrl.u32 %v863, 7
    %v865 = vsub.s32 %v862, %v864
    %v866 = vrot.slane %v859, %v865
    %v867 = vcombine.low %v787, %v788
    %v869 = vunpack.c.l.s4 1983009808
    %v870 = vunpack.c.0.s8 %v869
    %v871 = vlaneseq
    %v872 = vshrl.u32 %v871, 7
    %v873 = vsub.s32 %v870, %v872
    %v874 = vrot.slane %v867, %v873
    %v875 = vcombine.low %v779, %v786
    %v877 = vunpack.c.l.s4 1983009808
    %v878 = vunpack.c.0.s8 %v877
    %v879 = vlaneseq
    %v880 = vshrl.u32 %v879, 7
    %v881 = vsub.s32 %v878, %v880
    %v882 = vrot.slane %v875, %v881
    %v883 = vcombine.low %v789, %v790
    %v885 = vunpack.c.l.s4 1983009808
    %v886 = vunpack.c.0.s8 %v885
    %v887 = vlaneseq
    %v888 = vshrl.u32 %v887, 7
    %v889 = vsub.s32 %v886, %v888
    %v890 = vrot.slane %v883, %v889
    %v891 = vcombine.low %v866, %v874
    %v892 = vcombine.high %v866, %v874
    %v894 = vunpack.c.l.s4 1934713408
    %v895 = vunpack.c.0.s8 %v894
    %v896 = vlaneseq
    %v897 = vshrl.u32 %v896, 7
    %v898 = vsub.s32 %v895, %v897
    %v899 = vrot.slane %v891, %v898
    %v901 = vunpack.c.l.s4 1934713408
    %v902 = vunpack.c.0.s8 %v901
    %v903 = vlaneseq
    %v904 = vshrl.u32 %v903, 7
    %v905 = vsub.s32 %v902, %v904
    %v906 = vrot.slane %v892, %v905
    %v907 = vcombine.low %v882, %v890
    %v908 = vcombine.high %v882, %v890
    %v910 = vunpack.c.l.s4 1934713408
    %v911 = vunpack.c.0.s8 %v910
    %v912 = vlaneseq
    %v913 = vshrl.u32 %v912, 7
    %v914 = vsub.s32 %v911, %v913
    %v915 = vrot.slane %v907, %v914
    %v917 = vunpack.c.l.s4 1934713408
    %v918 = vunpack.c.0.s8 %v917
    %v919 = vlaneseq
    %v920 = vshrl.u32 %v919, 7
    %v921 = vsub.s32 %v918, %v920
    %v922 = vrot.slane %v908, %v921
    %v923 = vcombine.low %v899, %v915
    %v924 = vcombine.high %v899, %v915
    %v925 = vcombine.low %v906, %v922
    %v926 = vcombine.high %v906, %v922
    %vm927 = vcmask 64512
    %v929 = vsel %vm927, %v324, 0
    %v932 = vsel %vm927, %v559, 0
    %v935 = vsel %vm927, %v627, 0
    %937 = vmatprep.subr.mxu0 0.0
    %938 = vmatpush1.xpose.msra.mxu0 0.0
    %939 = vmatprep.subr.mxu0 0.0
    %940 = vmatpush1.xpose.msra.mxu0 0.0
    %941 = vmatprep.subr.mxu0 0.0
    %942 = vmatpush1.xpose.msra.mxu0 0.0
    %943 = vmatprep.subr.mxu0 0.0
    %944 = vmatpush1.xpose.msra.mxu0 0.0
    %945 = vmatprep.subr.mxu0 0.0
    %946 = vmatpush1.xpose.msra.mxu0 0.0
    %947 = vmatprep.subr.mxu0 0.0
    %948 = vmatpush1.xpose.msra.mxu0 0.0
    %949 = vmatprep.subr.mxu0 0.0
    %950 = vmatpush1.xpose.msra.mxu0 0.0
    %951 = vmatprep.subr.mxu0 0.0
    %952 = vmatpush1.xpose.msra.mxu0 0.0
    %953 = vmatprep.subr.mxu0 0.0
    %954 = vmatpush1.xpose.msra.mxu0 0.0
    %955 = vmatprep.subr.mxu0 0.0
    %956 = vmatpush1.xpose.msra.mxu0 0.0
    %957 = vmatprep.subr.mxu0 0.0
    %958 = vmatpush1.xpose.msra.mxu0 0.0
    %959 = vmatprep.subr.mxu0 0.0
    %960 = vmatpush1.xpose.msra.mxu0 0.0
    %961 = vmatprep.subr.mxu0 0.0
    %962 = vmatpush1.xpose.msra.mxu0 0.0
    %963 = vmatprep.subr.mxu0 0.0
    %964 = vmatpush1.xpose.msra.mxu0 0.0
    %965 = vmatprep.subr.mxu0 0.0
    %966 = vmatpush1.xpose.msra.mxu0 %v935
    %967 = vmatprep.subr.mxu0 0.0
    %968 = vmatpush1.xpose.msra.mxu0 %v932
    %969 = vmatprep.subr.mxu0 0.0
    %970 = vmatpush2.xpose.msra.mxu0 0.0
    %971 = vmatprep.subr.mxu0 0.0
    %972 = vmatpush2.xpose.msra.mxu0 0.0
    %973 = vmatprep.subr.mxu0 0.0
    %974 = vmatpush2.xpose.msra.mxu0 0.0
    %975 = vmatprep.subr.mxu0 0.0
    %976 = vmatpush2.xpose.msra.mxu0 0.0
    %977 = vmatprep.subr.mxu0 0.0
    %978 = vmatpush2.xpose.msra.mxu0 0.0
    %979 = vmatprep.subr.mxu0 0.0
    %980 = vmatpush2.xpose.msra.mxu0 0.0
    %981 = vmatprep.subr.mxu0 0.0
    %982 = vmatpush2.xpose.msra.mxu0 0.0
    %983 = vmatprep.subr.mxu0 0.0
    %984 = vmatpush2.xpose.msra.mxu0 0.0
    %985 = vmatprep.subr.mxu0 0.0
    %986 = vmatpush2.xpose.msra.mxu0 0.0
    %987 = vmatprep.subr.mxu0 0.0
    %988 = vmatpush2.xpose.msra.mxu0 0.0
    %989 = vmatprep.subr.mxu0 0.0
    %990 = vmatpush2.xpose.msra.mxu0 0.0
    %991 = vmatprep.subr.mxu0 0.0
    %992 = vmatpush2.xpose.msra.mxu0 0.0
    %993 = vmatprep.subr.mxu0 0.0
    %994 = vmatpush2.xpose.msra.mxu0 0.0
    %995 = vmatprep.subr.mxu0 0.0
    %996 = vmatpush2.xpose.msra.mxu0 0.0
    %997 = vmatprep.subr.mxu0 0.0
    %998 = vmatpush2.xpose.msra.mxu0 0.0
    %999 = vmatprep.subr.mxu0 0.0
    %1000 = vmatpush2.xpose.msra.mxu0 0.0
    %1001 = vmatprep.mubr.f32.mxu0 0.0
    %1002 = vmatmul.mubr.f32.gmra.mxu0 %v929
    %v1003 = vpop.f32.mrf.mxu0
    %v1004 = vadd.f32 0.0, %v1003
    %v1005 = vpop.f32.mrf.mxu0
    %1006 = vdwg.mxu0
    %v1008 = vsel %vm927, %v325, 0
    %v1011 = vsel %vm927, %v560, 0
    %v1014 = vsel %vm927, %v628, 0
    %1016 = vmatprep.subr.mxu0 0.0
    %1017 = vmatpush1.xpose.msra.mxu0 0.0
    %1018 = vmatprep.subr.mxu0 0.0
    %1019 = vmatpush1.xpose.msra.mxu0 0.0
    %1020 = vmatprep.subr.mxu0 0.0
    %1021 = vmatpush1.xpose.msra.mxu0 0.0
    %1022 = vmatprep.subr.mxu0 0.0
    %1023 = vmatpush1.xpose.msra.mxu0 0.0
    %1024 = vmatprep.subr.mxu0 0.0
    %1025 = vmatpush1.xpose.msra.mxu0 0.0
    %1026 = vmatprep.subr.mxu0 0.0
    %1027 = vmatpush1.xpose.msra.mxu0 0.0
    %1028 = vmatprep.subr.mxu0 0.0
    %1029 = vmatpush1.xpose.msra.mxu0 0.0
    %1030 = vmatprep.subr.mxu0 0.0
    %1031 = vmatpush1.xpose.msra.mxu0 0.0
    %1032 = vmatprep.subr.mxu0 0.0
    %1033 = vmatpush1.xpose.msra.mxu0 0.0
    %1034 = vmatprep.subr.mxu0 0.0
    %1035 = vmatpush1.xpose.msra.mxu0 0.0
    %1036 = vmatprep.subr.mxu0 0.0
    %1037 = vmatpush1.xpose.msra.mxu0 0.0
    %1038 = vmatprep.subr.mxu0 0.0
    %1039 = vmatpush1.xpose.msra.mxu0 0.0
    %1040 = vmatprep.subr.mxu0 0.0
    %1041 = vmatpush1.xpose.msra.mxu0 0.0
    %1042 = vmatprep.subr.mxu0 0.0
    %1043 = vmatpush1.xpose.msra.mxu0 0.0
    %1044 = vmatprep.subr.mxu0 0.0
    %1045 = vmatpush1.xpose.msra.mxu0 %v1014
    %1046 = vmatprep.subr.mxu0 0.0
    %1047 = vmatpush1.xpose.msra.mxu0 %v1011
    %1048 = vmatprep.subr.mxu0 0.0
    %1049 = vmatpush2.xpose.msra.mxu0 0.0
    %1050 = vmatprep.subr.mxu0 0.0
    %1051 = vmatpush2.xpose.msra.mxu0 0.0
    %1052 = vmatprep.subr.mxu0 0.0
    %1053 = vmatpush2.xpose.msra.mxu0 0.0
    %1054 = vmatprep.subr.mxu0 0.0
    %1055 = vmatpush2.xpose.msra.mxu0 0.0
    %1056 = vmatprep.subr.mxu0 0.0
    %1057 = vmatpush2.xpose.msra.mxu0 0.0
    %1058 = vmatprep.subr.mxu0 0.0
    %1059 = vmatpush2.xpose.msra.mxu0 0.0
    %1060 = vmatprep.subr.mxu0 0.0
    %1061 = vmatpush2.xpose.msra.mxu0 0.0
    %1062 = vmatprep.subr.mxu0 0.0
    %1063 = vmatpush2.xpose.msra.mxu0 0.0
    %1064 = vmatprep.subr.mxu0 0.0
    %1065 = vmatpush2.xpose.msra.mxu0 0.0
    %1066 = vmatprep.subr.mxu0 0.0
    %1067 = vmatpush2.xpose.msra.mxu0 0.0
    %1068 = vmatprep.subr.mxu0 0.0
    %1069 = vmatpush2.xpose.msra.mxu0 0.0
    %1070 = vmatprep.subr.mxu0 0.0
    %1071 = vmatpush2.xpose.msra.mxu0 0.0
    %1072 = vmatprep.subr.mxu0 0.0
    %1073 = vmatpush2.xpose.msra.mxu0 0.0
    %1074 = vmatprep.subr.mxu0 0.0
    %1075 = vmatpush2.xpose.msra.mxu0 0.0
    %1076 = vmatprep.subr.mxu0 0.0
    %1077 = vmatpush2.xpose.msra.mxu0 0.0
    %1078 = vmatprep.subr.mxu0 0.0
    %1079 = vmatpush2.xpose.msra.mxu0 0.0
    %1080 = vmatprep.mubr.f32.mxu0 0.0
    %1081 = vmatmul.mubr.f32.gmra.mxu0 %v1008
    %v1082 = vpop.f32.mrf.mxu0
    %v1083 = vadd.f32 0.0, %v1082
    %v1084 = vpop.f32.mrf.mxu0
    %1085 = vdwg.mxu0
    %v1087 = vsel %vm927, %v326, 0
    %v1090 = vsel %vm927, %v561, 0
    %v1093 = vsel %vm927, %v629, 0
    %1095 = vmatprep.subr.mxu0 0.0
    %1096 = vmatpush1.xpose.msra.mxu0 0.0
    %1097 = vmatprep.subr.mxu0 0.0
    %1098 = vmatpush1.xpose.msra.mxu0 0.0
    %1099 = vmatprep.subr.mxu0 0.0
    %1100 = vmatpush1.xpose.msra.mxu0 0.0
    %1101 = vmatprep.subr.mxu0 0.0
    %1102 = vmatpush1.xpose.msra.mxu0 0.0
    %1103 = vmatprep.subr.mxu0 0.0
    %1104 = vmatpush1.xpose.msra.mxu0 0.0
    %1105 = vmatprep.subr.mxu0 0.0
    %1106 = vmatpush1.xpose.msra.mxu0 0.0
    %1107 = vmatprep.subr.mxu0 0.0
    %1108 = vmatpush1.xpose.msra.mxu0 0.0
    %1109 = vmatprep.subr.mxu0 0.0
    %1110 = vmatpush1.xpose.msra.mxu0 0.0
    %1111 = vmatprep.subr.mxu0 0.0
    %1112 = vmatpush1.xpose.msra.mxu0 0.0
    %1113 = vmatprep.subr.mxu0 0.0
    %1114 = vmatpush1.xpose.msra.mxu0 0.0
    %1115 = vmatprep.subr.mxu0 0.0
    %1116 = vmatpush1.xpose.msra.mxu0 0.0
    %1117 = vmatprep.subr.mxu0 0.0
    %1118 = vmatpush1.xpose.msra.mxu0 0.0
    %1119 = vmatprep.subr.mxu0 0.0
    %1120 = vmatpush1.xpose.msra.mxu0 0.0
    %1121 = vmatprep.subr.mxu0 0.0
    %1122 = vmatpush1.xpose.msra.mxu0 0.0
    %1123 = vmatprep.subr.mxu0 0.0
    %1124 = vmatpush1.xpose.msra.mxu0 %v1093
    %1125 = vmatprep.subr.mxu0 0.0
    %1126 = vmatpush1.xpose.msra.mxu0 %v1090
    %1127 = vmatprep.subr.mxu0 0.0
    %1128 = vmatpush2.xpose.msra.mxu0 0.0
    %1129 = vmatprep.subr.mxu0 0.0
    %1130 = vmatpush2.xpose.msra.mxu0 0.0
    %1131 = vmatprep.subr.mxu0 0.0
    %1132 = vmatpush2.xpose.msra.mxu0 0.0
    %1133 = vmatprep.subr.mxu0 0.0
    %1134 = vmatpush2.xpose.msra.mxu0 0.0
    %1135 = vmatprep.subr.mxu0 0.0
    %1136 = vmatpush2.xpose.msra.mxu0 0.0
    %1137 = vmatprep.subr.mxu0 0.0
    %1138 = vmatpush2.xpose.msra.mxu0 0.0
    %1139 = vmatprep.subr.mxu0 0.0
    %1140 = vmatpush2.xpose.msra.mxu0 0.0
    %1141 = vmatprep.subr.mxu0 0.0
    %1142 = vmatpush2.xpose.msra.mxu0 0.0
    %1143 = vmatprep.subr.mxu0 0.0
    %1144 = vmatpush2.xpose.msra.mxu0 0.0
    %1145 = vmatprep.subr.mxu0 0.0
    %1146 = vmatpush2.xpose.msra.mxu0 0.0
    %1147 = vmatprep.subr.mxu0 0.0
    %1148 = vmatpush2.xpose.msra.mxu0 0.0
    %1149 = vmatprep.subr.mxu0 0.0
    %1150 = vmatpush2.xpose.msra.mxu0 0.0
    %1151 = vmatprep.subr.mxu0 0.0
    %1152 = vmatpush2.xpose.msra.mxu0 0.0
    %1153 = vmatprep.subr.mxu0 0.0
    %1154 = vmatpush2.xpose.msra.mxu0 0.0
    %1155 = vmatprep.subr.mxu0 0.0
    %1156 = vmatpush2.xpose.msra.mxu0 0.0
    %1157 = vmatprep.subr.mxu0 0.0
    %1158 = vmatpush2.xpose.msra.mxu0 0.0
    %1159 = vmatprep.mubr.f32.mxu0 0.0
    %1160 = vmatmul.mubr.f32.gmra.mxu0 %v1087
    %v1161 = vpop.f32.mrf.mxu0
    %v1162 = vadd.f32 0.0, %v1161
    %v1163 = vpop.f32.mrf.mxu0
    %1164 = vdwg.mxu0
    %v1166 = vsel %vm927, %v327, 0
    %v1169 = vsel %vm927, %v562, 0
    %v1172 = vsel %vm927, %v630, 0
    %1174 = vmatprep.subr.mxu0 0.0
    %1175 = vmatpush1.xpose.msra.mxu0 0.0
    %1176 = vmatprep.subr.mxu0 0.0
    %1177 = vmatpush1.xpose.msra.mxu0 0.0
    %1178 = vmatprep.subr.mxu0 0.0
    %1179 = vmatpush1.xpose.msra.mxu0 0.0
    %1180 = vmatprep.subr.mxu0 0.0
    %1181 = vmatpush1.xpose.msra.mxu0 0.0
    %1182 = vmatprep.subr.mxu0 0.0
    %1183 = vmatpush1.xpose.msra.mxu0 0.0
    %1184 = vmatprep.subr.mxu0 0.0
    %1185 = vmatpush1.xpose.msra.mxu0 0.0
    %1186 = vmatprep.subr.mxu0 0.0
    %1187 = vmatpush1.xpose.msra.mxu0 0.0
    %1188 = vmatprep.subr.mxu0 0.0
    %1189 = vmatpush1.xpose.msra.mxu0 0.0
    %1190 = vmatprep.subr.mxu0 0.0
    %1191 = vmatpush1.xpose.msra.mxu0 0.0
    %1192 = vmatprep.subr.mxu0 0.0
    %1193 = vmatpush1.xpose.msra.mxu0 0.0
    %1194 = vmatprep.subr.mxu0 0.0
    %1195 = vmatpush1.xpose.msra.mxu0 0.0
    %1196 = vmatprep.subr.mxu0 0.0
    %1197 = vmatpush1.xpose.msra.mxu0 0.0
    %1198 = vmatprep.subr.mxu0 0.0
    %1199 = vmatpush1.xpose.msra.mxu0 0.0
    %1200 = vmatprep.subr.mxu0 0.0
    %1201 = vmatpush1.xpose.msra.mxu0 0.0
    %1202 = vmatprep.subr.mxu0 0.0
    %1203 = vmatpush1.xpose.msra.mxu0 %v1172
    %1204 = vmatprep.subr.mxu0 0.0
    %1205 = vmatpush1.xpose.msra.mxu0 %v1169
    %1206 = vmatprep.subr.mxu0 0.0
    %1207 = vmatpush2.xpose.msra.mxu0 0.0
    %1208 = vmatprep.subr.mxu0 0.0
    %1209 = vmatpush2.xpose.msra.mxu0 0.0
    %1210 = vmatprep.subr.mxu0 0.0
    %1211 = vmatpush2.xpose.msra.mxu0 0.0
    %1212 = vmatprep.subr.mxu0 0.0
    %1213 = vmatpush2.xpose.msra.mxu0 0.0
    %1214 = vmatprep.subr.mxu0 0.0
    %1215 = vmatpush2.xpose.msra.mxu0 0.0
    %1216 = vmatprep.subr.mxu0 0.0
    %1217 = vmatpush2.xpose.msra.mxu0 0.0
    %1218 = vmatprep.subr.mxu0 0.0
    %1219 = vmatpush2.xpose.msra.mxu0 0.0
    %1220 = vmatprep.subr.mxu0 0.0
    %1221 = vmatpush2.xpose.msra.mxu0 0.0
    %1222 = vmatprep.subr.mxu0 0.0
    %1223 = vmatpush2.xpose.msra.mxu0 0.0
    %1224 = vmatprep.subr.mxu0 0.0
    %1225 = vmatpush2.xpose.msra.mxu0 0.0
    %1226 = vmatprep.subr.mxu0 0.0
    %1227 = vmatpush2.xpose.msra.mxu0 0.0
    %1228 = vmatprep.subr.mxu0 0.0
    %1229 = vmatpush2.xpose.msra.mxu0 0.0
    %1230 = vmatprep.subr.mxu0 0.0
    %1231 = vmatpush2.xpose.msra.mxu0 0.0
    %1232 = vmatprep.subr.mxu0 0.0
    %1233 = vmatpush2.xpose.msra.mxu0 0.0
    %1234 = vmatprep.subr.mxu0 0.0
    %1235 = vmatpush2.xpose.msra.mxu0 0.0
    %1236 = vmatprep.subr.mxu0 0.0
    %1237 = vmatpush2.xpose.msra.mxu0 0.0
    %1238 = vmatprep.mubr.f32.mxu0 0.0
    %1239 = vmatmul.mubr.f32.gmra.mxu0 %v1166
    %v1240 = vpop.f32.mrf.mxu0
    %v1241 = vadd.f32 0.0, %v1240
    %v1242 = vpop.f32.mrf.mxu0
    %1243 = vdwg.mxu0
    %v1244 = vmul.f32 %v1004, 0.35355338
    %v1245 = vmul.f32 %v1083, 0.35355338
    %v1246 = vmul.f32 %v1162, 0.35355338
    %v1247 = vmul.f32 %v1241, 0.35355338
    %v1248 = vadd.f32 %v1244, %v181
    %v1249 = vadd.f32 %v1245, %v181
    %v1250 = vadd.f32 %v1246, %v181
    %v1251 = vadd.f32 %v1247, %v181
    %vm1252 = vcmask 130048
    %v1253 = vsel %vm1252, %v1248, -inf
    %1254 = vmax.xlane.f32.xlu0 %v1253
    %v1255 = vpop.xlane.xlu0 %1254
    %v1256 = vsel %vm1252, %v1249, -inf
    %1257 = vmax.xlane.f32.xlu0 %v1256
    %v1258 = vpop.xlane.xlu0 %1257
    %v1259 = vsel %vm1252, %v1250, -inf
    %1260 = vmax.xlane.f32.xlu0 %v1259
    %v1261 = vpop.xlane.xlu0 %1260
    %v1262 = vsel %vm1252, %v1251, -inf
    %1263 = vmax.xlane.f32.xlu0 %v1262
    %v1264 = vpop.xlane.xlu0 %1263
    %v1265 = vsub.f32 %v1248, %v1255
    %v1266 = vsub.f32 %v1249, %v1258
    %v1267 = vsub.f32 %v1250, %v1261
    %v1268 = vsub.f32 %v1251, %v1264
    %v1269 = vmul.f32 %v1265, 1.442695
    %v1270 = vpow.pop %v1269
    %v1271 = vmul.f32 %v1266, 1.442695
    %v1272 = vpow.pop %v1271
    %v1273 = vmul.f32 %v1267, 1.442695
    %v1274 = vpow.pop %v1273
    %v1275 = vmul.f32 %v1268, 1.442695
    %v1276 = vpow.pop %v1275
    %v1277 = vsel %vm1252, %v1270, 0.0
    %1278 = vadd.xlane.f32.xlu0 %v1277
    %v1279 = vpop.xlane.xlu0 %1278
    %v1280 = vsel %vm1252, %v1272, 0.0
    %1281 = vadd.xlane.f32.xlu0 %v1280
    %v1282 = vpop.xlane.xlu0 %1281
    %v1283 = vsel %vm1252, %v1274, 0.0
    %1284 = vadd.xlane.f32.xlu0 %v1283
    %v1285 = vpop.xlane.xlu0 %1284
    %v1286 = vsel %vm1252, %v1276, 0.0
    %1287 = vadd.xlane.f32.xlu0 %v1286
    %v1288 = vpop.xlane.xlu0 %1287
    %v1289 = vrcp.pop %v1279
    %v1290 = vrcp.pop %v1282
    %v1291 = vrcp.pop %v1285
    %v1292 = vrcp.pop %v1288
    %v1293 = vmul.f32 %v1270, %v1289
    %v1294 = vmul.f32 %v1272, %v1290
    %v1295 = vmul.f32 %v1274, %v1291
    %v1296 = vmul.f32 %v1276, %v1292
    %v1298 = vsel %vm1252, %v1293, 0
    %1300 = vmatprep.subr.mxu0 0.0
    %1301 = vmatpush1.msra.mxu0 0.0
    %1302 = vmatprep.subr.mxu0 0.0
    %1303 = vmatpush1.msra.mxu0 0.0
    %1304 = vmatprep.subr.mxu0 0.0
    %1305 = vmatpush1.msra.mxu0 0.0
    %1306 = vmatprep.subr.mxu0 0.0
    %1307 = vmatpush1.msra.mxu0 0.0
    %1308 = vmatprep.subr.mxu0 0.0
    %1309 = vmatpush1.msra.mxu0 0.0
    %1310 = vmatprep.subr.mxu0 0.0
    %1311 = vmatpush1.msra.mxu0 0.0
    %1312 = vmatprep.subr.mxu0 0.0
    %1313 = vmatpush1.msra.mxu0 0.0
    %1314 = vmatprep.subr.mxu0 0.0
    %1315 = vmatpush1.msra.mxu0 0.0
    %1316 = vmatprep.subr.mxu0 0.0
    %1317 = vmatpush1.msra.mxu0 0.0
    %1318 = vmatprep.subr.mxu0 0.0
    %1319 = vmatpush1.msra.mxu0 0.0
    %1320 = vmatprep.subr.mxu0 0.0
    %1321 = vmatpush1.msra.mxu0 0.0
    %1322 = vmatprep.subr.mxu0 0.0
    %1323 = vmatpush1.msra.mxu0 0.0
    %1324 = vmatprep.subr.mxu0 0.0
    %1325 = vmatpush1.msra.mxu0 0.0
    %1326 = vmatprep.subr.mxu0 0.0
    %1327 = vmatpush1.msra.mxu0 0.0
    %1328 = vmatprep.subr.mxu0 0.0
    %1329 = vmatpush1.msra.mxu0 %v923
    %1330 = vmatprep.subr.mxu0 0.0
    %1331 = vmatpush1.msra.mxu0 %v855
    %1332 = vmatprep.subr.mxu0 0.0
    %1333 = vmatpush2.msra.mxu0 0.0
    %1334 = vmatprep.subr.mxu0 0.0
    %1335 = vmatpush2.msra.mxu0 0.0
    %1336 = vmatprep.subr.mxu0 0.0
    %1337 = vmatpush2.msra.mxu0 0.0
    %1338 = vmatprep.subr.mxu0 0.0
    %1339 = vmatpush2.msra.mxu0 0.0
    %1340 = vmatprep.subr.mxu0 0.0
    %1341 = vmatpush2.msra.mxu0 0.0
    %1342 = vmatprep.subr.mxu0 0.0
    %1343 = vmatpush2.msra.mxu0 0.0
    %1344 = vmatprep.subr.mxu0 0.0
    %1345 = vmatpush2.msra.mxu0 0.0
    %1346 = vmatprep.subr.mxu0 0.0
    %1347 = vmatpush2.msra.mxu0 0.0
    %1348 = vmatprep.subr.mxu0 0.0
    %1349 = vmatpush2.msra.mxu0 0.0
    %1350 = vmatprep.subr.mxu0 0.0
    %1351 = vmatpush2.msra.mxu0 0.0
    %1352 = vmatprep.subr.mxu0 0.0
    %1353 = vmatpush2.msra.mxu0 0.0
    %1354 = vmatprep.subr.mxu0 0.0
    %1355 = vmatpush2.msra.mxu0 0.0
    %1356 = vmatprep.subr.mxu0 0.0
    %1357 = vmatpush2.msra.mxu0 0.0
    %1358 = vmatprep.subr.mxu0 0.0
    %1359 = vmatpush2.msra.mxu0 0.0
    %1360 = vmatprep.subr.mxu0 0.0
    %1361 = vmatpush2.msra.mxu0 0.0
    %1362 = vmatprep.subr.mxu0 0.0
    %1363 = vmatpush2.msra.mxu0 0.0
    %1364 = vmatprep.mubr.f32.mxu0 0.0
    %1365 = vmatmul.mubr.f32.gmra.mxu0 %v1298
    %v1366 = vpop.f32.mrf.mxu0
    %v1367 = vadd.f32 0.0, %v1366
    %v1368 = vpop.f32.mrf.mxu0
    %1369 = vdwg.mxu0
    %v1371 = vsel %vm1252, %v1294, 0
    %1373 = vmatprep.subr.mxu0 0.0
    %1374 = vmatpush1.msra.mxu0 0.0
    %1375 = vmatprep.subr.mxu0 0.0
    %1376 = vmatpush1.msra.mxu0 0.0
    %1377 = vmatprep.subr.mxu0 0.0
    %1378 = vmatpush1.msra.mxu0 0.0
    %1379 = vmatprep.subr.mxu0 0.0
    %1380 = vmatpush1.msra.mxu0 0.0
    %1381 = vmatprep.subr.mxu0 0.0
    %1382 = vmatpush1.msra.mxu0 0.0
    %1383 = vmatprep.subr.mxu0 0.0
    %1384 = vmatpush1.msra.mxu0 0.0
    %1385 = vmatprep.subr.mxu0 0.0
    %1386 = vmatpush1.msra.mxu0 0.0
    %1387 = vmatprep.subr.mxu0 0.0
    %1388 = vmatpush1.msra.mxu0 0.0
    %1389 = vmatprep.subr.mxu0 0.0
    %1390 = vmatpush1.msra.mxu0 0.0
    %1391 = vmatprep.subr.mxu0 0.0
    %1392 = vmatpush1.msra.mxu0 0.0
    %1393 = vmatprep.subr.mxu0 0.0
    %1394 = vmatpush1.msra.mxu0 0.0
    %1395 = vmatprep.subr.mxu0 0.0
    %1396 = vmatpush1.msra.mxu0 0.0
    %1397 = vmatprep.subr.mxu0 0.0
    %1398 = vmatpush1.msra.mxu0 0.0
    %1399 = vmatprep.subr.mxu0 0.0
    %1400 = vmatpush1.msra.mxu0 0.0
    %1401 = vmatprep.subr.mxu0 0.0
    %1402 = vmatpush1.msra.mxu0 %v924
    %1403 = vmatprep.subr.mxu0 0.0
    %1404 = vmatpush1.msra.mxu0 %v856
    %1405 = vmatprep.subr.mxu0 0.0
    %1406 = vmatpush2.msra.mxu0 0.0
    %1407 = vmatprep.subr.mxu0 0.0
    %1408 = vmatpush2.msra.mxu0 0.0
    %1409 = vmatprep.subr.mxu0 0.0
    %1410 = vmatpush2.msra.mxu0 0.0
    %1411 = vmatprep.subr.mxu0 0.0
    %1412 = vmatpush2.msra.mxu0 0.0
    %1413 = vmatprep.subr.mxu0 0.0
    %1414 = vmatpush2.msra.mxu0 0.0
    %1415 = vmatprep.subr.mxu0 0.0
    %1416 = vmatpush2.msra.mxu0 0.0
    %1417 = vmatprep.subr.mxu0 0.0
    %1418 = vmatpush2.msra.mxu0 0.0
    %1419 = vmatprep.subr.mxu0 0.0
    %1420 = vmatpush2.msra.mxu0 0.0
    %1421 = vmatprep.subr.mxu0 0.0
    %1422 = vmatpush2.msra.mxu0 0.0
    %1423 = vmatprep.subr.mxu0 0.0
    %1424 = vmatpush2.msra.mxu0 0.0
    %1425 = vmatprep.subr.mxu0 0.0
    %1426 = vmatpush2.msra.mxu0 0.0
    %1427 = vmatprep.subr.mxu0 0.0
    %1428 = vmatpush2.msra.mxu0 0.0
    %1429 = vmatprep.subr.mxu0 0.0
    %1430 = vmatpush2.msra.mxu0 0.0
    %1431 = vmatprep.subr.mxu0 0.0
    %1432 = vmatpush2.msra.mxu0 0.0
    %1433 = vmatprep.subr.mxu0 0.0
    %1434 = vmatpush2.msra.mxu0 0.0
    %1435 = vmatprep.subr.mxu0 0.0
    %1436 = vmatpush2.msra.mxu0 0.0
    %1437 = vmatprep.mubr.f32.mxu0 0.0
    %1438 = vmatmul.mubr.f32.gmra.mxu0 %v1371
    %v1439 = vpop.f32.mrf.mxu0
    %v1440 = vadd.f32 0.0, %v1439
    %v1441 = vpop.f32.mrf.mxu0
    %1442 = vdwg.mxu0
    %v1444 = vsel %vm1252, %v1295, 0
    %1446 = vmatprep.subr.mxu0 0.0
    %1447 = vmatpush1.msra.mxu0 0.0
    %1448 = vmatprep.subr.mxu0 0.0
    %1449 = vmatpush1.msra.mxu0 0.0
    %1450 = vmatprep.subr.mxu0 0.0
    %1451 = vmatpush1.msra.mxu0 0.0
    %1452 = vmatprep.subr.mxu0 0.0
    %1453 = vmatpush1.msra.mxu0 0.0
    %1454 = vmatprep.subr.mxu0 0.0
    %1455 = vmatpush1.msra.mxu0 0.0
    %1456 = vmatprep.subr.mxu0 0.0
    %1457 = vmatpush1.msra.mxu0 0.0
    %1458 = vmatprep.subr.mxu0 0.0
    %1459 = vmatpush1.msra.mxu0 0.0
    %1460 = vmatprep.subr.mxu0 0.0
    %1461 = vmatpush1.msra.mxu0 0.0
    %1462 = vmatprep.subr.mxu0 0.0
    %1463 = vmatpush1.msra.mxu0 0.0
    %1464 = vmatprep.subr.mxu0 0.0
    %1465 = vmatpush1.msra.mxu0 0.0
    %1466 = vmatprep.subr.mxu0 0.0
    %1467 = vmatpush1.msra.mxu0 0.0
    %1468 = vmatprep.subr.mxu0 0.0
    %1469 = vmatpush1.msra.mxu0 0.0
    %1470 = vmatprep.subr.mxu0 0.0
    %1471 = vmatpush1.msra.mxu0 0.0
    %1472 = vmatprep.subr.mxu0 0.0
    %1473 = vmatpush1.msra.mxu0 0.0
    %1474 = vmatprep.subr.mxu0 0.0
    %1475 = vmatpush1.msra.mxu0 %v925
    %1476 = vmatprep.subr.mxu0 0.0
    %1477 = vmatpush1.msra.mxu0 %v857
    %1478 = vmatprep.subr.mxu0 0.0
    %1479 = vmatpush2.msra.mxu0 0.0
    %1480 = vmatprep.subr.mxu0 0.0
    %1481 = vmatpush2.msra.mxu0 0.0
    %1482 = vmatprep.subr.mxu0 0.0
    %1483 = vmatpush2.msra.mxu0 0.0
    %1484 = vmatprep.subr.mxu0 0.0
    %1485 = vmatpush2.msra.mxu0 0.0
    %1486 = vmatprep.subr.mxu0 0.0
    %1487 = vmatpush2.msra.mxu0 0.0
    %1488 = vmatprep.subr.mxu0 0.0
    %1489 = vmatpush2.msra.mxu0 0.0
    %1490 = vmatprep.subr.mxu0 0.0
    %1491 = vmatpush2.msra.mxu0 0.0
    %1492 = vmatprep.subr.mxu0 0.0
    %1493 = vmatpush2.msra.mxu0 0.0
    %1494 = vmatprep.subr.mxu0 0.0
    %1495 = vmatpush2.msra.mxu0 0.0
    %1496 = vmatprep.subr.mxu0 0.0
    %1497 = vmatpush2.msra.mxu0 0.0
    %1498 = vmatprep.subr.mxu0 0.0
    %1499 = vmatpush2.msra.mxu0 0.0
    %1500 = vmatprep.subr.mxu0 0.0
    %1501 = vmatpush2.msra.mxu0 0.0
    %1502 = vmatprep.subr.mxu0 0.0
    %1503 = vmatpush2.msra.mxu0 0.0
    %1504 = vmatprep.subr.mxu0 0.0
    %1505 = vmatpush2.msra.mxu0 0.0
    %1506 = vmatprep.subr.mxu0 0.0
    %1507 = vmatpush2.msra.mxu0 0.0
    %1508 = vmatprep.subr.mxu0 0.0
    %1509 = vmatpush2.msra.mxu0 0.0
    %1510 = vmatprep.mubr.f32.mxu0 0.0
    %1511 = vmatmul.mubr.f32.gmra.mxu0 %v1444
    %v1512 = vpop.f32.mrf.mxu0
    %v1513 = vadd.f32 0.0, %v1512
    %v1514 = vpop.f32.mrf.mxu0
    %1515 = vdwg.mxu0
    %v1517 = vsel %vm1252, %v1296, 0
    %1519 = vmatprep.subr.mxu0 0.0
    %1520 = vmatpush1.msra.mxu0 0.0
    %1521 = vmatprep.subr.mxu0 0.0
    %1522 = vmatpush1.msra.mxu0 0.0
    %1523 = vmatprep.subr.mxu0 0.0
    %1524 = vmatpush1.msra.mxu0 0.0
    %1525 = vmatprep.subr.mxu0 0.0
    %1526 = vmatpush1.msra.mxu0 0.0
    %1527 = vmatprep.subr.mxu0 0.0
    %1528 = vmatpush1.msra.mxu0 0.0
    %1529 = vmatprep.subr.mxu0 0.0
    %1530 = vmatpush1.msra.mxu0 0.0
    %1531 = vmatprep.subr.mxu0 0.0
    %1532 = vmatpush1.msra.mxu0 0.0
    %1533 = vmatprep.subr.mxu0 0.0
    %1534 = vmatpush1.msra.mxu0 0.0
    %1535 = vmatprep.subr.mxu0 0.0
    %1536 = vmatpush1.msra.mxu0 0.0
    %1537 = vmatprep.subr.mxu0 0.0
    %1538 = vmatpush1.msra.mxu0 0.0
    %1539 = vmatprep.subr.mxu0 0.0
    %1540 = vmatpush1.msra.mxu0 0.0
    %1541 = vmatprep.subr.mxu0 0.0
    %1542 = vmatpush1.msra.mxu0 0.0
    %1543 = vmatprep.subr.mxu0 0.0
    %1544 = vmatpush1.msra.mxu0 0.0
    %1545 = vmatprep.subr.mxu0 0.0
    %1546 = vmatpush1.msra.mxu0 0.0
    %1547 = vmatprep.subr.mxu0 0.0
    %1548 = vmatpush1.msra.mxu0 %v926
    %1549 = vmatprep.subr.mxu0 0.0
    %1550 = vmatpush1.msra.mxu0 %v858
    %1551 = vmatprep.subr.mxu0 0.0
    %1552 = vmatpush2.msra.mxu0 0.0
    %1553 = vmatprep.subr.mxu0 0.0
    %1554 = vmatpush2.msra.mxu0 0.0
    %1555 = vmatprep.subr.mxu0 0.0
    %1556 = vmatpush2.msra.mxu0 0.0
    %1557 = vmatprep.subr.mxu0 0.0
    %1558 = vmatpush2.msra.mxu0 0.0
    %1559 = vmatprep.subr.mxu0 0.0
    %1560 = vmatpush2.msra.mxu0 0.0
    %1561 = vmatprep.subr.mxu0 0.0
    %1562 = vmatpush2.msra.mxu0 0.0
    %1563 = vmatprep.subr.mxu0 0.0
    %1564 = vmatpush2.msra.mxu0 0.0
    %1565 = vmatprep.subr.mxu0 0.0
    %1566 = vmatpush2.msra.mxu0 0.0
    %1567 = vmatprep.subr.mxu0 0.0
    %1568 = vmatpush2.msra.mxu0 0.0
    %1569 = vmatprep.subr.mxu0 0.0
    %1570 = vmatpush2.msra.mxu0 0.0
    %1571 = vmatprep.subr.mxu0 0.0
    %1572 = vmatpush2.msra.mxu0 0.0
    %1573 = vmatprep.subr.mxu0 0.0
    %1574 = vmatpush2.msra.mxu0 0.0
    %1575 = vmatprep.subr.mxu0 0.0
    %1576 = vmatpush2.msra.mxu0 0.0
    %1577 = vmatprep.subr.mxu0 0.0
    %1578 = vmatpush2.msra.mxu0 0.0
    %1579 = vmatprep.subr.mxu0 0.0
    %1580 = vmatpush2.msra.mxu0 0.0
    %1581 = vmatprep.subr.mxu0 0.0
    %1582 = vmatpush2.msra.mxu0 0.0
    %1583 = vmatprep.mubr.f32.mxu0 0.0
    %1584 = vmatmul.mubr.f32.gmra.mxu0 %v1517
    %v1585 = vpop.f32.mrf.mxu0
    %v1586 = vadd.f32 0.0, %v1585
    %v1587 = vpop.f32.mrf.mxu0
    %1588 = vdwg.mxu0
    %v1589 = vcombine.low %v1367, %v1513
    %v1590 = vcombine.high %v1367, %v1513
    %v1592 = vunpack.c.l.s4 1983009808
    %v1593 = vunpack.c.0.s8 %v1592
    %v1594 = vlaneseq
    %v1595 = vshrl.u32 %v1594, 7
    %v1596 = vsub.s32 %v1593, %v1595
    %v1597 = vrot.slane %v1589, %v1596
    %v1599 = vunpack.c.l.s4 1983009808
    %v1600 = vunpack.c.0.s8 %v1599
    %v1601 = vlaneseq
    %v1602 = vshrl.u32 %v1601, 7
    %v1603 = vsub.s32 %v1600, %v1602
    %v1604 = vrot.slane %v1590, %v1603
    %v1605 = vcombine.low %v1440, %v1586
    %v1606 = vcombine.high %v1440, %v1586
    %v1608 = vunpack.c.l.s4 1983009808
    %v1609 = vunpack.c.0.s8 %v1608
    %v1610 = vlaneseq
    %v1611 = vshrl.u32 %v1610, 7
    %v1612 = vsub.s32 %v1609, %v1611
    %v1613 = vrot.slane %v1605, %v1612
    %v1615 = vunpack.c.l.s4 1983009808
    %v1616 = vunpack.c.0.s8 %v1615
    %v1617 = vlaneseq
    %v1618 = vshrl.u32 %v1617, 7
    %v1619 = vsub.s32 %v1616, %v1618
    %v1620 = vrot.slane %v1606, %v1619
    %v1621 = vcombine.low %v1597, %v1613
    %v1622 = vcombine.high %v1597, %v1613
    %v1624 = vunpack.c.l.s4 1934713408
    %v1625 = vunpack.c.0.s8 %v1624
    %v1626 = vlaneseq
    %v1627 = vshrl.u32 %v1626, 7
    %v1628 = vsub.s32 %v1625, %v1627
    %v1629 = vrot.slane %v1621, %v1628
    %v1631 = vunpack.c.l.s4 1934713408
    %v1632 = vunpack.c.0.s8 %v1631
    %v1633 = vlaneseq
    %v1634 = vshrl.u32 %v1633, 7
    %v1635 = vsub.s32 %v1632, %v1634
    %v1636 = vrot.slane %v1622, %v1635
    %v1637 = vcombine.low %v1604, %v1620
    %v1638 = vcombine.high %v1604, %v1620
    %v1640 = vunpack.c.l.s4 1934713408
    %v1641 = vunpack.c.0.s8 %v1640
    %v1642 = vlaneseq
    %v1643 = vshrl.u32 %v1642, 7
    %v1644 = vsub.s32 %v1641, %v1643
    %v1645 = vrot.slane %v1637, %v1644
    %v1647 = vunpack.c.l.s4 1934713408
    %v1648 = vunpack.c.0.s8 %v1647
    %v1649 = vlaneseq
    %v1650 = vshrl.u32 %v1649, 7
    %v1651 = vsub.s32 %v1648, %v1650
    %v1652 = vrot.slane %v1638, %v1651
    %v1653 = vcombine.high %v1629, 0.0
    %v1654 = vcombine.high %v1636, 0.0
    %v1655 = vcombine.high %v1645, 0.0
    %v1656 = vcombine.high %v1652, 0.0
    %v1657 = vcombine.low %v1629, %v1636
    %v1659 = vunpack.c.l.s4 1983009808
    %v1660 = vunpack.c.0.s8 %v1659
    %v1661 = vlaneseq
    %v1662 = vshrl.u32 %v1661, 7
    %v1663 = vsub.s32 %v1660, %v1662
    %v1664 = vrot.slane %v1657, %v1663
    %v1665 = vcombine.low %v1653, %v1654
    %v1667 = vunpack.c.l.s4 1983009808
    %v1668 = vunpack.c.0.s8 %v1667
    %v1669 = vlaneseq
    %v1670 = vshrl.u32 %v1669, 7
    %v1671 = vsub.s32 %v1668, %v1670
    %v1672 = vrot.slane %v1665, %v1671
    %v1673 = vcombine.low %v1645, %v1652
    %v1675 = vunpack.c.l.s4 1983009808
    %v1676 = vunpack.c.0.s8 %v1675
    %v1677 = vlaneseq
    %v1678 = vshrl.u32 %v1677, 7
    %v1679 = vsub.s32 %v1676, %v1678
    %v1680 = vrot.slane %v1673, %v1679
    %v1681 = vcombine.low %v1655, %v1656
    %v1683 = vunpack.c.l.s4 1983009808
    %v1684 = vunpack.c.0.s8 %v1683
    %v1685 = vlaneseq
    %v1686 = vshrl.u32 %v1685, 7
    %v1687 = vsub.s32 %v1684, %v1686
    %v1688 = vrot.slane %v1681, %v1687
    %v1689 = vcombine.low %v1664, %v1672
    %v1690 = vcombine.high %v1664, %v1672
    %v1692 = vunpack.c.l.s4 1934713408
    %v1693 = vunpack.c.0.s8 %v1692
    %v1694 = vlaneseq
    %v1695 = vshrl.u32 %v1694, 7
    %v1696 = vsub.s32 %v1693, %v1695
    %v1697 = vrot.slane %v1689, %v1696
    %v1699 = vunpack.c.l.s4 1934713408
    %v1700 = vunpack.c.0.s8 %v1699
    %v1701 = vlaneseq
    %v1702 = vshrl.u32 %v1701, 7
    %v1703 = vsub.s32 %v1700, %v1702
    %v1704 = vrot.slane %v1690, %v1703
    %v1705 = vcombine.low %v1680, %v1688
    %v1706 = vcombine.high %v1680, %v1688
    %v1708 = vunpack.c.l.s4 1934713408
    %v1709 = vunpack.c.0.s8 %v1708
    %v1710 = vlaneseq
    %v1711 = vshrl.u32 %v1710, 7
    %v1712 = vsub.s32 %v1709, %v1711
    %v1713 = vrot.slane %v1705, %v1712
    %v1715 = vunpack.c.l.s4 1934713408
    %v1716 = vunpack.c.0.s8 %v1715
    %v1717 = vlaneseq
    %v1718 = vshrl.u32 %v1717, 7
    %v1719 = vsub.s32 %v1716, %v1718
    %v1720 = vrot.slane %v1706, %v1719
    %v1721 = vcombine.low %v1697, %v1713
    %v1722 = vcombine.high %v1697, %v1713
    %v1723 = vcombine.low %v1704, %v1720
    %v1724 = vcombine.high %v1704, %v1720
    %1726 = vrot.lane.b32.xlu0 %v1722, 8
    %v1727 = vpop.permute.xlu0 %1726
    %1730 = vrot.lane.b32.xlu0 %v1723, 16
    %v1731 = vpop.permute.xlu0 %1730
    %1734 = vrot.lane.b32.xlu0 %v1724, 24
    %v1735 = vpop.permute.xlu0 %1734
    %v1737 = vsel %vm927, %v1721, %v1727
    %v1738 = vsel %vm1252, %v1737, %v1731
    %vm1739 = vcmask 195584
    %v1740 = vsel %vm1739, %v1738, %v1735
    %v1742 = vlaneseq
    %v1743 = vshrl.u32 %v1742, 7
    %v1744 = vsub.s32 0, %v1743
    %v1745 = vrot.slane %v69, %v1744
    %v1748 = vsel %vm80, %v1740, 0
    %1750 = vmatprep.subr.mxu0 0.0
    %1751 = vmatpush1.msra.mxu0 0.0
    %1752 = vmatprep.subr.mxu0 0.0
    %1753 = vmatpush1.msra.mxu0 0.0
    %1754 = vmatprep.subr.mxu0 0.0
    %1755 = vmatpush1.msra.mxu0 0.0
    %1756 = vmatprep.subr.mxu0 0.0
    %1757 = vmatpush1.msra.mxu0 0.0
    %1758 = vmatprep.subr.mxu0 0.0
    %1759 = vmatpush1.msra.mxu0 0.0
    %1760 = vmatprep.subr.mxu0 0.0
    %1761 = vmatpush1.msra.mxu0 0.0
    %1762 = vmatprep.subr.mxu0 0.0
    %1763 = vmatpush1.msra.mxu0 0.0
    %1764 = vmatprep.subr.mxu0 0.0
    %1765 = vmatpush1.msra.mxu0 0.0
    %1766 = vmatprep.subr.mxu0 0.0
    %1767 = vmatpush1.msra.mxu0 0.0
    %1768 = vmatprep.subr.mxu0 0.0
    %1769 = vmatpush1.msra.mxu0 0.0
    %1770 = vmatprep.subr.mxu0 0.0
    %1771 = vmatpush1.msra.mxu0 0.0
    %1772 = vmatprep.subr.mxu0 0.0
    %1773 = vmatpush1.msra.mxu0 0.0
    %1774 = vmatprep.subr.mxu0 0.0
    %1775 = vmatpush1.msra.mxu0 %v68
    %1776 = vmatprep.subr.mxu0 0.0
    %1777 = vmatpush1.msra.mxu0 %v67
    %1778 = vmatprep.subr.mxu0 0.0
    %1779 = vmatpush1.msra.mxu0 %v66
    %1780 = vmatprep.subr.mxu0 0.0
    %1781 = vmatpush1.msra.mxu0 %v65
    %1782 = vmatprep.subr.mxu0 0.0
    %1783 = vmatpush2.msra.mxu0 0.0
    %1784 = vmatprep.subr.mxu0 0.0
    %1785 = vmatpush2.msra.mxu0 0.0
    %1786 = vmatprep.subr.mxu0 0.0
    %1787 = vmatpush2.msra.mxu0 0.0
    %1788 = vmatprep.subr.mxu0 0.0
    %1789 = vmatpush2.msra.mxu0 0.0
    %1790 = vmatprep.subr.mxu0 0.0
    %1791 = vmatpush2.msra.mxu0 0.0
    %1792 = vmatprep.subr.mxu0 0.0
    %1793 = vmatpush2.msra.mxu0 0.0
    %1794 = vmatprep.subr.mxu0 0.0
    %1795 = vmatpush2.msra.mxu0 0.0
    %1796 = vmatprep.subr.mxu0 0.0
    %1797 = vmatpush2.msra.mxu0 0.0
    %1798 = vmatprep.subr.mxu0 0.0
    %1799 = vmatpush2.msra.mxu0 0.0
    %1800 = vmatprep.subr.mxu0 0.0
    %1801 = vmatpush2.msra.mxu0 0.0
    %1802 = vmatprep.subr.mxu0 0.0
    %1803 = vmatpush2.msra.mxu0 0.0
    %1804 = vmatprep.subr.mxu0 0.0
    %1805 = vmatpush2.msra.mxu0 0.0
    %1806 = vmatprep.subr.mxu0 0.0
    %1807 = vmatpush2.msra.mxu0 0.0
    %1808 = vmatprep.subr.mxu0 0.0
    %1809 = vmatpush2.msra.mxu0 0.0
    %1810 = vmatprep.subr.mxu0 0.0
    %1811 = vmatpush2.msra.mxu0 0.0
    %1812 = vmatprep.subr.mxu0 0.0
    %1813 = vmatpush2.msra.mxu0 0.0
    %1814 = vmatprep.mubr.f32.mxu0 0.0
    %1815 = vmatmul.mubr.f32.gmra.mxu0 %v1748
    %v1816 = vpop.f32.mrf.mxu0
    %v1817 = vadd.f32 %v1745, %v1816
    %v1818 = vpop.f32.mrf.mxu0
    %1819 = vdwg.mxu0
    %v1820 = vsel %vm80, %v1817, 0.0
    %1821 = vadd.xlane.f32.xlu0 %v1820
    %v1822 = vpop.xlane.xlu0 %1821
    %v1823 = vrcp.pop 32.0
    %v1824 = vmul.f32 %v1822, %v1823
    %v1825 = vsub.f32 %v1817, %v1824
    %v1826 = vmul.f32 %v1825, %v1825
    %v1827 = vsel %vm80, %v1826, 0.0
    %1828 = vadd.xlane.f32.xlu0 %v1827
    %v1829 = vpop.xlane.xlu0 %1828
    %v1830 = vmul.f32 %v1829, %v1823
    %v1831 = vadd.f32 %v1830, 1e-05
    %v1832 = vrsqrt.pop %v1831
    %v1833 = vmul.f32 %v1825, %v1832
    %v1835 = vlaneseq
    %v1836 = vshrl.u32 %v1835, 7
    %v1837 = vsub.s32 0, %v1836
    %v1838 = vrot.slane %v70, %v1837
    %v1840 = vmul.f32 %v1833, %v1838
    %v1842 = vlaneseq
    %v1843 = vshrl.u32 %v1842, 7
    %v1844 = vsub.s32 0, %v1843
    %v1845 = vrot.slane %v71, %v1844
    %v1847 = vadd.f32 %v1840, %v1845
    %1848 = vst.msk [vmem:[#allocation8] sm:$0xff] %vm80, %v1847
    %1850 = vrot.lane.b32.xlu0 %v170, 120
    %v1851 = vpop.permute.xlu0 %1850
    %1853 = vrot.lane.b32.xlu0 %v170, 112
    %v1854 = vpop.permute.xlu0 %1853
    %1856 = vrot.lane.b32.xlu0 %v170, 104
    %v1857 = vpop.permute.xlu0 %1856
    %v1859 = vcombine.low %v170, %v1854
    %v1860 = vcombine.high %v170, %v1854
    %v1862 = vunpack.c.l.s4 1983009808
    %v1863 = vunpack.c.0.s8 %v1862
    %v1864 = vlaneseq
    %v1865 = vshrl.u32 %v1864, 7
    %v1866 = vsub.s32 %v1863, %v1865
    %v1867 = vrot.slane %v1859, %v1866
    %v1869 = vunpack.c.l.s4 1983009808
    %v1870 = vunpack.c.0.s8 %v1869
    %v1871 = vlaneseq
    %v1872 = vshrl.u32 %v1871, 7
    %v1873 = vsub.s32 %v1870, %v1872
    %v1874 = vrot.slane %v1860, %v1873
    %v1875 = vcombine.low %v1851, %v1857
    %v1876 = vcombine.high %v1851, %v1857
    %v1878 = vunpack.c.l.s4 1983009808
    %v1879 = vunpack.c.0.s8 %v1878
    %v1880 = vlaneseq
    %v1881 = vshrl.u32 %v1880, 7
    %v1882 = vsub.s32 %v1879, %v1881
    %v1883 = vrot.slane %v1875, %v1882
    %v1885 = vunpack.c.l.s4 1983009808
    %v1886 = vunpack.c.0.s8 %v1885
    %v1887 = vlaneseq
    %v1888 = vshrl.u32 %v1887, 7
    %v1889 = vsub.s32 %v1886, %v1888
    %v1890 = vrot.slane %v1876, %v1889
    %v1891 = vcombine.low %v1867, %v1883
    %v1892 = vcombine.high %v1867, %v1883
    %v1894 = vunpack.c.l.s4 1934713408
    %v1895 = vunpack.c.0.s8 %v1894
    %v1896 = vlaneseq
    %v1897 = vshrl.u32 %v1896, 7
    %v1898 = vsub.s32 %v1895, %v1897
    %v1899 = vrot.slane %v1891, %v1898
    %v1901 = vunpack.c.l.s4 1934713408
    %v1902 = vunpack.c.0.s8 %v1901
    %v1903 = vlaneseq
    %v1904 = vshrl.u32 %v1903, 7
    %v1905 = vsub.s32 %v1902, %v1904
    %v1906 = vrot.slane %v1892, %v1905
    %v1907 = vcombine.low %v1874, %v1890
    %v1908 = vcombine.high %v1874, %v1890
    %v1910 = vunpack.c.l.s4 1934713408
    %v1911 = vunpack.c.0.s8 %v1910
    %v1912 = vlaneseq
    %v1913 = vshrl.u32 %v1912, 7
    %v1914 = vsub.s32 %v1911, %v1913
    %v1915 = vrot.slane %v1907, %v1914
    %v1917 = vunpack.c.l.s4 1934713408
    %v1918 = vunpack.c.0.s8 %v1917
    %v1919 = vlaneseq
    %v1920 = vshrl.u32 %v1919, 7
    %v1921 = vsub.s32 %v1918, %v1920
    %v1922 = vrot.slane %v1908, %v1921
    %v1923 = vcombine.high %v1899, 0.0
    %v1924 = vcombine.high %v1906, 0.0
    %v1925 = vcombine.high %v1915, 0.0
    %v1926 = vcombine.high %v1922, 0.0
    %v1927 = vcombine.low %v1899, %v1906
    %v1929 = vunpack.c.l.s4 1983009808
    %v1930 = vunpack.c.0.s8 %v1929
    %v1931 = vlaneseq
    %v1932 = vshrl.u32 %v1931, 7
    %v1933 = vsub.s32 %v1930, %v1932
    %v1934 = vrot.slane %v1927, %v1933
    %v1935 = vcombine.low %v1923, %v1924
    %v1937 = vunpack.c.l.s4 1983009808
    %v1938 = vunpack.c.0.s8 %v1937
    %v1939 = vlaneseq
    %v1940 = vshrl.u32 %v1939, 7
    %v1941 = vsub.s32 %v1938, %v1940
    %v1942 = vrot.slane %v1935, %v1941
    %v1943 = vcombine.low %v1915, %v1922
    %v1945 = vunpack.c.l.s4 1983009808
    %v1946 = vunpack.c.0.s8 %v1945
    %v1947 = vlaneseq
    %v1948 = vshrl.u32 %v1947, 7
    %v1949 = vsub.s32 %v1946, %v1948
    %v1950 = vrot.slane %v1943, %v1949
    %v1951 = vcombine.low %v1925, %v1926
    %v1953 = vunpack.c.l.s4 1983009808
    %v1954 = vunpack.c.0.s8 %v1953
    %v1955 = vlaneseq
    %v1956 = vshrl.u32 %v1955, 7
    %v1957 = vsub.s32 %v1954, %v1956
    %v1958 = vrot.slane %v1951, %v1957
    %v1959 = vcombine.low %v1934, %v1942
    %v1960 = vcombine.high %v1934, %v1942
    %v1962 = vunpack.c.l.s4 1934713408
    %v1963 = vunpack.c.0.s8 %v1962
    %v1964 = vlaneseq
    %v1965 = vshrl.u32 %v1964, 7
    %v1966 = vsub.s32 %v1963, %v1965
    %v1967 = vrot.slane %v1959, %v1966
    %v1969 = vunpack.c.l.s4 1934713408
    %v1970 = vunpack.c.0.s8 %v1969
    %v1971 = vlaneseq
    %v1972 = vshrl.u32 %v1971, 7
    %v1973 = vsub.s32 %v1970, %v1972
    %v1974 = vrot.slane %v1960, %v1973
    %v1975 = vcombine.low %v1950, %v1958
    %v1976 = vcombine.high %v1950, %v1958
    %v1978 = vunpack.c.l.s4 1934713408
    %v1979 = vunpack.c.0.s8 %v1978
    %v1980 = vlaneseq
    %v1981 = vshrl.u32 %v1980, 7
    %v1982 = vsub.s32 %v1979, %v1981
    %v1983 = vrot.slane %v1975, %v1982
    %v1985 = vunpack.c.l.s4 1934713408
    %v1986 = vunpack.c.0.s8 %v1985
    %v1987 = vlaneseq
    %v1988 = vshrl.u32 %v1987, 7
    %v1989 = vsub.s32 %v1986, %v1988
    %v1990 = vrot.slane %v1976, %v1989
    %v1991 = vcombine.low %v1967, %v1983
    %v1992 = vcombine.high %v1967, %v1983
    %v1993 = vcombine.low %v1974, %v1990
    %v1994 = vcombine.high %v1974, %v1990
    %1996 = vrot.lane.b32.xlu0 %v175, 120
    %v1997 = vpop.permute.xlu0 %1996
    %1998 = vrot.lane.b32.xlu0 %v175, 112
    %v1999 = vpop.permute.xlu0 %1998
    %2000 = vrot.lane.b32.xlu0 %v175, 104
    %v2001 = vpop.permute.xlu0 %2000
    %2002 = vrot.lane.b32.xlu0 %v170, 96
    %v2003 = vpop.permute.xlu0 %2002
    %2004 = vrot.lane.b32.xlu0 %v175, 96
    %v2005 = vpop.permute.xlu0 %2004
    %2006 = vrot.lane.b32.xlu0 %v1851, 96
    %v2007 = vpop.permute.xlu0 %2006
    %2008 = vrot.lane.b32.xlu0 %v1997, 96
    %v2009 = vpop.permute.xlu0 %2008
    %2010 = vrot.lane.b32.xlu0 %v1854, 96
    %v2011 = vpop.permute.xlu0 %2010
    %2012 = vrot.lane.b32.xlu0 %v1999, 96
    %v2013 = vpop.permute.xlu0 %2012
    %2014 = vrot.lane.b32.xlu0 %v1857, 96
    %v2015 = vpop.permute.xlu0 %2014
    %2016 = vrot.lane.b32.xlu0 %v2001, 96
    %v2017 = vpop.permute.xlu0 %2016
    %v2026 = vcombine.low %v2003, %v2011
    %v2027 = vcombine.high %v2003, %v2011
    %v2029 = vunpack.c.l.s4 1983009808
    %v2030 = vunpack.c.0.s8 %v2029
    %v2031 = vlaneseq
    %v2032 = vshrl.u32 %v2031, 7
    %v2033 = vsub.s32 %v2030, %v2032
    %v2034 = vrot.slane %v2026, %v2033
    %v2036 = vunpack.c.l.s4 1983009808
    %v2037 = vunpack.c.0.s8 %v2036
    %v2038 = vlaneseq
    %v2039 = vshrl.u32 %v2038, 7
    %v2040 = vsub.s32 %v2037, %v2039
    %v2041 = vrot.slane %v2027, %v2040
    %v2042 = vcombine.low %v2007, %v2015
    %v2043 = vcombine.high %v2007, %v2015
    %v2045 = vunpack.c.l.s4 1983009808
    %v2046 = vunpack.c.0.s8 %v2045
    %v2047 = vlaneseq
    %v2048 = vshrl.u32 %v2047, 7
    %v2049 = vsub.s32 %v2046, %v2048
    %v2050 = vrot.slane %v2042, %v2049
    %v2052 = vunpack.c.l.s4 1983009808
    %v2053 = vunpack.c.0.s8 %v2052
    %v2054 = vlaneseq
    %v2055 = vshrl.u32 %v2054, 7
    %v2056 = vsub.s32 %v2053, %v2055
    %v2057 = vrot.slane %v2043, %v2056
    %v2058 = vcombine.low %v2034, %v2050
    %v2059 = vcombine.high %v2034, %v2050
    %v2061 = vunpack.c.l.s4 1934713408
    %v2062 = vunpack.c.0.s8 %v2061
    %v2063 = vlaneseq
    %v2064 = vshrl.u32 %v2063, 7
    %v2065 = vsub.s32 %v2062, %v2064
    %v2066 = vrot.slane %v2058, %v2065
    %v2068 = vunpack.c.l.s4 1934713408
    %v2069 = vunpack.c.0.s8 %v2068
    %v2070 = vlaneseq
    %v2071 = vshrl.u32 %v2070, 7
    %v2072 = vsub.s32 %v2069, %v2071
    %v2073 = vrot.slane %v2059, %v2072
    %v2074 = vcombine.low %v2041, %v2057
    %v2075 = vcombine.high %v2041, %v2057
    %v2077 = vunpack.c.l.s4 1934713408
    %v2078 = vunpack.c.0.s8 %v2077
    %v2079 = vlaneseq
    %v2080 = vshrl.u32 %v2079, 7
    %v2081 = vsub.s32 %v2078, %v2080
    %v2082 = vrot.slane %v2074, %v2081
    %v2084 = vunpack.c.l.s4 1934713408
    %v2085 = vunpack.c.0.s8 %v2084
    %v2086 = vlaneseq
    %v2087 = vshrl.u32 %v2086, 7
    %v2088 = vsub.s32 %v2085, %v2087
    %v2089 = vrot.slane %v2075, %v2088
    %v2090 = vcombine.high %v2066, 0.0
    %v2091 = vcombine.high %v2073, 0.0
    %v2092 = vcombine.high %v2082, 0.0
    %v2093 = vcombine.high %v2089, 0.0
    %v2094 = vcombine.low %v2005, %v2013
    %v2095 = vcombine.high %v2005, %v2013
    %v2097 = vunpack.c.l.s4 1983009808
    %v2098 = vunpack.c.0.s8 %v2097
    %v2099 = vlaneseq
    %v2100 = vshrl.u32 %v2099, 7
    %v2101 = vsub.s32 %v2098, %v2100
    %v2102 = vrot.slane %v2094, %v2101
    %v2104 = vunpack.c.l.s4 1983009808
    %v2105 = vunpack.c.0.s8 %v2104
    %v2106 = vlaneseq
    %v2107 = vshrl.u32 %v2106, 7
    %v2108 = vsub.s32 %v2105, %v2107
    %v2109 = vrot.slane %v2095, %v2108
    %v2110 = vcombine.low %v2009, %v2017
    %v2111 = vcombine.high %v2009, %v2017
    %v2113 = vunpack.c.l.s4 1983009808
    %v2114 = vunpack.c.0.s8 %v2113
    %v2115 = vlaneseq
    %v2116 = vshrl.u32 %v2115, 7
    %v2117 = vsub.s32 %v2114, %v2116
    %v2118 = vrot.slane %v2110, %v2117
    %v2120 = vunpack.c.l.s4 1983009808
    %v2121 = vunpack.c.0.s8 %v2120
    %v2122 = vlaneseq
    %v2123 = vshrl.u32 %v2122, 7
    %v2124 = vsub.s32 %v2121, %v2123
    %v2125 = vrot.slane %v2111, %v2124
    %v2126 = vcombine.low %v2102, %v2118
    %v2127 = vcombine.high %v2102, %v2118
    %v2129 = vunpack.c.l.s4 1934713408
    %v2130 = vunpack.c.0.s8 %v2129
    %v2131 = vlaneseq
    %v2132 = vshrl.u32 %v2131, 7
    %v2133 = vsub.s32 %v2130, %v2132
    %v2134 = vrot.slane %v2126, %v2133
    %v2136 = vunpack.c.l.s4 1934713408
    %v2137 = vunpack.c.0.s8 %v2136
    %v2138 = vlaneseq
    %v2139 = vshrl.u32 %v2138, 7
    %v2140 = vsub.s32 %v2137, %v2139
    %v2141 = vrot.slane %v2127, %v2140
    %v2142 = vcombine.low %v2109, %v2125
    %v2143 = vcombine.high %v2109, %v2125
    %v2145 = vunpack.c.l.s4 1934713408
    %v2146 = vunpack.c.0.s8 %v2145
    %v2147 = vlaneseq
    %v2148 = vshrl.u32 %v2147, 7
    %v2149 = vsub.s32 %v2146, %v2148
    %v2150 = vrot.slane %v2142, %v2149
    %v2152 = vunpack.c.l.s4 1934713408
    %v2153 = vunpack.c.0.s8 %v2152
    %v2154 = vlaneseq
    %v2155 = vshrl.u32 %v2154, 7
    %v2156 = vsub.s32 %v2153, %v2155
    %v2157 = vrot.slane %v2143, %v2156
    %v2158 = vcombine.high %v2134, 0.0
    %v2159 = vcombine.high %v2141, 0.0
    %v2160 = vcombine.high %v2150, 0.0
    %v2161 = vcombine.high %v2157, 0.0
    %v2162 = vcombine.low %v2066, %v2073
    %v2164 = vunpack.c.l.s4 1983009808
    %v2165 = vunpack.c.0.s8 %v2164
    %v2166 = vlaneseq
    %v2167 = vshrl.u32 %v2166, 7
    %v2168 = vsub.s32 %v2165, %v2167
    %v2169 = vrot.slane %v2162, %v2168
    %v2170 = vcombine.low %v2090, %v2091
    %v2172 = vunpack.c.l.s4 1983009808
    %v2173 = vunpack.c.0.s8 %v2172
    %v2174 = vlaneseq
    %v2175 = vshrl.u32 %v2174, 7
    %v2176 = vsub.s32 %v2173, %v2175
    %v2177 = vrot.slane %v2170, %v2176
    %v2178 = vcombine.low %v2082, %v2089
    %v2180 = vunpack.c.l.s4 1983009808
    %v2181 = vunpack.c.0.s8 %v2180
    %v2182 = vlaneseq
    %v2183 = vshrl.u32 %v2182, 7
    %v2184 = vsub.s32 %v2181, %v2183
    %v2185 = vrot.slane %v2178, %v2184
    %v2186 = vcombine.low %v2092, %v2093
    %v2188 = vunpack.c.l.s4 1983009808
    %v2189 = vunpack.c.0.s8 %v2188
    %v2190 = vlaneseq
    %v2191 = vshrl.u32 %v2190, 7
    %v2192 = vsub.s32 %v2189, %v2191
    %v2193 = vrot.slane %v2186, %v2192
    %v2194 = vcombine.low %v2169, %v2177
    %v2195 = vcombine.high %v2169, %v2177
    %v2197 = vunpack.c.l.s4 1934713408
    %v2198 = vunpack.c.0.s8 %v2197
    %v2199 = vlaneseq
    %v2200 = vshrl.u32 %v2199, 7
    %v2201 = vsub.s32 %v2198, %v2200
    %v2202 = vrot.slane %v2194, %v2201
    %v2204 = vunpack.c.l.s4 1934713408
    %v2205 = vunpack.c.0.s8 %v2204
    %v2206 = vlaneseq
    %v2207 = vshrl.u32 %v2206, 7
    %v2208 = vsub.s32 %v2205, %v2207
    %v2209 = vrot.slane %v2195, %v2208
    %v2210 = vcombine.low %v2185, %v2193
    %v2211 = vcombine.high %v2185, %v2193
    %v2213 = vunpack.c.l.s4 1934713408
    %v2214 = vunpack.c.0.s8 %v2213
    %v2215 = vlaneseq
    %v2216 = vshrl.u32 %v2215, 7
    %v2217 = vsub.s32 %v2214, %v2216
    %v2218 = vrot.slane %v2210, %v2217
    %v2220 = vunpack.c.l.s4 1934713408
    %v2221 = vunpack.c.0.s8 %v2220
    %v2222 = vlaneseq
    %v2223 = vshrl.u32 %v2222, 7
    %v2224 = vsub.s32 %v2221, %v2223
    %v2225 = vrot.slane %v2211, %v2224
    %v2226 = vcombine.low %v2202, %v2218
    %v2227 = vcombine.high %v2202, %v2218
    %v2228 = vcombine.low %v2209, %v2225
    %v2229 = vcombine.high %v2209, %v2225
    %v2230 = vcombine.low %v2134, %v2141
    %v2232 = vunpack.c.l.s4 1983009808
    %v2233 = vunpack.c.0.s8 %v2232
    %v2234 = vlaneseq
    %v2235 = vshrl.u32 %v2234, 7
    %v2236 = vsub.s32 %v2233, %v2235
    %v2237 = vrot.slane %v2230, %v2236
    %v2238 = vcombine.low %v2158, %v2159
    %v2240 = vunpack.c.l.s4 1983009808
    %v2241 = vunpack.c.0.s8 %v2240
    %v2242 = vlaneseq
    %v2243 = vshrl.u32 %v2242, 7
    %v2244 = vsub.s32 %v2241, %v2243
    %v2245 = vrot.slane %v2238, %v2244
    %v2246 = vcombine.low %v2150, %v2157
    %v2248 = vunpack.c.l.s4 1983009808
    %v2249 = vunpack.c.0.s8 %v2248
    %v2250 = vlaneseq
    %v2251 = vshrl.u32 %v2250, 7
    %v2252 = vsub.s32 %v2249, %v2251
    %v2253 = vrot.slane %v2246, %v2252
    %v2254 = vcombine.low %v2160, %v2161
    %v2256 = vunpack.c.l.s4 1983009808
    %v2257 = vunpack.c.0.s8 %v2256
    %v2258 = vlaneseq
    %v2259 = vshrl.u32 %v2258, 7
    %v2260 = vsub.s32 %v2257, %v2259
    %v2261 = vrot.slane %v2254, %v2260
    %v2262 = vcombine.low %v2237, %v2245
    %v2263 = vcombine.high %v2237, %v2245
    %v2265 = vunpack.c.l.s4 1934713408
    %v2266 = vunpack.c.0.s8 %v2265
    %v2267 = vlaneseq
    %v2268 = vshrl.u32 %v2267, 7
    %v2269 = vsub.s32 %v2266, %v2268
    %v2270 = vrot.slane %v2262, %v2269
    %v2272 = vunpack.c.l.s4 1934713408
    %v2273 = vunpack.c.0.s8 %v2272
    %v2274 = vlaneseq
    %v2275 = vshrl.u32 %v2274, 7
    %v2276 = vsub.s32 %v2273, %v2275
    %v2277 = vrot.slane %v2263, %v2276
    %v2278 = vcombine.low %v2253, %v2261
    %v2279 = vcombine.high %v2253, %v2261
    %v2281 = vunpack.c.l.s4 1934713408
    %v2282 = vunpack.c.0.s8 %v2281
    %v2283 = vlaneseq
    %v2284 = vshrl.u32 %v2283, 7
    %v2285 = vsub.s32 %v2282, %v2284
    %v2286 = vrot.slane %v2278, %v2285
    %v2288 = vunpack.c.l.s4 1934713408
    %v2289 = vunpack.c.0.s8 %v2288
    %v2290 = vlaneseq
    %v2291 = vshrl.u32 %v2290, 7
    %v2292 = vsub.s32 %v2289, %v2291
    %v2293 = vrot.slane %v2279, %v2292
    %v2294 = vcombine.low %v2270, %v2286
    %v2295 = vcombine.high %v2270, %v2286
    %v2296 = vcombine.low %v2277, %v2293
    %v2297 = vcombine.high %v2277, %v2293
    %2298 = vrot.lane.b32.xlu0 %v170, 64
    %v2299 = vpop.permute.xlu0 %2298
    %2300 = vrot.lane.b32.xlu0 %v175, 64
    %v2301 = vpop.permute.xlu0 %2300
    %2302 = vrot.lane.b32.xlu0 %v1851, 64
    %v2303 = vpop.permute.xlu0 %2302
    %2304 = vrot.lane.b32.xlu0 %v1997, 64
    %v2305 = vpop.permute.xlu0 %2304
    %2306 = vrot.lane.b32.xlu0 %v1854, 64
    %v2307 = vpop.permute.xlu0 %2306
    %2308 = vrot.lane.b32.xlu0 %v1999, 64
    %v2309 = vpop.permute.xlu0 %2308
    %2310 = vrot.lane.b32.xlu0 %v1857, 64
    %v2311 = vpop.permute.xlu0 %2310
    %2312 = vrot.lane.b32.xlu0 %v2001, 64
    %v2313 = vpop.permute.xlu0 %2312
    %v2322 = vcombine.low %v2299, %v2307
    %v2323 = vcombine.high %v2299, %v2307
    %v2325 = vunpack.c.l.s4 1983009808
    %v2326 = vunpack.c.0.s8 %v2325
    %v2327 = vlaneseq
    %v2328 = vshrl.u32 %v2327, 7
    %v2329 = vsub.s32 %v2326, %v2328
    %v2330 = vrot.slane %v2322, %v2329
    %v2332 = vunpack.c.l.s4 1983009808
    %v2333 = vunpack.c.0.s8 %v2332
    %v2334 = vlaneseq
    %v2335 = vshrl.u32 %v2334, 7
    %v2336 = vsub.s32 %v2333, %v2335
    %v2337 = vrot.slane %v2323, %v2336
    %v2338 = vcombine.low %v2303, %v2311
    %v2339 = vcombine.high %v2303, %v2311
    %v2341 = vunpack.c.l.s4 1983009808
    %v2342 = vunpack.c.0.s8 %v2341
    %v2343 = vlaneseq
    %v2344 = vshrl.u32 %v2343, 7
    %v2345 = vsub.s32 %v2342, %v2344
    %v2346 = vrot.slane %v2338, %v2345
    %v2348 = vunpack.c.l.s4 1983009808
    %v2349 = vunpack.c.0.s8 %v2348
    %v2350 = vlaneseq
    %v2351 = vshrl.u32 %v2350, 7
    %v2352 = vsub.s32 %v2349, %v2351
    %v2353 = vrot.slane %v2339, %v2352
    %v2354 = vcombine.low %v2330, %v2346
    %v2355 = vcombine.high %v2330, %v2346
    %v2357 = vunpack.c.l.s4 1934713408
    %v2358 = vunpack.c.0.s8 %v2357
    %v2359 = vlaneseq
    %v2360 = vshrl.u32 %v2359, 7
    %v2361 = vsub.s32 %v2358, %v2360
    %v2362 = vrot.slane %v2354, %v2361
    %v2364 = vunpack.c.l.s4 1934713408
    %v2365 = vunpack.c.0.s8 %v2364
    %v2366 = vlaneseq
    %v2367 = vshrl.u32 %v2366, 7
    %v2368 = vsub.s32 %v2365, %v2367
    %v2369 = vrot.slane %v2355, %v2368
    %v2370 = vcombine.low %v2337, %v2353
    %v2371 = vcombine.high %v2337, %v2353
    %v2373 = vunpack.c.l.s4 1934713408
    %v2374 = vunpack.c.0.s8 %v2373
    %v2375 = vlaneseq
    %v2376 = vshrl.u32 %v2375, 7
    %v2377 = vsub.s32 %v2374, %v2376
    %v2378 = vrot.slane %v2370, %v2377
    %v2380 = vunpack.c.l.s4 1934713408
    %v2381 = vunpack.c.0.s8 %v2380
    %v2382 = vlaneseq
    %v2383 = vshrl.u32 %v2382, 7
    %v2384 = vsub.s32 %v2381, %v2383
    %v2385 = vrot.slane %v2371, %v2384
    %v2386 = vcombine.high %v2362, 0.0
    %v2387 = vcombine.high %v2369, 0.0
    %v2388 = vcombine.high %v2378, 0.0
    %v2389 = vcombine.high %v2385, 0.0
    %v2390 = vcombine.low %v2301, %v2309
    %v2391 = vcombine.high %v2301, %v2309
    %v2393 = vunpack.c.l.s4 1983009808
    %v2394 = vunpack.c.0.s8 %v2393
    %v2395 = vlaneseq
    %v2396 = vshrl.u32 %v2395, 7
    %v2397 = vsub.s32 %v2394, %v2396
    %v2398 = vrot.slane %v2390, %v2397
    %v2400 = vunpack.c.l.s4 1983009808
    %v2401 = vunpack.c.0.s8 %v2400
    %v2402 = vlaneseq
    %v2403 = vshrl.u32 %v2402, 7
    %v2404 = vsub.s32 %v2401, %v2403
    %v2405 = vrot.slane %v2391, %v2404
    %v2406 = vcombine.low %v2305, %v2313
    %v2407 = vcombine.high %v2305, %v2313
    %v2409 = vunpack.c.l.s4 1983009808
    %v2410 = vunpack.c.0.s8 %v2409
    %v2411 = vlaneseq
    %v2412 = vshrl.u32 %v2411, 7
    %v2413 = vsub.s32 %v2410, %v2412
    %v2414 = vrot.slane %v2406, %v2413
    %v2416 = vunpack.c.l.s4 1983009808
    %v2417 = vunpack.c.0.s8 %v2416
    %v2418 = vlaneseq
    %v2419 = vshrl.u32 %v2418, 7
    %v2420 = vsub.s32 %v2417, %v2419
    %v2421 = vrot.slane %v2407, %v2420
    %v2422 = vcombine.low %v2398, %v2414
    %v2423 = vcombine.high %v2398, %v2414
    %v2425 = vunpack.c.l.s4 1934713408
    %v2426 = vunpack.c.0.s8 %v2425
    %v2427 = vlaneseq
    %v2428 = vshrl.u32 %v2427, 7
    %v2429 = vsub.s32 %v2426, %v2428
    %v2430 = vrot.slane %v2422, %v2429
    %v2432 = vunpack.c.l.s4 1934713408
    %v2433 = vunpack.c.0.s8 %v2432
    %v2434 = vlaneseq
    %v2435 = vshrl.u32 %v2434, 7
    %v2436 = vsub.s32 %v2433, %v2435
    %v2437 = vrot.slane %v2423, %v2436
    %v2438 = vcombine.low %v2405, %v2421
    %v2439 = vcombine.high %v2405, %v2421
    %v2441 = vunpack.c.l.s4 1934713408
    %v2442 = vunpack.c.0.s8 %v2441
    %v2443 = vlaneseq
    %v2444 = vshrl.u32 %v2443, 7
    %v2445 = vsub.s32 %v2442, %v2444
    %v2446 = vrot.slane %v2438, %v2445
    %v2448 = vunpack.c.l.s4 1934713408
    %v2449 = vunpack.c.0.s8 %v2448
    %v2450 = vlaneseq
    %v2451 = vshrl.u32 %v2450, 7
    %v2452 = vsub.s32 %v2449, %v2451
    %v2453 = vrot.slane %v2439, %v2452
    %v2454 = vcombine.high %v2430, 0.0
    %v2455 = vcombine.high %v2437, 0.0
    %v2456 = vcombine.high %v2446, 0.0
    %v2457 = vcombine.high %v2453, 0.0
    %v2458 = vcombine.low %v2362, %v2369
    %v2460 = vunpack.c.l.s4 1983009808
    %v2461 = vunpack.c.0.s8 %v2460
    %v2462 = vlaneseq
    %v2463 = vshrl.u32 %v2462, 7
    %v2464 = vsub.s32 %v2461, %v2463
    %v2465 = vrot.slane %v2458, %v2464
    %v2466 = vcombine.low %v2386, %v2387
    %v2468 = vunpack.c.l.s4 1983009808
    %v2469 = vunpack.c.0.s8 %v2468
    %v2470 = vlaneseq
    %v2471 = vshrl.u32 %v2470, 7
    %v2472 = vsub.s32 %v2469, %v2471
    %v2473 = vrot.slane %v2466, %v2472
    %v2474 = vcombine.low %v2378, %v2385
    %v2476 = vunpack.c.l.s4 1983009808
    %v2477 = vunpack.c.0.s8 %v2476
    %v2478 = vlaneseq
    %v2479 = vshrl.u32 %v2478, 7
    %v2480 = vsub.s32 %v2477, %v2479
    %v2481 = vrot.slane %v2474, %v2480
    %v2482 = vcombine.low %v2388, %v2389
    %v2484 = vunpack.c.l.s4 1983009808
    %v2485 = vunpack.c.0.s8 %v2484
    %v2486 = vlaneseq
    %v2487 = vshrl.u32 %v2486, 7
    %v2488 = vsub.s32 %v2485, %v2487
    %v2489 = vrot.slane %v2482, %v2488
    %v2490 = vcombine.low %v2465, %v2473
    %v2491 = vcombine.high %v2465, %v2473
    %v2493 = vunpack.c.l.s4 1934713408
    %v2494 = vunpack.c.0.s8 %v2493
    %v2495 = vlaneseq
    %v2496 = vshrl.u32 %v2495, 7
    %v2497 = vsub.s32 %v2494, %v2496
    %v2498 = vrot.slane %v2490, %v2497
    %v2500 = vunpack.c.l.s4 1934713408
    %v2501 = vunpack.c.0.s8 %v2500
    %v2502 = vlaneseq
    %v2503 = vshrl.u32 %v2502, 7
    %v2504 = vsub.s32 %v2501, %v2503
    %v2505 = vrot.slane %v2491, %v2504
    %v2506 = vcombine.low %v2481, %v2489
    %v2507 = vcombine.high %v2481, %v2489
    %v2509 = vunpack.c.l.s4 1934713408
    %v2510 = vunpack.c.0.s8 %v2509
    %v2511 = vlaneseq
    %v2512 = vshrl.u32 %v2511, 7
    %v2513 = vsub.s32 %v2510, %v2512
    %v2514 = vrot.slane %v2506, %v2513
    %v2516 = vunpack.c.l.s4 1934713408
    %v2517 = vunpack.c.0.s8 %v2516
    %v2518 = vlaneseq
    %v2519 = vshrl.u32 %v2518, 7
    %v2520 = vsub.s32 %v2517, %v2519
    %v2521 = vrot.slane %v2507, %v2520
    %v2522 = vcombine.low %v2498, %v2514
    %v2523 = vcombine.high %v2498, %v2514
    %v2524 = vcombine.low %v2505, %v2521
    %v2525 = vcombine.high %v2505, %v2521
    %v2526 = vcombine.low %v2430, %v2437
    %v2528 = vunpack.c.l.s4 1983009808
    %v2529 = vunpack.c.0.s8 %v2528
    %v2530 = vlaneseq
    %v2531 = vshrl.u32 %v2530, 7
    %v2532 = vsub.s32 %v2529, %v2531
    %v2533 = vrot.slane %v2526, %v2532
    %v2534 = vcombine.low %v2454, %v2455
    %v2536 = vunpack.c.l.s4 1983009808
    %v2537 = vunpack.c.0.s8 %v2536
    %v2538 = vlaneseq
    %v2539 = vshrl.u32 %v2538, 7
    %v2540 = vsub.s32 %v2537, %v2539
    %v2541 = vrot.slane %v2534, %v2540
    %v2542 = vcombine.low %v2446, %v2453
    %v2544 = vunpack.c.l.s4 1983009808
    %v2545 = vunpack.c.0.s8 %v2544
    %v2546 = vlaneseq
    %v2547 = vshrl.u32 %v2546, 7
    %v2548 = vsub.s32 %v2545, %v2547
    %v2549 = vrot.slane %v2542, %v2548
    %v2550 = vcombine.low %v2456, %v2457
    %v2552 = vunpack.c.l.s4 1983009808
    %v2553 = vunpack.c.0.s8 %v2552
    %v2554 = vlaneseq
    %v2555 = vshrl.u32 %v2554, 7
    %v2556 = vsub.s32 %v2553, %v2555
    %v2557 = vrot.slane %v2550, %v2556
    %v2558 = vcombine.low %v2533, %v2541
    %v2559 = vcombine.high %v2533, %v2541
    %v2561 = vunpack.c.l.s4 1934713408
    %v2562 = vunpack.c.0.s8 %v2561
    %v2563 = vlaneseq
    %v2564 = vshrl.u32 %v2563, 7
    %v2565 = vsub.s32 %v2562, %v2564
    %v2566 = vrot.slane %v2558, %v2565
    %v2568 = vunpack.c.l.s4 1934713408
    %v2569 = vunpack.c.0.s8 %v2568
    %v2570 = vlaneseq
    %v2571 = vshrl.u32 %v2570, 7
    %v2572 = vsub.s32 %v2569, %v2571
    %v2573 = vrot.slane %v2559, %v2572
    %v2574 = vcombine.low %v2549, %v2557
    %v2575 = vcombine.high %v2549, %v2557
    %v2577 = vunpack.c.l.s4 1934713408
    %v2578 = vunpack.c.0.s8 %v2577
    %v2579 = vlaneseq
    %v2580 = vshrl.u32 %v2579, 7
    %v2581 = vsub.s32 %v2578, %v2580
    %v2582 = vrot.slane %v2574, %v2581
    %v2584 = vunpack.c.l.s4 1934713408
    %v2585 = vunpack.c.0.s8 %v2584
    %v2586 = vlaneseq
    %v2587 = vshrl.u32 %v2586, 7
    %v2588 = vsub.s32 %v2585, %v2587
    %v2589 = vrot.slane %v2575, %v2588
    %v2590 = vcombine.low %v2566, %v2582
    %v2591 = vcombine.high %v2566, %v2582
    %v2592 = vcombine.low %v2573, %v2589
    %v2593 = vcombine.high %v2573, %v2589
    %v2595 = vsel %vm927, %v1991, 0
    %v2598 = vsel %vm927, %v2226, 0
    %v2601 = vsel %vm927, %v2294, 0
    %2603 = vmatprep.subr.mxu0 0.0
    %2604 = vmatpush1.xpose.msra.mxu0 0.0
    %2605 = vmatprep.subr.mxu0 0.0
    %2606 = vmatpush1.xpose.msra.mxu0 0.0
    %2607 = vmatprep.subr.mxu0 0.0
    %2608 = vmatpush1.xpose.msra.mxu0 0.0
    %2609 = vmatprep.subr.mxu0 0.0
    %2610 = vmatpush1.xpose.msra.mxu0 0.0
    %2611 = vmatprep.subr.mxu0 0.0
    %2612 = vmatpush1.xpose.msra.mxu0 0.0
    %2613 = vmatprep.subr.mxu0 0.0
    %2614 = vmatpush1.xpose.msra.mxu0 0.0
    %2615 = vmatprep.subr.mxu0 0.0
    %2616 = vmatpush1.xpose.msra.mxu0 0.0
    %2617 = vmatprep.subr.mxu0 0.0
    %2618 = vmatpush1.xpose.msra.mxu0 0.0
    %2619 = vmatprep.subr.mxu0 0.0
    %2620 = vmatpush1.xpose.msra.mxu0 0.0
    %2621 = vmatprep.subr.mxu0 0.0
    %2622 = vmatpush1.xpose.msra.mxu0 0.0
    %2623 = vmatprep.subr.mxu0 0.0
    %2624 = vmatpush1.xpose.msra.mxu0 0.0
    %2625 = vmatprep.subr.mxu0 0.0
    %2626 = vmatpush1.xpose.msra.mxu0 0.0
    %2627 = vmatprep.subr.mxu0 0.0
    %2628 = vmatpush1.xpose.msra.mxu0 0.0
    %2629 = vmatprep.subr.mxu0 0.0
    %2630 = vmatpush1.xpose.msra.mxu0 0.0
    %2631 = vmatprep.subr.mxu0 0.0
    %2632 = vmatpush1.xpose.msra.mxu0 %v2601
    %2633 = vmatprep.subr.mxu0 0.0
    %2634 = vmatpush1.xpose.msra.mxu0 %v2598
    %2635 = vmatprep.subr.mxu0 0.0
    %2636 = vmatpush2.xpose.msra.mxu0 0.0
    %2637 = vmatprep.subr.mxu0 0.0
    %2638 = vmatpush2.xpose.msra.mxu0 0.0
    %2639 = vmatprep.subr.mxu0 0.0
    %2640 = vmatpush2.xpose.msra.mxu0 0.0
    %2641 = vmatprep.subr.mxu0 0.0
    %2642 = vmatpush2.xpose.msra.mxu0 0.0
    %2643 = vmatprep.subr.mxu0 0.0
    %2644 = vmatpush2.xpose.msra.mxu0 0.0
    %2645 = vmatprep.subr.mxu0 0.0
    %2646 = vmatpush2.xpose.msra.mxu0 0.0
    %2647 = vmatprep.subr.mxu0 0.0
    %2648 = vmatpush2.xpose.msra.mxu0 0.0
    %2649 = vmatprep.subr.mxu0 0.0
    %2650 = vmatpush2.xpose.msra.mxu0 0.0
    %2651 = vmatprep.subr.mxu0 0.0
    %2652 = vmatpush2.xpose.msra.mxu0 0.0
    %2653 = vmatprep.subr.mxu0 0.0
    %2654 = vmatpush2.xpose.msra.mxu0 0.0
    %2655 = vmatprep.subr.mxu0 0.0
    %2656 = vmatpush2.xpose.msra.mxu0 0.0
    %2657 = vmatprep.subr.mxu0 0.0
    %2658 = vmatpush2.xpose.msra.mxu0 0.0
    %2659 = vmatprep.subr.mxu0 0.0
    %2660 = vmatpush2.xpose.msra.mxu0 0.0
    %2661 = vmatprep.subr.mxu0 0.0
    %2662 = vmatpush2.xpose.msra.mxu0 0.0
    %2663 = vmatprep.subr.mxu0 0.0
    %2664 = vmatpush2.xpose.msra.mxu0 0.0
    %2665 = vmatprep.subr.mxu0 0.0
    %2666 = vmatpush2.xpose.msra.mxu0 0.0
    %2667 = vmatprep.mubr.f32.mxu0 0.0
    %2668 = vmatmul.mubr.f32.gmra.mxu0 %v2595
    %v2669 = vpop.f32.mrf.mxu0
    %v2670 = vadd.f32 0.0, %v2669
    %v2671 = vpop.f32.mrf.mxu0
    %2672 = vdwg.mxu0
    %v2674 = vsel %vm927, %v1992, 0
    %v2677 = vsel %vm927, %v2227, 0
    %v2680 = vsel %vm927, %v2295, 0
    %2682 = vmatprep.subr.mxu0 0.0
    %2683 = vmatpush1.xpose.msra.mxu0 0.0
    %2684 = vmatprep.subr.mxu0 0.0
    %2685 = vmatpush1.xpose.msra.mxu0 0.0
    %2686 = vmatprep.subr.mxu0 0.0
    %2687 = vmatpush1.xpose.msra.mxu0 0.0
    %2688 = vmatprep.subr.mxu0 0.0
    %2689 = vmatpush1.xpose.msra.mxu0 0.0
    %2690 = vmatprep.subr.mxu0 0.0
    %2691 = vmatpush1.xpose.msra.mxu0 0.0
    %2692 = vmatprep.subr.mxu0 0.0
    %2693 = vmatpush1.xpose.msra.mxu0 0.0
    %2694 = vmatprep.subr.mxu0 0.0
    %2695 = vmatpush1.xpose.msra.mxu0 0.0
    %2696 = vmatprep.subr.mxu0 0.0
    %2697 = vmatpush1.xpose.msra.mxu0 0.0
    %2698 = vmatprep.subr.mxu0 0.0
    %2699 = vmatpush1.xpose.msra.mxu0 0.0
    %2700 = vmatprep.subr.mxu0 0.0
    %2701 = vmatpush1.xpose.msra.mxu0 0.0
    %2702 = vmatprep.subr.mxu0 0.0
    %2703 = vmatpush1.xpose.msra.mxu0 0.0
    %2704 = vmatprep.subr.mxu0 0.0
    %2705 = vmatpush1.xpose.msra.mxu0 0.0
    %2706 = vmatprep.subr.mxu0 0.0
    %2707 = vmatpush1.xpose.msra.mxu0 0.0
    %2708 = vmatprep.subr.mxu0 0.0
    %2709 = vmatpush1.xpose.msra.mxu0 0.0
    %2710 = vmatprep.subr.mxu0 0.0
    %2711 = vmatpush1.xpose.msra.mxu0 %v2680
    %2712 = vmatprep.subr.mxu0 0.0
    %2713 = vmatpush1.xpose.msra.mxu0 %v2677
    %2714 = vmatprep.subr.mxu0 0.0
    %2715 = vmatpush2.xpose.msra.mxu0 0.0
    %2716 = vmatprep.subr.mxu0 0.0
    %2717 = vmatpush2.xpose.msra.mxu0 0.0
    %2718 = vmatprep.subr.mxu0 0.0
    %2719 = vmatpush2.xpose.msra.mxu0 0.0
    %2720 = vmatprep.subr.mxu0 0.0
    %2721 = vmatpush2.xpose.msra.mxu0 0.0
    %2722 = vmatprep.subr.mxu0 0.0
    %2723 = vmatpush2.xpose.msra.mxu0 0.0
    %2724 = vmatprep.subr.mxu0 0.0
    %2725 = vmatpush2.xpose.msra.mxu0 0.0
    %2726 = vmatprep.subr.mxu0 0.0
    %2727 = vmatpush2.xpose.msra.mxu0 0.0
    %2728 = vmatprep.subr.mxu0 0.0
    %2729 = vmatpush2.xpose.msra.mxu0 0.0
    %2730 = vmatprep.subr.mxu0 0.0
    %2731 = vmatpush2.xpose.msra.mxu0 0.0
    %2732 = vmatprep.subr.mxu0 0.0
    %2733 = vmatpush2.xpose.msra.mxu0 0.0
    %2734 = vmatprep.subr.mxu0 0.0
    %2735 = vmatpush2.xpose.msra.mxu0 0.0
    %2736 = vmatprep.subr.mxu0 0.0
    %2737 = vmatpush2.xpose.msra.mxu0 0.0
    %2738 = vmatprep.subr.mxu0 0.0
    %2739 = vmatpush2.xpose.msra.mxu0 0.0
    %2740 = vmatprep.subr.mxu0 0.0
    %2741 = vmatpush2.xpose.msra.mxu0 0.0
    %2742 = vmatprep.subr.mxu0 0.0
    %2743 = vmatpush2.xpose.msra.mxu0 0.0
    %2744 = vmatprep.subr.mxu0 0.0
    %2745 = vmatpush2.xpose.msra.mxu0 0.0
    %2746 = vmatprep.mubr.f32.mxu0 0.0
    %2747 = vmatmul.mubr.f32.gmra.mxu0 %v2674
    %v2748 = vpop.f32.mrf.mxu0
    %v2749 = vadd.f32 0.0, %v2748
    %v2750 = vpop.f32.mrf.mxu0
    %2751 = vdwg.mxu0
    %v2753 = vsel %vm927, %v1993, 0
    %v2756 = vsel %vm927, %v2228, 0
    %v2759 = vsel %vm927, %v2296, 0
    %2761 = vmatprep.subr.mxu0 0.0
    %2762 = vmatpush1.xpose.msra.mxu0 0.0
    %2763 = vmatprep.subr.mxu0 0.0
    %2764 = vmatpush1.xpose.msra.mxu0 0.0
    %2765 = vmatprep.subr.mxu0 0.0
    %2766 = vmatpush1.xpose.msra.mxu0 0.0
    %2767 = vmatprep.subr.mxu0 0.0
    %2768 = vmatpush1.xpose.msra.mxu0 0.0
    %2769 = vmatprep.subr.mxu0 0.0
    %2770 = vmatpush1.xpose.msra.mxu0 0.0
    %2771 = vmatprep.subr.mxu0 0.0
    %2772 = vmatpush1.xpose.msra.mxu0 0.0
    %2773 = vmatprep.subr.mxu0 0.0
    %2774 = vmatpush1.xpose.msra.mxu0 0.0
    %2775 = vmatprep.subr.mxu0 0.0
    %2776 = vmatpush1.xpose.msra.mxu0 0.0
    %2777 = vmatprep.subr.mxu0 0.0
    %2778 = vmatpush1.xpose.msra.mxu0 0.0
    %2779 = vmatprep.subr.mxu0 0.0
    %2780 = vmatpush1.xpose.msra.mxu0 0.0
    %2781 = vmatprep.subr.mxu0 0.0
    %2782 = vmatpush1.xpose.msra.mxu0 0.0
    %2783 = vmatprep.subr.mxu0 0.0
    %2784 = vmatpush1.xpose.msra.mxu0 0.0
    %2785 = vmatprep.subr.mxu0 0.0
    %2786 = vmatpush1.xpose.msra.mxu0 0.0
    %2787 = vmatprep.subr.mxu0 0.0
    %2788 = vmatpush1.xpose.msra.mxu0 0.0
    %2789 = vmatprep.subr.mxu0 0.0
    %2790 = vmatpush1.xpose.msra.mxu0 %v2759
    %2791 = vmatprep.subr.mxu0 0.0
    %2792 = vmatpush1.xpose.msra.mxu0 %v2756
    %2793 = vmatprep.subr.mxu0 0.0
    %2794 = vmatpush2.xpose.msra.mxu0 0.0
    %2795 = vmatprep.subr.mxu0 0.0
    %2796 = vmatpush2.xpose.msra.mxu0 0.0
    %2797 = vmatprep.subr.mxu0 0.0
    %2798 = vmatpush2.xpose.msra.mxu0 0.0
    %2799 = vmatprep.subr.mxu0 0.0
    %2800 = vmatpush2.xpose.msra.mxu0 0.0
    %2801 = vmatprep.subr.mxu0 0.0
    %2802 = vmatpush2.xpose.msra.mxu0 0.0
    %2803 = vmatprep.subr.mxu0 0.0
    %2804 = vmatpush2.xpose.msra.mxu0 0.0
    %2805 = vmatprep.subr.mxu0 0.0
    %2806 = vmatpush2.xpose.msra.mxu0 0.0
    %2807 = vmatprep.subr.mxu0 0.0
    %2808 = vmatpush2.xpose.msra.mxu0 0.0
    %2809 = vmatprep.subr.mxu0 0.0
    %2810 = vmatpush2.xpose.msra.mxu0 0.0
    %2811 = vmatprep.subr.mxu0 0.0
    %2812 = vmatpush2.xpose.msra.mxu0 0.0
    %2813 = vmatprep.subr.mxu0 0.0
    %2814 = vmatpush2.xpose.msra.mxu0 0.0
    %2815 = vmatprep.subr.mxu0 0.0
    %2816 = vmatpush2.xpose.msra.mxu0 0.0
    %2817 = vmatprep.subr.mxu0 0.0
    %2818 = vmatpush2.xpose.msra.mxu0 0.0
    %2819 = vmatprep.subr.mxu0 0.0
    %2820 = vmatpush2.xpose.msra.mxu0 0.0
    %2821 = vmatprep.subr.mxu0 0.0
    %2822 = vmatpush2.xpose.msra.mxu0 0.0
    %2823 = vmatprep.subr.mxu0 0.0
    %2824 = vmatpush2.xpose.msra.mxu0 0.0
    %2825 = vmatprep.mubr.f32.mxu0 0.0
    %2826 = vmatmul.mubr.f32.gmra.mxu0 %v2753
    %v2827 = vpop.f32.mrf.mxu0
    %v2828 = vadd.f32 0.0, %v2827
    %v2829 = vpop.f32.mrf.mxu0
    %2830 = vdwg.mxu0
    %v2832 = vsel %vm927, %v1994, 0
    %v2835 = vsel %vm927, %v2229, 0
    %v2838 = vsel %vm927, %v2297, 0
    %2840 = vmatprep.subr.mxu0 0.0
    %2841 = vmatpush1.xpose.msra.mxu0 0.0
    %2842 = vmatprep.subr.mxu0 0.0
    %2843 = vmatpush1.xpose.msra.mxu0 0.0
    %2844 = vmatprep.subr.mxu0 0.0
    %2845 = vmatpush1.xpose.msra.mxu0 0.0
    %2846 = vmatprep.subr.mxu0 0.0
    %2847 = vmatpush1.xpose.msra.mxu0 0.0
    %2848 = vmatprep.subr.mxu0 0.0
    %2849 = vmatpush1.xpose.msra.mxu0 0.0
    %2850 = vmatprep.subr.mxu0 0.0
    %2851 = vmatpush1.xpose.msra.mxu0 0.0
    %2852 = vmatprep.subr.mxu0 0.0
    %2853 = vmatpush1.xpose.msra.mxu0 0.0
    %2854 = vmatprep.subr.mxu0 0.0
    %2855 = vmatpush1.xpose.msra.mxu0 0.0
    %2856 = vmatprep.subr.mxu0 0.0
    %2857 = vmatpush1.xpose.msra.mxu0 0.0
    %2858 = vmatprep.subr.mxu0 0.0
    %2859 = vmatpush1.xpose.msra.mxu0 0.0
    %2860 = vmatprep.subr.mxu0 0.0
    %2861 = vmatpush1.xpose.msra.mxu0 0.0
    %2862 = vmatprep.subr.mxu0 0.0
    %2863 = vmatpush1.xpose.msra.mxu0 0.0
    %2864 = vmatprep.subr.mxu0 0.0
    %2865 = vmatpush1.xpose.msra.mxu0 0.0
    %2866 = vmatprep.subr.mxu0 0.0
    %2867 = vmatpush1.xpose.msra.mxu0 0.0
    %2868 = vmatprep.subr.mxu0 0.0
    %2869 = vmatpush1.xpose.msra.mxu0 %v2838
    %2870 = vmatprep.subr.mxu0 0.0
    %2871 = vmatpush1.xpose.msra.mxu0 %v2835
    %2872 = vmatprep.subr.mxu0 0.0
    %2873 = vmatpush2.xpose.msra.mxu0 0.0
    %2874 = vmatprep.subr.mxu0 0.0
    %2875 = vmatpush2.xpose.msra.mxu0 0.0
    %2876 = vmatprep.subr.mxu0 0.0
    %2877 = vmatpush2.xpose.msra.mxu0 0.0
    %2878 = vmatprep.subr.mxu0 0.0
    %2879 = vmatpush2.xpose.msra.mxu0 0.0
    %2880 = vmatprep.subr.mxu0 0.0
    %2881 = vmatpush2.xpose.msra.mxu0 0.0
    %2882 = vmatprep.subr.mxu0 0.0
    %2883 = vmatpush2.xpose.msra.mxu0 0.0
    %2884 = vmatprep.subr.mxu0 0.0
    %2885 = vmatpush2.xpose.msra.mxu0 0.0
    %2886 = vmatprep.subr.mxu0 0.0
    %2887 = vmatpush2.xpose.msra.mxu0 0.0
    %2888 = vmatprep.subr.mxu0 0.0
    %2889 = vmatpush2.xpose.msra.mxu0 0.0
    %2890 = vmatprep.subr.mxu0 0.0
    %2891 = vmatpush2.xpose.msra.mxu0 0.0
    %2892 = vmatprep.subr.mxu0 0.0
    %2893 = vmatpush2.xpose.msra.mxu0 0.0
    %2894 = vmatprep.subr.mxu0 0.0
    %2895 = vmatpush2.xpose.msra.mxu0 0.0
    %2896 = vmatprep.subr.mxu0 0.0
    %2897 = vmatpush2.xpose.msra.mxu0 0.0
    %2898 = vmatprep.subr.mxu0 0.0
    %2899 = vmatpush2.xpose.msra.mxu0 0.0
    %2900 = vmatprep.subr.mxu0 0.0
    %2901 = vmatpush2.xpose.msra.mxu0 0.0
    %2902 = vmatprep.subr.mxu0 0.0
    %2903 = vmatpush2.xpose.msra.mxu0 0.0
    %2904 = vmatprep.mubr.f32.mxu0 0.0
    %2905 = vmatmul.mubr.f32.gmra.mxu0 %v2832
    %v2906 = vpop.f32.mrf.mxu0
    %v2907 = vadd.f32 0.0, %v2906
    %v2908 = vpop.f32.mrf.mxu0
    %2909 = vdwg.mxu0
    %v2910 = vmul.f32 %v2670, 0.35355338
    %v2911 = vmul.f32 %v2749, 0.35355338
    %v2912 = vmul.f32 %v2828, 0.35355338
    %v2913 = vmul.f32 %v2907, 0.35355338
    %v2914 = vadd.f32 %v2910, %v181
    %v2915 = vadd.f32 %v2911, %v181
    %v2916 = vadd.f32 %v2912, %v181
    %v2917 = vadd.f32 %v2913, %v181
    %v2918 = vsel %vm1252, %v2914, -inf
    %2919 = vmax.xlane.f32.xlu0 %v2918
    %v2920 = vpop.xlane.xlu0 %2919
    %v2921 = vsel %vm1252, %v2915, -inf
    %2922 = vmax.xlane.f32.xlu0 %v2921
    %v2923 = vpop.xlane.xlu0 %2922
    %v2924 = vsel %vm1252, %v2916, -inf
    %2925 = vmax.xlane.f32.xlu0 %v2924
    %v2926 = vpop.xlane.xlu0 %2925
    %v2927 = vsel %vm1252, %v2917, -inf
    %2928 = vmax.xlane.f32.xlu0 %v2927
    %v2929 = vpop.xlane.xlu0 %2928
    %v2930 = vsub.f32 %v2914, %v2920
    %v2931 = vsub.f32 %v2915, %v2923
    %v2932 = vsub.f32 %v2916, %v2926
    %v2933 = vsub.f32 %v2917, %v2929
    %v2934 = vmul.f32 %v2930, 1.442695
    %v2935 = vpow.pop %v2934
    %v2936 = vmul.f32 %v2931, 1.442695
    %v2937 = vpow.pop %v2936
    %v2938 = vmul.f32 %v2932, 1.442695
    %v2939 = vpow.pop %v2938
    %v2940 = vmul.f32 %v2933, 1.442695
    %v2941 = vpow.pop %v2940
    %v2942 = vsel %vm1252, %v2935, 0.0
    %2943 = vadd.xlane.f32.xlu0 %v2942
    %v2944 = vpop.xlane.xlu0 %2943
    %v2945 = vsel %vm1252, %v2937, 0.0
    %2946 = vadd.xlane.f32.xlu0 %v2945
    %v2947 = vpop.xlane.xlu0 %2946
    %v2948 = vsel %vm1252, %v2939, 0.0
    %2949 = vadd.xlane.f32.xlu0 %v2948
    %v2950 = vpop.xlane.xlu0 %2949
    %v2951 = vsel %vm1252, %v2941, 0.0
    %2952 = vadd.xlane.f32.xlu0 %v2951
    %v2953 = vpop.xlane.xlu0 %2952
    %v2954 = vrcp.pop %v2944
    %v2955 = vrcp.pop %v2947
    %v2956 = vrcp.pop %v2950
    %v2957 = vrcp.pop %v2953
    %v2958 = vmul.f32 %v2935, %v2954
    %v2959 = vmul.f32 %v2937, %v2955
    %v2960 = vmul.f32 %v2939, %v2956
    %v2961 = vmul.f32 %v2941, %v2957
    %v2963 = vsel %vm1252, %v2958, 0
    %2965 = vmatprep.subr.mxu0 0.0
    %2966 = vmatpush1.msra.mxu0 0.0
    %2967 = vmatprep.subr.mxu0 0.0
    %2968 = vmatpush1.msra.mxu0 0.0
    %2969 = vmatprep.subr.mxu0 0.0
    %2970 = vmatpush1.msra.mxu0 0.0
    %2971 = vmatprep.subr.mxu0 0.0
    %2972 = vmatpush1.msra.mxu0 0.0
    %2973 = vmatprep.subr.mxu0 0.0
    %2974 = vmatpush1.msra.mxu0 0.0
    %2975 = vmatprep.subr.mxu0 0.0
    %2976 = vmatpush1.msra.mxu0 0.0
    %2977 = vmatprep.subr.mxu0 0.0
    %2978 = vmatpush1.msra.mxu0 0.0
    %2979 = vmatprep.subr.mxu0 0.0
    %2980 = vmatpush1.msra.mxu0 0.0
    %2981 = vmatprep.subr.mxu0 0.0
    %2982 = vmatpush1.msra.mxu0 0.0
    %2983 = vmatprep.subr.mxu0 0.0
    %2984 = vmatpush1.msra.mxu0 0.0
    %2985 = vmatprep.subr.mxu0 0.0
    %2986 = vmatpush1.msra.mxu0 0.0
    %2987 = vmatprep.subr.mxu0 0.0
    %2988 = vmatpush1.msra.mxu0 0.0
    %2989 = vmatprep.subr.mxu0 0.0
    %2990 = vmatpush1.msra.mxu0 0.0
    %2991 = vmatprep.subr.mxu0 0.0
    %2992 = vmatpush1.msra.mxu0 0.0
    %2993 = vmatprep.subr.mxu0 0.0
    %2994 = vmatpush1.msra.mxu0 %v2590
    %2995 = vmatprep.subr.mxu0 0.0
    %2996 = vmatpush1.msra.mxu0 %v2522
    %2997 = vmatprep.subr.mxu0 0.0
    %2998 = vmatpush2.msra.mxu0 0.0
    %2999 = vmatprep.subr.mxu0 0.0
    %3000 = vmatpush2.msra.mxu0 0.0
    %3001 = vmatprep.subr.mxu0 0.0
    %3002 = vmatpush2.msra.mxu0 0.0
    %3003 = vmatprep.subr.mxu0 0.0
    %3004 = vmatpush2.msra.mxu0 0.0
    %3005 = vmatprep.subr.mxu0 0.0
    %3006 = vmatpush2.msra.mxu0 0.0
    %3007 = vmatprep.subr.mxu0 0.0
    %3008 = vmatpush2.msra.mxu0 0.0
    %3009 = vmatprep.subr.mxu0 0.0
    %3010 = vmatpush2.msra.mxu0 0.0
    %3011 = vmatprep.subr.mxu0 0.0
    %3012 = vmatpush2.msra.mxu0 0.0
    %3013 = vmatprep.subr.mxu0 0.0
    %3014 = vmatpush2.msra.mxu0 0.0
    %3015 = vmatprep.subr.mxu0 0.0
    %3016 = vmatpush2.msra.mxu0 0.0
    %3017 = vmatprep.subr.mxu0 0.0
    %3018 = vmatpush2.msra.mxu0 0.0
    %3019 = vmatprep.subr.mxu0 0.0
    %3020 = vmatpush2.msra.mxu0 0.0
    %3021 = vmatprep.subr.mxu0 0.0
    %3022 = vmatpush2.msra.mxu0 0.0
    %3023 = vmatprep.subr.mxu0 0.0
    %3024 = vmatpush2.msra.mxu0 0.0
    %3025 = vmatprep.subr.mxu0 0.0
    %3026 = vmatpush2.msra.mxu0 0.0
    %3027 = vmatprep.subr.mxu0 0.0
    %3028 = vmatpush2.msra.mxu0 0.0
    %3029 = vmatprep.mubr.f32.mxu0 0.0
    %3030 = vmatmul.mubr.f32.gmra.mxu0 %v2963
    %v3031 = vpop.f32.mrf.mxu0
    %v3032 = vadd.f32 0.0, %v3031
    %v3033 = vpop.f32.mrf.mxu0
    %3034 = vdwg.mxu0
    %v3036 = vsel %vm1252, %v2959, 0
    %3038 = vmatprep.subr.mxu0 0.0
    %3039 = vmatpush1.msra.mxu0 0.0
    %3040 = vmatprep.subr.mxu0 0.0
    %3041 = vmatpush1.msra.mxu0 0.0
    %3042 = vmatprep.subr.mxu0 0.0
    %3043 = vmatpush1.msra.mxu0 0.0
    %3044 = vmatprep.subr.mxu0 0.0
    %3045 = vmatpush1.msra.mxu0 0.0
    %3046 = vmatprep.subr.mxu0 0.0
    %3047 = vmatpush1.msra.mxu0 0.0
    %3048 = vmatprep.subr.mxu0 0.0
    %3049 = vmatpush1.msra.mxu0 0.0
    %3050 = vmatprep.subr.mxu0 0.0
    %3051 = vmatpush1.msra.mxu0 0.0
    %3052 = vmatprep.subr.mxu0 0.0
    %3053 = vmatpush1.msra.mxu0 0.0
    %3054 = vmatprep.subr.mxu0 0.0
    %3055 = vmatpush1.msra.mxu0 0.0
    %3056 = vmatprep.subr.mxu0 0.0
    %3057 = vmatpush1.msra.mxu0 0.0
    %3058 = vmatprep.subr.mxu0 0.0
    %3059 = vmatpush1.msra.mxu0 0.0
    %3060 = vmatprep.subr.mxu0 0.0
    %3061 = vmatpush1.msra.mxu0 0.0
    %3062 = vmatprep.subr.mxu0 0.0
    %3063 = vmatpush1.msra.mxu0 0.0
    %3064 = vmatprep.subr.mxu0 0.0
    %3065 = vmatpush1.msra.mxu0 0.0
    %3066 = vmatprep.subr.mxu0 0.0
    %3067 = vmatpush1.msra.mxu0 %v2591
    %3068 = vmatprep.subr.mxu0 0.0
    %3069 = vmatpush1.msra.mxu0 %v2523
    %3070 = vmatprep.subr.mxu0 0.0
    %3071 = vmatpush2.msra.mxu0 0.0
    %3072 = vmatprep.subr.mxu0 0.0
    %3073 = vmatpush2.msra.mxu0 0.0
    %3074 = vmatprep.subr.mxu0 0.0
    %3075 = vmatpush2.msra.mxu0 0.0
    %3076 = vmatprep.subr.mxu0 0.0
    %3077 = vmatpush2.msra.mxu0 0.0
    %3078 = vmatprep.subr.mxu0 0.0
    %3079 = vmatpush2.msra.mxu0 0.0
    %3080 = vmatprep.subr.mxu0 0.0
    %3081 = vmatpush2.msra.mxu0 0.0
    %3082 = vmatprep.subr.mxu0 0.0
    %3083 = vmatpush2.msra.mxu0 0.0
    %3084 = vmatprep.subr.mxu0 0.0
    %3085 = vmatpush2.msra.mxu0 0.0
    %3086 = vmatprep.subr.mxu0 0.0
    %3087 = vmatpush2.msra.mxu0 0.0
    %3088 = vmatprep.subr.mxu0 0.0
    %3089 = vmatpush2.msra.mxu0 0.0
    %3090 = vmatprep.subr.mxu0 0.0
    %3091 = vmatpush2.msra.mxu0 0.0
    %3092 = vmatprep.subr.mxu0 0.0
    %3093 = vmatpush2.msra.mxu0 0.0
    %3094 = vmatprep.subr.mxu0 0.0
    %3095 = vmatpush2.msra.mxu0 0.0
    %3096 = vmatprep.subr.mxu0 0.0
    %3097 = vmatpush2.msra.mxu0 0.0
    %3098 = vmatprep.subr.mxu0 0.0
    %3099 = vmatpush2.msra.mxu0 0.0
    %3100 = vmatprep.subr.mxu0 0.0
    %3101 = vmatpush2.msra.mxu0 0.0
    %3102 = vmatprep.mubr.f32.mxu0 0.0
    %3103 = vmatmul.mubr.f32.gmra.mxu0 %v3036
    %v3104 = vpop.f32.mrf.mxu0
    %v3105 = vadd.f32 0.0, %v3104
    %v3106 = vpop.f32.mrf.mxu0
    %3107 = vdwg.mxu0
    %v3109 = vsel %vm1252, %v2960, 0
    %3111 = vmatprep.subr.mxu0 0.0
    %3112 = vmatpush1.msra.mxu0 0.0
    %3113 = vmatprep.subr.mxu0 0.0
    %3114 = vmatpush1.msra.mxu0 0.0
    %3115 = vmatprep.subr.mxu0 0.0
    %3116 = vmatpush1.msra.mxu0 0.0
    %3117 = vmatprep.subr.mxu0 0.0
    %3118 = vmatpush1.msra.mxu0 0.0
    %3119 = vmatprep.subr.mxu0 0.0
    %3120 = vmatpush1.msra.mxu0 0.0
    %3121 = vmatprep.subr.mxu0 0.0
    %3122 = vmatpush1.msra.mxu0 0.0
    %3123 = vmatprep.subr.mxu0 0.0
    %3124 = vmatpush1.msra.mxu0 0.0
    %3125 = vmatprep.subr.mxu0 0.0
    %3126 = vmatpush1.msra.mxu0 0.0
    %3127 = vmatprep.subr.mxu0 0.0
    %3128 = vmatpush1.msra.mxu0 0.0
    %3129 = vmatprep.subr.mxu0 0.0
    %3130 = vmatpush1.msra.mxu0 0.0
    %3131 = vmatprep.subr.mxu0 0.0
    %3132 = vmatpush1.msra.mxu0 0.0
    %3133 = vmatprep.subr.mxu0 0.0
    %3134 = vmatpush1.msra.mxu0 0.0
    %3135 = vmatprep.subr.mxu0 0.0
    %3136 = vmatpush1.msra.mxu0 0.0
    %3137 = vmatprep.subr.mxu0 0.0
    %3138 = vmatpush1.msra.mxu0 0.0
    %3139 = vmatprep.subr.mxu0 0.0
    %3140 = vmatpush1.msra.mxu0 %v2592
    %3141 = vmatprep.subr.mxu0 0.0
    %3142 = vmatpush1.msra.mxu0 %v2524
    %3143 = vmatprep.subr.mxu0 0.0
    %3144 = vmatpush2.msra.mxu0 0.0
    %3145 = vmatprep.subr.mxu0 0.0
    %3146 = vmatpush2.msra.mxu0 0.0
    %3147 = vmatprep.subr.mxu0 0.0
    %3148 = vmatpush2.msra.mxu0 0.0
    %3149 = vmatprep.subr.mxu0 0.0
    %3150 = vmatpush2.msra.mxu0 0.0
    %3151 = vmatprep.subr.mxu0 0.0
    %3152 = vmatpush2.msra.mxu0 0.0
    %3153 = vmatprep.subr.mxu0 0.0
    %3154 = vmatpush2.msra.mxu0 0.0
    %3155 = vmatprep.subr.mxu0 0.0
    %3156 = vmatpush2.msra.mxu0 0.0
    %3157 = vmatprep.subr.mxu0 0.0
    %3158 = vmatpush2.msra.mxu0 0.0
    %3159 = vmatprep.subr.mxu0 0.0
    %3160 = vmatpush2.msra.mxu0 0.0
    %3161 = vmatprep.subr.mxu0 0.0
    %3162 = vmatpush2.msra.mxu0 0.0
    %3163 = vmatprep.subr.mxu0 0.0
    %3164 = vmatpush2.msra.mxu0 0.0
    %3165 = vmatprep.subr.mxu0 0.0
    %3166 = vmatpush2.msra.mxu0 0.0
    %3167 = vmatprep.subr.mxu0 0.0
    %3168 = vmatpush2.msra.mxu0 0.0
    %3169 = vmatprep.subr.mxu0 0.0
    %3170 = vmatpush2.msra.mxu0 0.0
    %3171 = vmatprep.subr.mxu0 0.0
    %3172 = vmatpush2.msra.mxu0 0.0
    %3173 = vmatprep.subr.mxu0 0.0
    %3174 = vmatpush2.msra.mxu0 0.0
    %3175 = vmatprep.mubr.f32.mxu0 0.0
    %3176 = vmatmul.mubr.f32.gmra.mxu0 %v3109
    %v3177 = vpop.f32.mrf.mxu0
    %v3178 = vadd.f32 0.0, %v3177
    %v3179 = vpop.f32.mrf.mxu0
    %3180 = vdwg.mxu0
    %v3182 = vsel %vm1252, %v2961, 0
    %3184 = vmatprep.subr.mxu0 0.0
    %3185 = vmatpush1.msra.mxu0 0.0
    %3186 = vmatprep.subr.mxu0 0.0
    %3187 = vmatpush1.msra.mxu0 0.0
    %3188 = vmatprep.subr.mxu0 0.0
    %3189 = vmatpush1.msra.mxu0 0.0
    %3190 = vmatprep.subr.mxu0 0.0
    %3191 = vmatpush1.msra.mxu0 0.0
    %3192 = vmatprep.subr.mxu0 0.0
    %3193 = vmatpush1.msra.mxu0 0.0
    %3194 = vmatprep.subr.mxu0 0.0
    %3195 = vmatpush1.msra.mxu0 0.0
    %3196 = vmatprep.subr.mxu0 0.0
    %3197 = vmatpush1.msra.mxu0 0.0
    %3198 = vmatprep.subr.mxu0 0.0
    %3199 = vmatpush1.msra.mxu0 0.0
    %3200 = vmatprep.subr.mxu0 0.0
    %3201 = vmatpush1.msra.mxu0 0.0
    %3202 = vmatprep.subr.mxu0 0.0
    %3203 = vmatpush1.msra.mxu0 0.0
    %3204 = vmatprep.subr.mxu0 0.0
    %3205 = vmatpush1.msra.mxu0 0.0
    %3206 = vmatprep.subr.mxu0 0.0
    %3207 = vmatpush1.msra.mxu0 0.0
    %3208 = vmatprep.subr.mxu0 0.0
    %3209 = vmatpush1.msra.mxu0 0.0
    %3210 = vmatprep.subr.mxu0 0.0
    %3211 = vmatpush1.msra.mxu0 0.0
    %3212 = vmatprep.subr.mxu0 0.0
    %3213 = vmatpush1.msra.mxu0 %v2593
    %3214 = vmatprep.subr.mxu0 0.0
    %3215 = vmatpush1.msra.mxu0 %v2525
    %3216 = vmatprep.subr.mxu0 0.0
    %3217 = vmatpush2.msra.mxu0 0.0
    %3218 = vmatprep.subr.mxu0 0.0
    %3219 = vmatpush2.msra.mxu0 0.0
    %3220 = vmatprep.subr.mxu0 0.0
    %3221 = vmatpush2.msra.mxu0 0.0
    %3222 = vmatprep.subr.mxu0 0.0
    %3223 = vmatpush2.msra.mxu0 0.0
    %3224 = vmatprep.subr.mxu0 0.0
    %3225 = vmatpush2.msra.mxu0 0.0
    %3226 = vmatprep.subr.mxu0 0.0
    %3227 = vmatpush2.msra.mxu0 0.0
    %3228 = vmatprep.subr.mxu0 0.0
    %3229 = vmatpush2.msra.mxu0 0.0
    %3230 = vmatprep.subr.mxu0 0.0
    %3231 = vmatpush2.msra.mxu0 0.0
    %3232 = vmatprep.subr.mxu0 0.0
    %3233 = vmatpush2.msra.mxu0 0.0
    %3234 = vmatprep.subr.mxu0 0.0
    %3235 = vmatpush2.msra.mxu0 0.0
    %3236 = vmatprep.subr.mxu0 0.0
    %3237 = vmatpush2.msra.mxu0 0.0
    %3238 = vmatprep.subr.mxu0 0.0
    %3239 = vmatpush2.msra.mxu0 0.0
    %3240 = vmatprep.subr.mxu0 0.0
    %3241 = vmatpush2.msra.mxu0 0.0
    %3242 = vmatprep.subr.mxu0 0.0
    %3243 = vmatpush2.msra.mxu0 0.0
    %3244 = vmatprep.subr.mxu0 0.0
    %3245 = vmatpush2.msra.mxu0 0.0
    %3246 = vmatprep.subr.mxu0 0.0
    %3247 = vmatpush2.msra.mxu0 0.0
    %3248 = vmatprep.mubr.f32.mxu0 0.0
    %3249 = vmatmul.mubr.f32.gmra.mxu0 %v3182
    %v3250 = vpop.f32.mrf.mxu0
    %v3251 = vadd.f32 0.0, %v3250
    %v3252 = vpop.f32.mrf.mxu0
    %3253 = vdwg.mxu0
    %v3254 = vcombine.low %v3032, %v3178
    %v3255 = vcombine.high %v3032, %v3178
    %v3257 = vunpack.c.l.s4 1983009808
    %v3258 = vunpack.c.0.s8 %v3257
    %v3259 = vlaneseq
    %v3260 = vshrl.u32 %v3259, 7
    %v3261 = vsub.s32 %v3258, %v3260
    %v3262 = vrot.slane %v3254, %v3261
    %v3264 = vunpack.c.l.s4 1983009808
    %v3265 = vunpack.c.0.s8 %v3264
    %v3266 = vlaneseq
    %v3267 = vshrl.u32 %v3266, 7
    %v3268 = vsub.s32 %v3265, %v3267
    %v3269 = vrot.slane %v3255, %v3268
    %v3270 = vcombine.low %v3105, %v3251
    %v3271 = vcombine.high %v3105, %v3251
    %v3273 = vunpack.c.l.s4 1983009808
    %v3274 = vunpack.c.0.s8 %v3273
    %v3275 = vlaneseq
    %v3276 = vshrl.u32 %v3275, 7
    %v3277 = vsub.s32 %v3274, %v3276
    %v3278 = vrot.slane %v3270, %v3277
    %v3280 = vunpack.c.l.s4 1983009808
    %v3281 = vunpack.c.0.s8 %v3280
    %v3282 = vlaneseq
    %v3283 = vshrl.u32 %v3282, 7
    %v3284 = vsub.s32 %v3281, %v3283
    %v3285 = vrot.slane %v3271, %v3284
    %v3286 = vcombine.low %v3262, %v3278
    %v3287 = vcombine.high %v3262, %v3278
    %v3289 = vunpack.c.l.s4 1934713408
    %v3290 = vunpack.c.0.s8 %v3289
    %v3291 = vlaneseq
    %v3292 = vshrl.u32 %v3291, 7
    %v3293 = vsub.s32 %v3290, %v3292
    %v3294 = vrot.slane %v3286, %v3293
    %v3296 = vunpack.c.l.s4 1934713408
    %v3297 = vunpack.c.0.s8 %v3296
    %v3298 = vlaneseq
    %v3299 = vshrl.u32 %v3298, 7
    %v3300 = vsub.s32 %v3297, %v3299
    %v3301 = vrot.slane %v3287, %v3300
    %v3302 = vcombine.low %v3269, %v3285
    %v3303 = vcombine.high %v3269, %v3285
    %v3305 = vunpack.c.l.s4 1934713408
    %v3306 = vunpack.c.0.s8 %v3305
    %v3307 = vlaneseq
    %v3308 = vshrl.u32 %v3307, 7
    %v3309 = vsub.s32 %v3306, %v3308
    %v3310 = vrot.slane %v3302, %v3309
    %v3312 = vunpack.c.l.s4 1934713408
    %v3313 = vunpack.c.0.s8 %v3312
    %v3314 = vlaneseq
    %v3315 = vshrl.u32 %v3314, 7
    %v3316 = vsub.s32 %v3313, %v3315
    %v3317 = vrot.slane %v3303, %v3316
    %v3318 = vcombine.high %v3294, 0.0
    %v3319 = vcombine.high %v3301, 0.0
    %v3320 = vcombine.high %v3310, 0.0
    %v3321 = vcombine.high %v3317, 0.0
    %v3322 = vcombine.low %v3294, %v3301
    %v3324 = vunpack.c.l.s4 1983009808
    %v3325 = vunpack.c.0.s8 %v3324
    %v3326 = vlaneseq
    %v3327 = vshrl.u32 %v3326, 7
    %v3328 = vsub.s32 %v3325, %v3327
    %v3329 = vrot.slane %v3322, %v3328
    %v3330 = vcombine.low %v3318, %v3319
    %v3332 = vunpack.c.l.s4 1983009808
    %v3333 = vunpack.c.0.s8 %v3332
    %v3334 = vlaneseq
    %v3335 = vshrl.u32 %v3334, 7
    %v3336 = vsub.s32 %v3333, %v3335
    %v3337 = vrot.slane %v3330, %v3336
    %v3338 = vcombine.low %v3310, %v3317
    %v3340 = vunpack.c.l.s4 1983009808
    %v3341 = vunpack.c.0.s8 %v3340
    %v3342 = vlaneseq
    %v3343 = vshrl.u32 %v3342, 7
    %v3344 = vsub.s32 %v3341, %v3343
    %v3345 = vrot.slane %v3338, %v3344
    %v3346 = vcombine.low %v3320, %v3321
    %v3348 = vunpack.c.l.s4 1983009808
    %v3349 = vunpack.c.0.s8 %v3348
    %v3350 = vlaneseq
    %v3351 = vshrl.u32 %v3350, 7
    %v3352 = vsub.s32 %v3349, %v3351
    %v3353 = vrot.slane %v3346, %v3352
    %v3354 = vcombine.low %v3329, %v3337
    %v3355 = vcombine.high %v3329, %v3337
    %v3357 = vunpack.c.l.s4 1934713408
    %v3358 = vunpack.c.0.s8 %v3357
    %v3359 = vlaneseq
    %v3360 = vshrl.u32 %v3359, 7
    %v3361 = vsub.s32 %v3358, %v3360
    %v3362 = vrot.slane %v3354, %v3361
    %v3364 = vunpack.c.l.s4 1934713408
    %v3365 = vunpack.c.0.s8 %v3364
    %v3366 = vlaneseq
    %v3367 = vshrl.u32 %v3366, 7
    %v3368 = vsub.s32 %v3365, %v3367
    %v3369 = vrot.slane %v3355, %v3368
    %v3370 = vcombine.low %v3345, %v3353
    %v3371 = vcombine.high %v3345, %v3353
    %v3373 = vunpack.c.l.s4 1934713408
    %v3374 = vunpack.c.0.s8 %v3373
    %v3375 = vlaneseq
    %v3376 = vshrl.u32 %v3375, 7
    %v3377 = vsub.s32 %v3374, %v3376
    %v3378 = vrot.slane %v3370, %v3377
    %v3380 = vunpack.c.l.s4 1934713408
    %v3381 = vunpack.c.0.s8 %v3380
    %v3382 = vlaneseq
    %v3383 = vshrl.u32 %v3382, 7
    %v3384 = vsub.s32 %v3381, %v3383
    %v3385 = vrot.slane %v3371, %v3384
    %v3386 = vcombine.low %v3362, %v3378
    %v3387 = vcombine.high %v3362, %v3378
    %v3388 = vcombine.low %v3369, %v3385
    %v3389 = vcombine.high %v3369, %v3385
    %3391 = vrot.lane.b32.xlu0 %v3387, 8
    %v3392 = vpop.permute.xlu0 %3391
    %3395 = vrot.lane.b32.xlu0 %v3388, 16
    %v3396 = vpop.permute.xlu0 %3395
    %3399 = vrot.lane.b32.xlu0 %v3389, 24
    %v3400 = vpop.permute.xlu0 %3399
    %v3402 = vsel %vm927, %v3386, %v3392
    %v3403 = vsel %vm1252, %v3402, %v3396
    %v3404 = vsel %vm1739, %v3403, %v3400
    %v3406 = vsel %vm80, %v3404, 0
    %3408 = vmatprep.subr.mxu0 0.0
    %3409 = vmatpush1.msra.mxu0 0.0
    %3410 = vmatprep.subr.mxu0 0.0
    %3411 = vmatpush1.msra.mxu0 0.0
    %3412 = vmatprep.subr.mxu0 0.0
    %3413 = vmatpush1.msra.mxu0 0.0
    %3414 = vmatprep.subr.mxu0 0.0
    %3415 = vmatpush1.msra.mxu0 0.0
    %3416 = vmatprep.subr.mxu0 0.0
    %3417 = vmatpush1.msra.mxu0 0.0
    %3418 = vmatprep.subr.mxu0 0.0
    %3419 = vmatpush1.msra.mxu0 0.0
    %3420 = vmatprep.subr.mxu0 0.0
    %3421 = vmatpush1.msra.mxu0 0.0
    %3422 = vmatprep.subr.mxu0 0.0
    %3423 = vmatpush1.msra.mxu0 0.0
    %3424 = vmatprep.subr.mxu0 0.0
    %3425 = vmatpush1.msra.mxu0 0.0
    %3426 = vmatprep.subr.mxu0 0.0
    %3427 = vmatpush1.msra.mxu0 0.0
    %3428 = vmatprep.subr.mxu0 0.0
    %3429 = vmatpush1.msra.mxu0 0.0
    %3430 = vmatprep.subr.mxu0 0.0
    %3431 = vmatpush1.msra.mxu0 0.0
    %3432 = vmatprep.subr.mxu0 0.0
    %3433 = vmatpush1.msra.mxu0 %v68
    %3434 = vmatprep.subr.mxu0 0.0
    %3435 = vmatpush1.msra.mxu0 %v67
    %3436 = vmatprep.subr.mxu0 0.0
    %3437 = vmatpush1.msra.mxu0 %v66
    %3438 = vmatprep.subr.mxu0 0.0
    %3439 = vmatpush1.msra.mxu0 %v65
    %3440 = vmatprep.subr.mxu0 0.0
    %3441 = vmatpush2.msra.mxu0 0.0
    %3442 = vmatprep.subr.mxu0 0.0
    %3443 = vmatpush2.msra.mxu0 0.0
    %3444 = vmatprep.subr.mxu0 0.0
    %3445 = vmatpush2.msra.mxu0 0.0
    %3446 = vmatprep.subr.mxu0 0.0
    %3447 = vmatpush2.msra.mxu0 0.0
    %3448 = vmatprep.subr.mxu0 0.0
    %3449 = vmatpush2.msra.mxu0 0.0
    %3450 = vmatprep.subr.mxu0 0.0
    %3451 = vmatpush2.msra.mxu0 0.0
    %3452 = vmatprep.subr.mxu0 0.0
    %3453 = vmatpush2.msra.mxu0 0.0
    %3454 = vmatprep.subr.mxu0 0.0
    %3455 = vmatpush2.msra.mxu0 0.0
    %3456 = vmatprep.subr.mxu0 0.0
    %3457 = vmatpush2.msra.mxu0 0.0
    %3458 = vmatprep.subr.mxu0 0.0
    %3459 = vmatpush2.msra.mxu0 0.0
    %3460 = vmatprep.subr.mxu0 0.0
    %3461 = vmatpush2.msra.mxu0 0.0
    %3462 = vmatprep.subr.mxu0 0.0
    %3463 = vmatpush2.msra.mxu0 0.0
    %3464 = vmatprep.subr.mxu0 0.0
    %3465 = vmatpush2.msra.mxu0 0.0
    %3466 = vmatprep.subr.mxu0 0.0
    %3467 = vmatpush2.msra.mxu0 0.0
    %3468 = vmatprep.subr.mxu0 0.0
    %3469 = vmatpush2.msra.mxu0 0.0
    %3470 = vmatprep.subr.mxu0 0.0
    %3471 = vmatpush2.msra.mxu0 0.0
    %3472 = vmatprep.mubr.f32.mxu0 0.0
    %3473 = vmatmul.mubr.f32.gmra.mxu0 %v3406
    %v3474 = vpop.f32.mrf.mxu0
    %v3475 = vadd.f32 %v1745, %v3474
    %v3476 = vpop.f32.mrf.mxu0
    %3477 = vdwg.mxu0
    %v3478 = vsel %vm80, %v3475, 0.0
    %3479 = vadd.xlane.f32.xlu0 %v3478
    %v3480 = vpop.xlane.xlu0 %3479
    %v3481 = vmul.f32 %v3480, %v1823
    %v3482 = vsub.f32 %v3475, %v3481
    %v3483 = vmul.f32 %v3482, %v3482
    %v3484 = vsel %vm80, %v3483, 0.0
    %3485 = vadd.xlane.f32.xlu0 %v3484
    %v3486 = vpop.xlane.xlu0 %3485
    %v3487 = vmul.f32 %v3486, %v1823
    %v3488 = vadd.f32 %v3487, 1e-05
    %v3489 = vrsqrt.pop %v3488
    %v3490 = vmul.f32 %v3482, %v3489
    %v3491 = vmul.f32 %v3490, %v1838
    %v3492 = vadd.f32 %v3491, %v1845
    %s3493 = scalar_lea.vmem [#allocation8], 8
    %3494 = vst.msk [vmem:[%s3493] sm:$0xff] %vm80, %v3492
    // Predicated region
    $region38: #{tpu_custom_call.1} parent=1 // pred_check
      _
    $region39: #{tpu_custom_call.1} parent=1 // pred_check_branch
      %3496 = sbr.rel (0) target = $region41
    $region40: #{tpu_custom_call.1} parent=1 // pred_region
      %s3498 = ssub.s32 256, 256
      %3499 = vsyncadd [#allocation4], %s3498
      %s3500 = sshll.u32 [#allocation8], 4
      %s3501 = int_to_ptr.vmem [resolvable:$true] %s3500
      %3506 = dma.vmem_to_hbm [thread:$0]  %s3501, 256, %s6, [#allocation4], 128, 128, 8
    $region41: #{tpu_custom_call.1} parent=1 // pred_fallthru
      _
    // Predicated region
    $region42: #{tpu_custom_call.1} parent=1 // pred_check
      _
    $region43: #{tpu_custom_call.1} parent=1 // pred_check_branch
      %3508 = sbr.rel (0) target = $region45
    $region44: #{tpu_custom_call.1} parent=1 // pred_region
      %3509 = dma.done [#allocation4], 256
    $region45: #{tpu_custom_call.1} parent=1 // pred_fallthru
      _
    %3510 = vsyncpa [#allocation3], 1
    %3511 = vsyncpa [#allocation6], 1
    %3512 = vsyncpa [#allocation4], 1

</llo_original>
